<compile_context>
chip_gen: v6e
topology: v6e:2x2x1
jax: 0.10.0
libtpu: 0.0.40
codegen_flags: <defaults>
</compile_context>

<pallas_src>
import jax
import jax.numpy as jnp
from jax import lax
from jax.experimental import pallas as pl
from jax.experimental.pallas import tpu as pltpu

EPS = 1e-5                       # nn.BatchNorm2d default eps
LANES = 128                      # TPU lane width: channel padding target
VMEM_LIMIT = 32 * 1024 * 1024    # ample headroom over the ~1.5 MB/step working set (all gens)


def _round_up(x, m):
    return (x + m - 1) // m * m


# ------------------------------------------------------------------- in-kernel helpers
def _tap_accum(get_lhs, w_ref, ntaps, rows, cout):
    """Per-tap accumulated conv GEMM: sum_t dot(get_lhs(t), w_ref[t]), f32 accumulator.
    No im2col patch is ever materialized; each dot has K = Cin_padded (=128 lanes)."""
    cin = w_ref.shape[1]
    acc = jnp.zeros((rows, cout), jnp.float32)
    for t in range(ntaps):
        lhs = get_lhs(t).reshape(rows, cin).astype(jnp.bfloat16)
        acc = acc + jnp.dot(lhs, w_ref[t], preferred_element_type=jnp.float32)
    return acc


def _image_stats(acc, rows):
    """Per-image BN partials: mean and centered M2 (avoids E[x^2]-E[x]^2 cancellation)."""
    mean_i = jnp.sum(acc, axis=0, keepdims=True) * (1.0 / rows)     # (1, C)
    m2_i = jnp.sum((acc - mean_i) ** 2, axis=0, keepdims=True)      # (1, C)
    return mean_i, m2_i


def _fold_bn(stats, gamma, beta, rows_per_image):
    """Combine per-image (mean, M2) partials into training-mode BN folded scale/shift."""
    n = stats.shape[0]
    mean_i = stats[:, 0, :]                                         # (N, C)
    m2_i = stats[:, 1, :]                                           # (N, C)
    mean = jnp.mean(mean_i, axis=0, keepdims=True)                  # (1, C)  (equal counts)
    m2 = jnp.sum(m2_i, axis=0, keepdims=True) + rows_per_image * jnp.sum(
        (mean_i - mean) ** 2, axis=0, keepdims=True)
    var = m2 * (1.0 / (n * rows_per_image))                         # biased variance
    scale = gamma * lax.rsqrt(var + EPS)
    shift = beta - mean * scale
    return scale, shift


def _zero_border(pad_ref, H, W):
    """Zero only the halo strips; the interior [1:H+1, 1:W+1] is overwritten by the caller
    (cuts ~half of the store traffic vs. full-buffer zero + interior overwrite)."""
    Hp, Wp, C = pad_ref.shape
    dt = pad_ref.dtype
    pad_ref[0:1, :, :] = jnp.zeros((1, Wp, C), dt)
    pad_ref[H + 1:Hp, :, :] = jnp.zeros((Hp - H - 1, Wp, C), dt)
    pad_ref[:, 0:1, :] = jnp.zeros((Hp, 1, C), dt)
    pad_ref[:, W + 1:Wp, :] = jnp.zeros((Hp, Wp - W - 1, C), dt)


# ------------------------------------------------------------------------------ kernels
def conv1_stats_kernel(xp_ref, w1_ref, b1_ref, h1_ref, s1_ref):
    """Stage 1 / pass 1: ReLU(conv3x3(x)+b1) for one image; emit activation + per-image
    BN1 partial stats."""
    _, Hp, Wp, _ = xp_ref.shape
    H, W = Hp - 2, Wp - 2
    C = h1_ref.shape[-1]
    rows = H * W
    acc = _tap_accum(
        lambda t: xp_ref[0, t // 3:t // 3 + H, t % 3:t % 3 + W, :], w1_ref, 9, rows, C)
    acc = jnp.maximum(acc + b1_ref[...], 0.0)
    mean_i, m2_i = _image_stats(acc, rows)
    h1_ref[...] = acc.reshape(1, H, W, C).astype(h1_ref.dtype)
    s1_ref[0, 0:1, :] = mean_i
    s1_ref[0, 1:2, :] = m2_i


def bn1_time_conv2_kernel(h1_ref, s1_ref, g1_ref, be1_ref, t_ref, wt_ref, bt_ref,
                          w2_ref, b2_ref, h2_ref, s2_ref, pad_ref):
    """Stage 1 pass 2 + stage 2 pass 1: h = BN1(h1) + ReLU(Linear(t));
    h2 = ReLU(conv3x3(h)+b2); emit h2 + per-image BN2 partial stats."""
    _, H, W, C = h1_ref.shape
    rows = H * W
    scale1, shift1 = _fold_bn(s1_ref[...], g1_ref[...], be1_ref[...], rows)
    # time embedding for this image (LHS replicated to 8 sublanes by the wrapper; row 0 used)
    te = jnp.dot(t_ref[0], wt_ref[...], preferred_element_type=jnp.float32)[0:1, :]
    te = jnp.maximum(te + bt_ref[...], 0.0)                          # (1, C)
    hn = h1_ref[0] * scale1 + shift1 + te                            # (H, W, C) f32
    # halo pad in VMEM scratch (border strips only), then conv2 per-tap accumulation
    _zero_border(pad_ref, H, W)
    pad_ref[1:H + 1, 1:W + 1, :] = hn.astype(pad_ref.dtype)
    acc = _tap_accum(
        lambda t: pad_ref[t // 3:t // 3 + H, t % 3:t % 3 + W, :], w2_ref, 9, rows, C)
    acc = jnp.maximum(acc + b2_ref[...], 0.0)
    mean_i, m2_i = _image_stats(acc, rows)
    h2_ref[...] = acc.reshape(1, H, W, C).astype(h2_ref.dtype)
    s2_ref[0, 0:1, :] = mean_i
    s2_ref[0, 1:2, :] = m2_i


def bn2_transform_kernel(h2_ref, s2_ref, g2_ref, be2_ref, wtr_ref, btr_ref, y_ref, pad_ref):
    """Stage 2 pass 2 + transform: y = conv4x4_s2_p1(BN2(h2)).  The stride-2 windows are
    read straight from the VMEM halo scratch with pl.ds(stride=2): no padded-h2 HBM round
    trip and no XLA parity-split relayout."""
    _, H, W, C = h2_ref.shape
    Ho, Wo = H // 2, W // 2
    rows = Ho * Wo
    scale2, shift2 = _fold_bn(s2_ref[...], g2_ref[...], be2_ref[...], H * W)
    hn = h2_ref[0] * scale2 + shift2                                 # (H, W, C) f32
    _zero_border(pad_ref, H, W)
    pad_ref[1:H + 1, 1:W + 1, :] = hn.astype(pad_ref.dtype)
    acc = _tap_accum(
        lambda t: pad_ref[pl.ds(t // 4, Ho, 2), pl.ds(t % 4, Wo, 2), :],
        wtr_ref, 16, rows, C)
    y_ref[...] = (acc + btr_ref[...]).reshape(1, Ho, Wo, C).astype(y_ref.dtype)


# ------------------------------------------------------------------------------ wrappers
def _pack_conv_w(w_oihw, cin_p, cout_p):
    """(Cout, Cin, kh, kw) -> (kh*kw, cin_p, cout_p) bf16 per-tap weights.
    NOTE: padded channel lanes of weights/bias/gamma/beta are ZERO, so padded lanes stay
    exactly 0 through conv/ReLU/BN and never leak into real lanes (lane-pad invariant)."""
    co, ci, kh, kw = w_oihw.shape
    w = jnp.transpose(w_oihw, (2, 3, 1, 0))                          # (kh, kw, Cin, Cout)
    w = jnp.pad(w, ((0, 0), (0, 0), (0, cin_p - ci), (0, cout_p - co)))
    return w.reshape(kh * kw, cin_p, cout_p).astype(jnp.bfloat16)


def _pad_vec(v, cp):
    return jnp.pad(v, (0, cp - v.shape[0])).reshape(1, cp).astype(jnp.float32)


def block_forward(x_nchw, t, params):
    """Pallas forward of Block(up=False).  x_nchw: (N, in_ch, H, W), t: (N, time_emb_dim)."""
    N, Cin, H, W = x_nchw.shape
    assert H % 2 == 0 and W % 2 == 0, "4x4/stride-2 transform assumes even spatial dims"
    Cout = params["w1"].shape[0]
    T = params["wt"].shape[1]
    Cpi = _round_up(max(Cin, LANES), LANES)
    Cpo = _round_up(max(Cout, LANES), LANES)

    # input glue: NCHW -> NHWC, channel pad to 128 lanes, 1-px halo, bf16 matmul operand
    x = jnp.transpose(x_nchw, (0, 2, 3, 1)).astype(jnp.float32)
    xp = jnp.pad(x, ((0, 0), (1, 1), (1, 1), (0, Cpi - Cin))).astype(jnp.bfloat16)

    # parameter repack (zero-padded channel lanes; see _pack_conv_w note)
    w1 = _pack_conv_w(params["w1"], Cpi, Cpo)
    w2 = _pack_conv_w(params["w2"], Cpo, Cpo)
    wtr = _pack_conv_w(params["wtr"], Cpo, Cpo)
    wt = jnp.pad(params["wt"].T, ((0, 0), (0, Cpo - Cout))).astype(jnp.float32)   # (T, Cpo)
    b1, b2, btr, bt = (_pad_vec(params[k], Cpo) for k in ("b1", "b2", "btr", "bt"))
    g1, be1 = _pad_vec(params["g1"], Cpo), _pad_vec(params["be1"], Cpo)
    g2, be2 = _pad_vec(params["g2"], Cpo), _pad_vec(params["be2"], Cpo)
    # replicate t over 8 sublanes so the time-emb matmul LHS is (8, T) (avoids an M=1 dot)
    t8 = jnp.broadcast_to(t[:, None, :], (N, 8, T)).astype(jnp.float32)

    cparams = pltpu.CompilerParams(
        dimension_semantics=("parallel",),        # image-parallel grid -> v7x 2-TC sharding
        vmem_limit_bytes=VMEM_LIMIT)

    const3 = lambda n: (0, 0, 0)
    const2 = lambda n: (0, 0)
    vec_spec = pl.BlockSpec((1, Cpo), const2)     # bias / gamma / beta: VMEM-resident

    # ---- kernel 1: conv1 + ReLU -> h1 + per-image BN1 partial stats -------------------
    h1, s1 = pl.pallas_call(
        conv1_stats_kernel,
        grid=(N,),
        in_specs=[
            pl.BlockSpec((1, H + 2, W + 2, Cpi), lambda n: (n, 0, 0, 0)),
            pl.BlockSpec((9, Cpi, Cpo), const3),               # weights: constant map -> resident
            vec_spec,
        ],
        out_specs=[
            pl.BlockSpec((1, H, W, Cpo), lambda n: (n, 0, 0, 0)),
            pl.BlockSpec((1, 2, Cpo), lambda n: (n, 0, 0)),
        ],
        out_shape=[
            jax.ShapeDtypeStruct((N, H, W, Cpo), jnp.float32),
            jax.ShapeDtypeStruct((N, 2, Cpo), jnp.float32),
        ],
        compiler_params=cparams,
    )(xp, w1, b1)

    # ---- kernel 2: BN1-apply + time-emb + conv2 + ReLU -> h2 + BN2 partial stats ------
    h2, s2 = pl.pallas_call(
        bn1_time_conv2_kernel,
        grid=(N,),
        in_specs=[
            pl.BlockSpec((1, H, W, Cpo), lambda n: (n, 0, 0, 0)),
            pl.BlockSpec((N, 2, Cpo), const3),                 # all per-image stats (tiny, resident)
            vec_spec, vec_spec,                                # g1, be1
            pl.BlockSpec((1, 8, T), lambda n: (n, 0, 0)),      # t (sublane-replicated)
            pl.BlockSpec((T, Cpo), const2),                    # wt
            vec_spec,                                          # bt
            pl.BlockSpec((9, Cpo, Cpo), const3),               # w2
            vec_spec,                                          # b2
        ],
        out_specs=[
            pl.BlockSpec((1, H, W, Cpo), lambda n: (n, 0, 0, 0)),
            pl.BlockSpec((1, 2, Cpo), lambda n: (n, 0, 0)),
        ],
        out_shape=[
            jax.ShapeDtypeStruct((N, H, W, Cpo), jnp.float32),
            jax.ShapeDtypeStruct((N, 2, Cpo), jnp.float32),
        ],
        scratch_shapes=[pltpu.VMEM((H + 2, W + 2, Cpo), jnp.bfloat16)],
        compiler_params=cparams,
    )(h1, s1, g1, be1, t8, wt, bt, w2, b2)

    # ---- kernel 3: BN2-apply + 4x4 stride-2 transform -> final output -----------------
    y = pl.pallas_call(
        bn2_transform_kernel,
        grid=(N,),
        in_specs=[
            pl.BlockSpec((1, H, W, Cpo), lambda n: (n, 0, 0, 0)),
            pl.BlockSpec((N, 2, Cpo), const3),
            vec_spec, vec_spec,                                # g2, be2
            pl.BlockSpec((16, Cpo, Cpo), const3),              # wtr
            vec_spec,                                          # btr
        ],
        out_specs=pl.BlockSpec((1, H // 2, W // 2, Cpo), lambda n: (n, 0, 0, 0)),
        out_shape=jax.ShapeDtypeStruct((N, H // 2, W // 2, Cpo), jnp.float32),
        # +1 spatial slack row/col (never read by the stride-2 windows) keeps strided-load
        # bounds conservative-safe; f32 scratch so sublane-strided loads stay unpacked.
        scratch_shapes=[pltpu.VMEM((H + 3, W + 3, Cpo), jnp.float32)],
        compiler_params=cparams,
    )(h2, s2, g2, be2, wtr, btr)

    return jnp.transpose(y[..., :Cout], (0, 3, 1, 2))          # drop lane pad -> NCHW


# --------------------------------------------------------------------- pure-JAX reference
def reference_forward(x_nchw, t, p):
    x = jnp.transpose(x_nchw, (0, 2, 3, 1)).astype(jnp.float32)

    def conv(h, w_oihw, b, stride, pad):
        w = jnp.transpose(w_oihw, (2, 3, 1, 0))  # HWIO
        y = lax.conv_general_dilated(
            h, w, (stride, stride), [(pad, pad), (pad, pad)],
            dimension_numbers=("NHWC", "HWIO", "NHWC"))
        return y + b

    def bn(h, g, b):
        m = jnp.mean(h, axis=(0, 1, 2), keepdims=True)
        v = jnp.mean((h - m) ** 2, axis=(0, 1, 2), keepdims=True)
        return (h - m) * lax.rsqrt(v + EPS) * g + b

    h = bn(jax.nn.relu(conv(x, p["w1"], p["b1"], 1, 1)), p["g1"], p["be1"])
    te = jax.nn.relu(t @ p["wt"].T + p["bt"])
    h = h + te[:, None, None, :]
    h = bn(jax.nn.relu(conv(h, p["w2"], p["b2"], 1, 1)), p["g2"], p["be2"])
    out = conv(h, p["wtr"], p["btr"], 2, 1)
    return jnp.transpose(out, (0, 3, 1, 2))


# ----------------------------------------------------------------------------- main
if __name__ == "__main__":
    N, in_ch, out_ch, time_emb_dim, H, W = 2, 4, 8, 32, 16, 16

    key = jax.random.PRNGKey(0)
    ks = jax.random.split(key, 16)
    params = {
        # conv1: Conv2d(in_ch, out_ch, 3, padding=1)
        "w1": 0.1 * jax.random.normal(ks[0], (out_ch, in_ch, 3, 3), jnp.float32),
        "b1": 0.1 * jax.random.normal(ks[1], (out_ch,), jnp.float32),
        # time_linear: Linear(time_emb_dim, out_ch)
        "wt": 0.1 * jax.random.normal(ks[2], (out_ch, time_emb_dim), jnp.float32),
        "bt": 0.1 * jax.random.normal(ks[3], (out_ch,), jnp.float32),
        # conv2: Conv2d(out_ch, out_ch, 3, padding=1)
        "w2": 0.1 * jax.random.normal(ks[4], (out_ch, out_ch, 3, 3), jnp.float32),
        "b2": 0.1 * jax.random.normal(ks[5], (out_ch,), jnp.float32),
        # bnorm1 / bnorm2 affine parameters
        "g1": 1.0 + 0.1 * jax.random.normal(ks[6], (out_ch,), jnp.float32),
        "be1": 0.1 * jax.random.normal(ks[7], (out_ch,), jnp.float32),
        "g2": 1.0 + 0.1 * jax.random.normal(ks[8], (out_ch,), jnp.float32),
        "be2": 0.1 * jax.random.normal(ks[9], (out_ch,), jnp.float32),
        # transform (up=False): Conv2d(out_ch, out_ch, 4, stride=2, padding=1)
        "wtr": 0.1 * jax.random.normal(ks[10], (out_ch, out_ch, 4, 4), jnp.float32),
        "btr": 0.1 * jax.random.normal(ks[11], (out_ch,), jnp.float32),
    }

    x = jax.random.normal(ks[12], (N, in_ch, H, W), jnp.float32)   # NCHW, like PyTorch
    t = jax.random.normal(ks[13], (N, time_emb_dim), jnp.float32)

    out = jax.block_until_ready(block_forward(x, t, params))
    ref = jax.block_until_ready(reference_forward(x, t, params))

    assert out.shape == (N, out_ch, H // 2, W // 2), out.shape
    # bf16 MXU operands (weights + conv inputs) with f32 accumulation and f32 inter-kernel
    # activations: intentional precision tradeoff -> loosened tolerance vs f32 reference.
    err = float(jnp.max(jnp.abs(out - ref)))
    assert jnp.allclose(out, ref, rtol=5e-2, atol=1e-1), err
    print("KERNEL_OK")
</pallas_src>

<mosaic_0001>
module attributes {stable_mosaic.version = 11 : i64} {
  func.func @conv1_stats_kernel(%arg0: i32, %arg1: memref<1x18x18x128xbf16, #tpu.memory_space<vmem>>, %arg2: memref<9x128x128xbf16, #tpu.memory_space<vmem>>, %arg3: memref<1x128xf32, #tpu.memory_space<vmem>>, %arg4: memref<1x16x16x128xf32, #tpu.memory_space<vmem>>, %arg5: memref<1x2x128xf32, #tpu.memory_space<vmem>>) attributes {dimension_semantics = [#tpu.dimension_semantics<parallel>], iteration_bounds = array<i64: 2>, scalar_prefetch = 0 : i64, scratch_operands = 0 : i64, tpu.core_type = #tpu.core_type<tc>, window_params = [{transform_indices = @transform_0, window_bounds = array<i64: 1, 18, 18, 128>}, {pipeline_mode = #tpu.pipeline_mode<synchronous>, transform_indices = @transform_1, window_bounds = array<i64: 9, 128, 128>}, {pipeline_mode = #tpu.pipeline_mode<synchronous>, transform_indices = @transform_2, window_bounds = array<i64: 1, 128>}, {transform_indices = @transform_3, window_bounds = array<i64: 1, 16, 16, 128>}, {transform_indices = @transform_4, window_bounds = array<i64: 1, 2, 128>}]} {
    %cst = arith.constant 0.000000e+00 : f32
    %0 = vector.broadcast %cst : f32 to vector<256x128xf32>
    %c0 = arith.constant 0 : index
    %c0_0 = arith.constant 0 : index
    %c0_1 = arith.constant 0 : index
    %c0_2 = arith.constant 0 : index
    %1 = vector.load %arg1[%c0, %c0_0, %c0_1, %c0_2] : memref<1x18x18x128xbf16, #tpu.memory_space<vmem>>, vector<1x16x16x128xbf16>
    %2 = vector.shape_cast %1 : vector<1x16x16x128xbf16> to vector<16x16x128xbf16>
    %3 = vector.shape_cast %2 : vector<16x16x128xbf16> to vector<256x128xbf16>
    %c0_3 = arith.constant 0 : index
    %c0_4 = arith.constant 0 : index
    %c0_5 = arith.constant 0 : index
    %4 = vector.load %arg2[%c0_3, %c0_4, %c0_5] : memref<9x128x128xbf16, #tpu.memory_space<vmem>>, vector<1x128x128xbf16>
    %5 = vector.shape_cast %4 : vector<1x128x128xbf16> to vector<128x128xbf16>
    %cst_6 = arith.constant dense<0.000000e+00> : vector<256x128xf32>
    %6 = tpu.matmul %3, %5, %cst_6 {dimension_numbers = #tpu.dot_dimension_numbers<[1], [0], [0], [1], [0, 0, 1, 1], [], []>} : vector<256x128xbf16>, vector<128x128xbf16>, vector<256x128xf32> -> vector<256x128xf32>
    %7 = arith.addf %0, %6 : vector<256x128xf32>
    %c0_7 = arith.constant 0 : index
    %c0_8 = arith.constant 0 : index
    %c1 = arith.constant 1 : index
    %c0_9 = arith.constant 0 : index
    %8 = vector.load %arg1[%c0_7, %c0_8, %c1, %c0_9] : memref<1x18x18x128xbf16, #tpu.memory_space<vmem>>, vector<1x16x16x128xbf16>
    %9 = vector.shape_cast %8 : vector<1x16x16x128xbf16> to vector<16x16x128xbf16>
    %10 = vector.shape_cast %9 : vector<16x16x128xbf16> to vector<256x128xbf16>
    %c1_10 = arith.constant 1 : index
    %c0_11 = arith.constant 0 : index
    %c0_12 = arith.constant 0 : index
    %11 = vector.load %arg2[%c1_10, %c0_11, %c0_12] : memref<9x128x128xbf16, #tpu.memory_space<vmem>>, vector<1x128x128xbf16>
    %12 = vector.shape_cast %11 : vector<1x128x128xbf16> to vector<128x128xbf16>
    %cst_13 = arith.constant dense<0.000000e+00> : vector<256x128xf32>
    %13 = tpu.matmul %10, %12, %cst_13 {dimension_numbers = #tpu.dot_dimension_numbers<[1], [0], [0], [1], [0, 0, 1, 1], [], []>} : vector<256x128xbf16>, vector<128x128xbf16>, vector<256x128xf32> -> vector<256x128xf32>
    %14 = arith.addf %7, %13 : vector<256x128xf32>
    %c0_14 = arith.constant 0 : index
    %c0_15 = arith.constant 0 : index
    %c2 = arith.constant 2 : index
    %c0_16 = arith.constant 0 : index
    %15 = vector.load %arg1[%c0_14, %c0_15, %c2, %c0_16] : memref<1x18x18x128xbf16, #tpu.memory_space<vmem>>, vector<1x16x16x128xbf16>
    %16 = vector.shape_cast %15 : vector<1x16x16x128xbf16> to vector<16x16x128xbf16>
    %17 = vector.shape_cast %16 : vector<16x16x128xbf16> to vector<256x128xbf16>
    %c2_17 = arith.constant 2 : index
    %c0_18 = arith.constant 0 : index
    %c0_19 = arith.constant 0 : index
    %18 = vector.load %arg2[%c2_17, %c0_18, %c0_19] : memref<9x128x128xbf16, #tpu.memory_space<vmem>>, vector<1x128x128xbf16>
    %19 = vector.shape_cast %18 : vector<1x128x128xbf16> to vector<128x128xbf16>
    %cst_20 = arith.constant dense<0.000000e+00> : vector<256x128xf32>
    %20 = tpu.matmul %17, %19, %cst_20 {dimension_numbers = #tpu.dot_dimension_numbers<[1], [0], [0], [1], [0, 0, 1, 1], [], []>} : vector<256x128xbf16>, vector<128x128xbf16>, vector<256x128xf32> -> vector<256x128xf32>
    %21 = arith.addf %14, %20 : vector<256x128xf32>
    %c0_21 = arith.constant 0 : index
    %c1_22 = arith.constant 1 : index
    %c0_23 = arith.constant 0 : index
    %c0_24 = arith.constant 0 : index
    %22 = vector.load %arg1[%c0_21, %c1_22, %c0_23, %c0_24] : memref<1x18x18x128xbf16, #tpu.memory_space<vmem>>, vector<1x16x16x128xbf16>
    %23 = vector.shape_cast %22 : vector<1x16x16x128xbf16> to vector<16x16x128xbf16>
    %24 = vector.shape_cast %23 : vector<16x16x128xbf16> to vector<256x128xbf16>
    %c3 = arith.constant 3 : index
    %c0_25 = arith.constant 0 : index
    %c0_26 = arith.constant 0 : index
    %25 = vector.load %arg2[%c3, %c0_25, %c0_26] : memref<9x128x128xbf16, #tpu.memory_space<vmem>>, vector<1x128x128xbf16>
    %26 = vector.shape_cast %25 : vector<1x128x128xbf16> to vector<128x128xbf16>
    %cst_27 = arith.constant dense<0.000000e+00> : vector<256x128xf32>
    %27 = tpu.matmul %24, %26, %cst_27 {dimension_numbers = #tpu.dot_dimension_numbers<[1], [0], [0], [1], [0, 0, 1, 1], [], []>} : vector<256x128xbf16>, vector<128x128xbf16>, vector<256x128xf32> -> vector<256x128xf32>
    %28 = arith.addf %21, %27 : vector<256x128xf32>
    %c0_28 = arith.constant 0 : index
    %c1_29 = arith.constant 1 : index
    %c1_30 = arith.constant 1 : index
    %c0_31 = arith.constant 0 : index
    %29 = vector.load %arg1[%c0_28, %c1_29, %c1_30, %c0_31] : memref<1x18x18x128xbf16, #tpu.memory_space<vmem>>, vector<1x16x16x128xbf16>
    %30 = vector.shape_cast %29 : vector<1x16x16x128xbf16> to vector<16x16x128xbf16>
    %31 = vector.shape_cast %30 : vector<16x16x128xbf16> to vector<256x128xbf16>
    %c4 = arith.constant 4 : index
    %c0_32 = arith.constant 0 : index
    %c0_33 = arith.constant 0 : index
    %32 = vector.load %arg2[%c4, %c0_32, %c0_33] : memref<9x128x128xbf16, #tpu.memory_space<vmem>>, vector<1x128x128xbf16>
    %33 = vector.shape_cast %32 : vector<1x128x128xbf16> to vector<128x128xbf16>
    %cst_34 = arith.constant dense<0.000000e+00> : vector<256x128xf32>
    %34 = tpu.matmul %31, %33, %cst_34 {dimension_numbers = #tpu.dot_dimension_numbers<[1], [0], [0], [1], [0, 0, 1, 1], [], []>} : vector<256x128xbf16>, vector<128x128xbf16>, vector<256x128xf32> -> vector<256x128xf32>
    %35 = arith.addf %28, %34 : vector<256x128xf32>
    %c0_35 = arith.constant 0 : index
    %c1_36 = arith.constant 1 : index
    %c2_37 = arith.constant 2 : index
    %c0_38 = arith.constant 0 : index
    %36 = vector.load %arg1[%c0_35, %c1_36, %c2_37, %c0_38] : memref<1x18x18x128xbf16, #tpu.memory_space<vmem>>, vector<1x16x16x128xbf16>
    %37 = vector.shape_cast %36 : vector<1x16x16x128xbf16> to vector<16x16x128xbf16>
    %38 = vector.shape_cast %37 : vector<16x16x128xbf16> to vector<256x128xbf16>
    %c5 = arith.constant 5 : index
    %c0_39 = arith.constant 0 : index
    %c0_40 = arith.constant 0 : index
    %39 = vector.load %arg2[%c5, %c0_39, %c0_40] : memref<9x128x128xbf16, #tpu.memory_space<vmem>>, vector<1x128x128xbf16>
    %40 = vector.shape_cast %39 : vector<1x128x128xbf16> to vector<128x128xbf16>
    %cst_41 = arith.constant dense<0.000000e+00> : vector<256x128xf32>
    %41 = tpu.matmul %38, %40, %cst_41 {dimension_numbers = #tpu.dot_dimension_numbers<[1], [0], [0], [1], [0, 0, 1, 1], [], []>} : vector<256x128xbf16>, vector<128x128xbf16>, vector<256x128xf32> -> vector<256x128xf32>
    %42 = arith.addf %35, %41 : vector<256x128xf32>
    %c0_42 = arith.constant 0 : index
    %c2_43 = arith.constant 2 : index
    %c0_44 = arith.constant 0 : index
    %c0_45 = arith.constant 0 : index
    %43 = vector.load %arg1[%c0_42, %c2_43, %c0_44, %c0_45] : memref<1x18x18x128xbf16, #tpu.memory_space<vmem>>, vector<1x16x16x128xbf16>
    %44 = vector.shape_cast %43 : vector<1x16x16x128xbf16> to vector<16x16x128xbf16>
    %45 = vector.shape_cast %44 : vector<16x16x128xbf16> to vector<256x128xbf16>
    %c6 = arith.constant 6 : index
    %c0_46 = arith.constant 0 : index
    %c0_47 = arith.constant 0 : index
    %46 = vector.load %arg2[%c6, %c0_46, %c0_47] : memref<9x128x128xbf16, #tpu.memory_space<vmem>>, vector<1x128x128xbf16>
    %47 = vector.shape_cast %46 : vector<1x128x128xbf16> to vector<128x128xbf16>
    %cst_48 = arith.constant dense<0.000000e+00> : vector<256x128xf32>
    %48 = tpu.matmul %45, %47, %cst_48 {dimension_numbers = #tpu.dot_dimension_numbers<[1], [0], [0], [1], [0, 0, 1, 1], [], []>} : vector<256x128xbf16>, vector<128x128xbf16>, vector<256x128xf32> -> vector<256x128xf32>
    %49 = arith.addf %42, %48 : vector<256x128xf32>
    %c0_49 = arith.constant 0 : index
    %c2_50 = arith.constant 2 : index
    %c1_51 = arith.constant 1 : index
    %c0_52 = arith.constant 0 : index
    %50 = vector.load %arg1[%c0_49, %c2_50, %c1_51, %c0_52] : memref<1x18x18x128xbf16, #tpu.memory_space<vmem>>, vector<1x16x16x128xbf16>
    %51 = vector.shape_cast %50 : vector<1x16x16x128xbf16> to vector<16x16x128xbf16>
    %52 = vector.shape_cast %51 : vector<16x16x128xbf16> to vector<256x128xbf16>
    %c7 = arith.constant 7 : index
    %c0_53 = arith.constant 0 : index
    %c0_54 = arith.constant 0 : index
    %53 = vector.load %arg2[%c7, %c0_53, %c0_54] : memref<9x128x128xbf16, #tpu.memory_space<vmem>>, vector<1x128x128xbf16>
    %54 = vector.shape_cast %53 : vector<1x128x128xbf16> to vector<128x128xbf16>
    %cst_55 = arith.constant dense<0.000000e+00> : vector<256x128xf32>
    %55 = tpu.matmul %52, %54, %cst_55 {dimension_numbers = #tpu.dot_dimension_numbers<[1], [0], [0], [1], [0, 0, 1, 1], [], []>} : vector<256x128xbf16>, vector<128x128xbf16>, vector<256x128xf32> -> vector<256x128xf32>
    %56 = arith.addf %49, %55 : vector<256x128xf32>
    %c0_56 = arith.constant 0 : index
    %c2_57 = arith.constant 2 : index
    %c2_58 = arith.constant 2 : index
    %c0_59 = arith.constant 0 : index
    %57 = vector.load %arg1[%c0_56, %c2_57, %c2_58, %c0_59] : memref<1x18x18x128xbf16, #tpu.memory_space<vmem>>, vector<1x16x16x128xbf16>
    %58 = vector.shape_cast %57 : vector<1x16x16x128xbf16> to vector<16x16x128xbf16>
    %59 = vector.shape_cast %58 : vector<16x16x128xbf16> to vector<256x128xbf16>
    %c8 = arith.constant 8 : index
    %c0_60 = arith.constant 0 : index
    %c0_61 = arith.constant 0 : index
    %60 = vector.load %arg2[%c8, %c0_60, %c0_61] : memref<9x128x128xbf16, #tpu.memory_space<vmem>>, vector<1x128x128xbf16>
    %61 = vector.shape_cast %60 : vector<1x128x128xbf16> to vector<128x128xbf16>
    %cst_62 = arith.constant dense<0.000000e+00> : vector<256x128xf32>
    %62 = tpu.matmul %59, %61, %cst_62 {dimension_numbers = #tpu.dot_dimension_numbers<[1], [0], [0], [1], [0, 0, 1, 1], [], []>} : vector<256x128xbf16>, vector<128x128xbf16>, vector<256x128xf32> -> vector<256x128xf32>
    %63 = arith.addf %56, %62 : vector<256x128xf32>
    %c0_63 = arith.constant 0 : index
    %c0_64 = arith.constant 0 : index
    %64 = vector.load %arg3[%c0_63, %c0_64] : memref<1x128xf32, #tpu.memory_space<vmem>>, vector<1x128xf32>
    %65 = vector.broadcast %64 : vector<1x128xf32> to vector<256x128xf32>
    %66 = arith.addf %63, %65 : vector<256x128xf32>
    %cst_65 = arith.constant 0.000000e+00 : f32
    %67 = vector.broadcast %cst_65 : f32 to vector<256x128xf32>
    %68 = arith.maximumf %66, %67 : vector<256x128xf32>
    %cst_66 = arith.constant dense<0.000000e+00> : vector<128xf32>
    %69 = vector.multi_reduction <add>, %68, %cst_66 [0] : vector<256x128xf32> to vector<128xf32>
    %70 = vector.shape_cast %69 : vector<128xf32> to vector<1x128xf32>
    %cst_67 = arith.constant 3.906250e-03 : f32
    %71 = vector.broadcast %cst_67 : f32 to vector<1x128xf32>
    %72 = arith.mulf %70, %71 : vector<1x128xf32>
    %73 = vector.broadcast %72 : vector<1x128xf32> to vector<256x128xf32>
    %74 = arith.subf %68, %73 : vector<256x128xf32>
    %75 = arith.mulf %74, %74 : vector<256x128xf32>
    %cst_68 = arith.constant dense<0.000000e+00> : vector<128xf32>
    %76 = vector.multi_reduction <add>, %75, %cst_68 [0] : vector<256x128xf32> to vector<128xf32>
    %77 = vector.shape_cast %76 : vector<128xf32> to vector<1x128xf32>
    %78 = vector.shape_cast %68 : vector<256x128xf32> to vector<1x16x16x128xf32>
    %c0_69 = arith.constant 0 : index
    %c0_70 = arith.constant 0 : index
    %c0_71 = arith.constant 0 : index
    %c0_72 = arith.constant 0 : index
    %79 = vector.load %arg4[%c0_69, %c0_70, %c0_71, %c0_72] : memref<1x16x16x128xf32, #tpu.memory_space<vmem>>, vector<1x16x16x128xf32>
    tpu.vector_store %arg4[%c0_69, %c0_70, %c0_71, %c0_72], %78 {strides = array<i32>} : memref<1x16x16x128xf32, #tpu.memory_space<vmem>>, vector<1x16x16x128xf32>,
    %c0_73 = arith.constant 0 : index
    %c0_74 = arith.constant 0 : index
    %c0_75 = arith.constant 0 : index
    %80 = vector.load %arg5[%c0_73, %c0_74, %c0_75] : memref<1x2x128xf32, #tpu.memory_space<vmem>>, vector<1x1x128xf32>
    %81 = vector.shape_cast %80 : vector<1x1x128xf32> to vector<1x128xf32>
    %82 = vector.shape_cast %72 : vector<1x128xf32> to vector<1x1x128xf32>
    tpu.vector_store %arg5[%c0_73, %c0_74, %c0_75], %82 {strides = array<i32>} : memref<1x2x128xf32, #tpu.memory_space<vmem>>, vector<1x1x128xf32>,
    %c0_76 = arith.constant 0 : index
    %c1_77 = arith.constant 1 : index
    %c0_78 = arith.constant 0 : index
    %83 = vector.load %arg5[%c0_76, %c1_77, %c0_78] : memref<1x2x128xf32, #tpu.memory_space<vmem>>, vector<1x1x128xf32>
    %84 = vector.shape_cast %83 : vector<1x1x128xf32> to vector<1x128xf32>
    %85 = vector.shape_cast %77 : vector<1x128xf32> to vector<1x1x128xf32>
    tpu.vector_store %arg5[%c0_76, %c1_77, %c0_78], %85 {strides = array<i32>} : memref<1x2x128xf32, #tpu.memory_space<vmem>>, vector<1x1x128xf32>,
    return
  }
  func.func @transform_0(%arg0: i32) -> (i32, i32, i32, i32) {
    %c0_i32 = arith.constant 0 : i32
    %c0_i32_0 = arith.constant 0 : i32
    %c0_i32_1 = arith.constant 0 : i32
    %c0_i32_2 = arith.constant 0 : i32
    return %arg0, %c0_i32, %c0_i32_0, %c0_i32_1 : i32, i32, i32, i32
  }
  func.func @transform_1(%arg0: i32) -> (i32, i32, i32) {
    %c0_i32 = arith.constant 0 : i32
    %c0_i32_0 = arith.constant 0 : i32
    %c0_i32_1 = arith.constant 0 : i32
    %c0_i32_2 = arith.constant 0 : i32
    return %c0_i32, %c0_i32_0, %c0_i32_1 : i32, i32, i32
  }
  func.func @transform_2(%arg0: i32) -> (i32, i32) {
    %c0_i32 = arith.constant 0 : i32
    %c0_i32_0 = arith.constant 0 : i32
    %c0_i32_1 = arith.constant 0 : i32
    return %c0_i32, %c0_i32_0 : i32, i32
  }
  func.func @transform_3(%arg0: i32) -> (i32, i32, i32, i32) {
    %c0_i32 = arith.constant 0 : i32
    %c0_i32_0 = arith.constant 0 : i32
    %c0_i32_1 = arith.constant 0 : i32
    %c0_i32_2 = arith.constant 0 : i32
    return %arg0, %c0_i32, %c0_i32_0, %c0_i32_1 : i32, i32, i32, i32
  }
  func.func @transform_4(%arg0: i32) -> (i32, i32, i32) {
    %c0_i32 = arith.constant 0 : i32
    %c0_i32_0 = arith.constant 0 : i32
    %c0_i32_1 = arith.constant 0 : i32
    return %arg0, %c0_i32, %c0_i32_0 : i32, i32, i32
  }
}

</mosaic_0001>

<llo_original>
// kernel: tpu_custom_call.1
$region0: #{tpu_custom_call.1}
  #allocation0 [shape = 'u32[]', space=smem, size = 0x4, offset = 0x4, fixed_abs, tag = 'smem constant byte address 0x4 - core index']
  #allocation1 [shape = 'u32[144,128]{1,0:T(1,128)}', space=vmem, size = 0x12000, scoped, tag = 'internal scratch']
  %s0 = inlined_call_operand.vmem [shape: bf16[2,18,18,128], index: 0, kind: input, shape index: {}]
  %s1 = inlined_call_operand.vmem [shape: bf16[9,128,128], index: 1, kind: input, shape index: {}]
  %s2 = inlined_call_operand.vmem [shape: f32[1,128], index: 2, kind: input, shape index: {}]
  %s3 = inlined_call_operand.hbm [shape: f32[2,16,16,128], index: 3, kind: output, shape index: {0}]
  %s4 = inlined_call_operand.hbm [shape: f32[2,2,128], index: 4, kind: output, shape index: {1}]
  %5 = xla_tuple %s3, %s4
  %s6 = sld [smem:[#allocation0]]
  $region53: #{tpu_custom_call.1} parent=0
    _
  %s8 = ssub.s32 1, %s6
  %s9 = scalar_select 0, %s8, %s6
  $region1: #{tpu_custom_call.1} parent=0
    #allocation2 [shape = 'u8[262144]{0}', space=vmem, size = 0x40000, scoped, tag = 'output window, operand 0']
    #allocation3 [shape = 's32[2]{0}', space=sflag, size = 0x8, scoped, tag = 'scoped memory for tpu_custom_call.1']
    #allocation4 [shape = 'u8[2048]{0}', space=vmem, size = 0x800, scoped, tag = 'output window, operand 1']
    #allocation5 [shape = 's32[2]{0}', space=sflag, size = 0x8, scoped, tag = 'scoped memory for tpu_custom_call.1']
    %10 = vsyncpa [#allocation3], 0
    %s11 = scalar_lea.sflag [#allocation3], 1
    %12 = vsyncpa %s11, 0
    %13 = vsyncpa [#allocation5], 0
    %s14 = scalar_lea.sflag [#allocation5], 1
    %15 = vsyncpa %s14, 0
    loop: start=0, step=1, limit=4
    $region2: #{tpu_custom_call.1} parent=1 // loop_pre_header
      _
    $region3: #{tpu_custom_call.1} parent=1 // loop_header
      %s17 = sphi 0, %s21
      %p18 = scmp.ge.s32.totalorder %s17, 4
      %s27 = sphi 0, %s29
      %s30 = sphi 0, %s27
      %s31 = sphi 0, %s30
      %s47 = sphi 0, %s31
      %s51 = sphi 0, %s51
      %s53 = sphi 0, %s51
      %s54 = sphi 0, %s53
      %s68 = sphi 0, %s54
      %s72 = sphi 0, %s72
      %s74 = sphi 0, %s72
      %s75 = sphi 0, %s74
      %s89 = sphi 0, %s75
      %s95 = sphi 0, %s97
      %s98 = sphi 0, %s95
      %s99 = sphi 0, %s98
      %s115 = sphi 0, %s99
      %s121 = sphi 0, %s123
      %s124 = sphi 0, %s121
      %s125 = sphi 0, %s124
      %s141 = sphi 0, %s125
    $region4: #{tpu_custom_call.1} parent=1 // loop_header_branch
      %20 = sbr.rel (%p18) target = $region8
    $region5: #{tpu_custom_call.1} parent=1 // loop_body
      %s22 = ssub.s32 %s17, 1
      %s23 = ssub.s32 %s17, 2
      %s24 = sadd.s32 %s17, 1
      %s25 = ssub.s32 %s17, %s24
      %p26 = scmp.eq.s32.totalorder %s25, 0
      %s28 = sadd.s32 %s27, 1
      %s29 = scalar_select %p26, %s27, %s28
      %p32 = pneg %p26
      %p33 = scmp.eq.s32.totalorder %s17, 1
      %p34 = por %p32, %p33
      %p35 = scmp.ne.s32.totalorder %s27, %s30
      %p36 = scmp.eq.s32.totalorder %s17, 0
      %p37 = por %p35, %p36
      %p38 = scmp.ne.s32.totalorder %s27, %s30
      %p39 = scmp.eq.s32.totalorder %s22, 1
      %p40 = por %p38, %p39
      %p41 = scmp.ne.s32.totalorder %s30, %s31
      %p42 = scmp.eq.s32.totalorder %s22, 0
      %p43 = por %p41, %p42
      %p44 = scmp.ne.s32.totalorder %s30, %s31
      %p45 = scmp.eq.s32.totalorder %s23, 1
      %p46 = por %p44, %p45
      %p48 = scmp.ne.s32.totalorder %s31, %s47
      %p49 = scmp.eq.s32.totalorder %s23, 0
      %p50 = por %p48, %p49
      %s52 = sadd.s32 %s51, 1
      %p55 = scmp.eq.s32.totalorder %s17, 1
      %p56 = scmp.ne.s32.totalorder %s51, %s53
      %p57 = scmp.eq.s32.totalorder %s17, 0
      %p58 = por %p56, %p57
      %p59 = scmp.ne.s32.totalorder %s51, %s53
      %p60 = scmp.eq.s32.totalorder %s22, 1
      %p61 = por %p59, %p60
      %p62 = scmp.ne.s32.totalorder %s53, %s54
      %p63 = scmp.eq.s32.totalorder %s22, 0
      %p64 = por %p62, %p63
      %p65 = scmp.ne.s32.totalorder %s53, %s54
      %p66 = scmp.eq.s32.totalorder %s23, 1
      %p67 = por %p65, %p66
      %p69 = scmp.ne.s32.totalorder %s54, %s68
      %p70 = scmp.eq.s32.totalorder %s23, 0
      %p71 = por %p69, %p70
      %s73 = sadd.s32 %s72, 1
      %p76 = scmp.eq.s32.totalorder %s17, 1
      %p77 = scmp.ne.s32.totalorder %s72, %s74
      %p78 = scmp.eq.s32.totalorder %s17, 0
      %p79 = por %p77, %p78
      %p80 = scmp.ne.s32.totalorder %s72, %s74
      %p81 = scmp.eq.s32.totalorder %s22, 1
      %p82 = por %p80, %p81
      %p83 = scmp.ne.s32.totalorder %s74, %s75
      %p84 = scmp.eq.s32.totalorder %s22, 0
      %p85 = por %p83, %p84
      %p86 = scmp.ne.s32.totalorder %s74, %s75
      %p87 = scmp.eq.s32.totalorder %s23, 1
      %p88 = por %p86, %p87
      %p90 = scmp.ne.s32.totalorder %s75, %s89
      %p91 = scmp.eq.s32.totalorder %s23, 0
      %p92 = por %p90, %p91
      %s93 = ssub.s32 %s17, %s24
      %p94 = scmp.eq.s32.totalorder %s93, 0
      %s96 = sadd.s32 %s95, 1
      %s97 = scalar_select %p94, %s95, %s96
      %p100 = pneg %p94
      %p101 = scmp.eq.s32.totalorder %s17, 1
      %p102 = por %p100, %p101
      %p103 = scmp.ne.s32.totalorder %s95, %s98
      %p104 = scmp.eq.s32.totalorder %s17, 0
      %p105 = por %p103, %p104
      %p106 = scmp.ne.s32.totalorder %s95, %s98
      %p107 = scmp.eq.s32.totalorder %s22, 1
      %p108 = por %p106, %p107
      %p109 = scmp.ne.s32.totalorder %s98, %s99
      %p110 = scmp.eq.s32.totalorder %s22, 0
      %p111 = por %p109, %p110
      %p112 = scmp.ne.s32.totalorder %s98, %s99
      %p113 = scmp.eq.s32.totalorder %s23, 1
      %p114 = por %p112, %p113
      %p116 = scmp.ne.s32.totalorder %s99, %s115
      %p117 = scmp.eq.s32.totalorder %s23, 0
      %p118 = por %p116, %p117
      %s119 = ssub.s32 %s17, %s24
      %p120 = scmp.eq.s32.totalorder %s119, 0
      %s122 = sadd.s32 %s121, 1
      %s123 = scalar_select %p120, %s121, %s122
      %p126 = pneg %p120
      %p127 = scmp.eq.s32.totalorder %s17, 1
      %p128 = por %p126, %p127
      %p129 = scmp.ne.s32.totalorder %s121, %s124
      %p130 = scmp.eq.s32.totalorder %s17, 0
      %p131 = por %p129, %p130
      %p132 = scmp.ne.s32.totalorder %s121, %s124
      %p133 = scmp.eq.s32.totalorder %s22, 1
      %p134 = por %p132, %p133
      %p135 = scmp.ne.s32.totalorder %s124, %s125
      %p136 = scmp.eq.s32.totalorder %s22, 0
      %p137 = por %p135, %p136
      %p138 = scmp.ne.s32.totalorder %s124, %s125
      %p139 = scmp.eq.s32.totalorder %s23, 1
      %p140 = por %p138, %p139
      %p142 = scmp.ne.s32.totalorder %s125, %s141
      %p143 = scmp.eq.s32.totalorder %s23, 0
      %p144 = por %p142, %p143
      %p145 = scmp.le.s32.totalorder 1, %s17
      %p146 = scmp.lt.s32.totalorder %s17, 3
      %p147 = pnand %p145, %p146
      %p148 = pneg %p147
      // Predicated region
      $region9: #{tpu_custom_call.1} parent=5 // pred_check
        _
      $region10: #{tpu_custom_call.1} parent=5 // pred_check_branch
        %150 = sbr.rel (%p147) target = $region12
      $region11: #{tpu_custom_call.1} parent=5 // pred_region
        %s151 = ssub.s32 %s17, 1
        // Predicated region
        $region13: #{tpu_custom_call.1} parent=11 // pred_check
          %p152 = pneg %p64
        $region14: #{tpu_custom_call.1} parent=11 // pred_check_branch
          %154 = sbr.rel (%p152) target = $region16
        $region15: #{tpu_custom_call.1} parent=11 // pred_region
          _
        $region16: #{tpu_custom_call.1} parent=11 // pred_fallthru
          _
        // Predicated region
        $region17: #{tpu_custom_call.1} parent=11 // pred_check
          %p155 = pneg %p85
        $region18: #{tpu_custom_call.1} parent=11 // pred_check_branch
          %157 = sbr.rel (%p155) target = $region20
        $region19: #{tpu_custom_call.1} parent=11 // pred_region
          _
        $region20: #{tpu_custom_call.1} parent=11 // pred_fallthru
          _
      $region12: #{tpu_custom_call.1} parent=5 // pred_fallthru
        _
      %p158 = scmp.lt.s32.totalorder %s17, 2
      // Predicated region
      $region21: #{tpu_custom_call.1} parent=5 // pred_check
        %p159 = pneg %p158
      $region22: #{tpu_custom_call.1} parent=5 // pred_check_branch
        %161 = sbr.rel (%p159) target = $region24
      $region23: #{tpu_custom_call.1} parent=5 // pred_region
        // Predicated region
        $region25: #{tpu_custom_call.1} parent=23 // pred_check
          %p162 = pneg %p37
        $region26: #{tpu_custom_call.1} parent=23 // pred_check_branch
          %164 = sbr.rel (%p162) target = $region28
        $region27: #{tpu_custom_call.1} parent=23 // pred_region
          %p165 = scmp.lt.s32.totalorder %s17, 1
          %s166 = scalar_select %p165, %s17, 1
          %s167 = smul.addr %s166, 54
          %s168 = smul.addr %s167, 4
          %s169 = scalar_lea.vmem %s0, %s168
        $region28: #{tpu_custom_call.1} parent=23 // pred_fallthru
          _
      $region24: #{tpu_custom_call.1} parent=5 // pred_fallthru
        _
      %p170 = scmp.le.s32.totalorder 1, %s17
      %p171 = scmp.lt.s32.totalorder %s17, 3
      %p172 = pnand %p170, %p171
      %p173 = pneg %p172
      // Predicated region
      $region29: #{tpu_custom_call.1} parent=5 // pred_check
        _
      $region30: #{tpu_custom_call.1} parent=5 // pred_check_branch
        %175 = sbr.rel (%p172) target = $region32
      $region31: #{tpu_custom_call.1} parent=5 // pred_region
        %s176 = ssub.s32 %s17, 1
        %p177 = scmp.lt.s32.totalorder %s22, 1
        %s178 = scalar_select %p177, %s22, 1
        %s179 = smul.addr %s178, 54
        %s180 = smul.addr %s179, 4
        %s181 = scalar_lea.vmem %s0, %s180
        %p182 = pneg %p43
        %p183 = pneg %p40
        %p184 = pneg %p64
        %p185 = pneg %p61
        %p186 = pneg %p85
        %p187 = pneg %p82
        %p188 = pneg %p111
        %p189 = pneg %p108
        %s190 = sand.u32 %s98, 1
        %s191 = scalar_lea.sflag [#allocation3], %s190
        %s192 = sand.u32 %s98, 1
        %s193 = smul.addr %s192, 256
        %s194 = scalar_lea.vmem [#allocation2], %s193
        %p195 = pneg %p137
        %p196 = pneg %p134
        %s197 = sand.u32 %s124, 1
        %s198 = scalar_lea.sflag [#allocation5], %s197
        %s199 = sand.u32 %s124, 1
        %s200 = smul.addr %s199, 2
        %s201 = scalar_lea.vmem [#allocation4], %s200
        %p202 = scmp.lt.s32.totalorder %s22, 1
        %s203 = scalar_select %p202, %s22, 1
        %s204 = smul.addr %s203, 54
        %s205 = smul.addr %s204, 4
        %s206 = scalar_lea.vmem %s0, %s205
        %v208 = vld [vmem:[%s206] sm:$0xf]
        %v209 = vld [vmem:[%s206 + $0x4] sm:$0xf]
        %v210 = vld [vmem:[%s206 + $0xc] sm:$0xf]
        %v211 = vld [vmem:[%s206 + $0x10] sm:$0xf]
        %v212 = vld [vmem:[%s206 + $0x18] sm:$0xf]
        %v213 = vld [vmem:[%s206 + $0x1c] sm:$0xf]
        %v214 = vld [vmem:[%s206 + $0x24] sm:$0xf]
        %v215 = vld [vmem:[%s206 + $0x28] sm:$0xf]
        %v216 = vld [vmem:[%s206 + $0x30] sm:$0xf]
        %v217 = vld [vmem:[%s206 + $0x34] sm:$0xf]
        %v218 = vld [vmem:[%s206 + $0x3c] sm:$0xf]
        %v219 = vld [vmem:[%s206 + $0x40] sm:$0xf]
        %v220 = vld [vmem:[%s206 + $0x48] sm:$0xf]
        %v221 = vld [vmem:[%s206 + $0x4c] sm:$0xf]
        %v222 = vld [vmem:[%s206 + $0x54] sm:$0xf]
        %v223 = vld [vmem:[%s206 + $0x58] sm:$0xf]
        %v224 = vld [vmem:[%s206 + $0x60] sm:$0xf]
        %v225 = vld [vmem:[%s206 + $0x64] sm:$0xf]
        %v226 = vld [vmem:[%s206 + $0x6c] sm:$0xf]
        %v227 = vld [vmem:[%s206 + $0x70] sm:$0xf]
        %v228 = vld [vmem:[%s206 + $0x78] sm:$0xf]
        %v229 = vld [vmem:[%s206 + $0x7c] sm:$0xf]
        %v230 = vld [vmem:[%s206 + $0x84] sm:$0xf]
        %v231 = vld [vmem:[%s206 + $0x88] sm:$0xf]
        %v232 = vld [vmem:[%s206 + $0x90] sm:$0xf]
        %v233 = vld [vmem:[%s206 + $0x94] sm:$0xf]
        %v234 = vld [vmem:[%s206 + $0x9c] sm:$0xf]
        %v235 = vld [vmem:[%s206 + $0xa0] sm:$0xf]
        %v236 = vld [vmem:[%s206 + $0xa8] sm:$0xf]
        %v237 = vld [vmem:[%s206 + $0xac] sm:$0xf]
        %v238 = vld [vmem:[%s206 + $0xb4] sm:$0xf]
        %v239 = vld [vmem:[%s206 + $0xb8] sm:$0xf]
        %v240 = vld [vmem:[%s1] sm:$0xf]
        %v241 = vld [vmem:[%s1 + $0x4] sm:$0xf]
        %v242 = vld [vmem:[%s1 + $0x8] sm:$0xf]
        %v243 = vld [vmem:[%s1 + $0xc] sm:$0xf]
        %v244 = vld [vmem:[%s1 + $0x10] sm:$0xf]
        %v245 = vld [vmem:[%s1 + $0x14] sm:$0xf]
        %v246 = vld [vmem:[%s1 + $0x18] sm:$0xf]
        %v247 = vld [vmem:[%s1 + $0x1c] sm:$0xf]
        %v248 = vld [vmem:[%s1 + $0x20] sm:$0xf]
        %v249 = vld [vmem:[%s1 + $0x24] sm:$0xf]
        %v250 = vld [vmem:[%s1 + $0x28] sm:$0xf]
        %v251 = vld [vmem:[%s1 + $0x2c] sm:$0xf]
        %v252 = vld [vmem:[%s1 + $0x30] sm:$0xf]
        %v253 = vld [vmem:[%s1 + $0x34] sm:$0xf]
        %v254 = vld [vmem:[%s1 + $0x38] sm:$0xf]
        %v255 = vld [vmem:[%s1 + $0x3c] sm:$0xf]
        %v256 = vld [vmem:[%s206 + $0x8] sm:$0x1]
        %v257 = vld [vmem:[%s206 + $0x14] sm:$0x1]
        %v258 = vld [vmem:[%s206 + $0x20] sm:$0x1]
        %v259 = vld [vmem:[%s206 + $0x2c] sm:$0x1]
        %v260 = vld [vmem:[%s206 + $0x38] sm:$0x1]
        %v261 = vld [vmem:[%s206 + $0x44] sm:$0x1]
        %v262 = vld [vmem:[%s206 + $0x50] sm:$0x1]
        %v263 = vld [vmem:[%s206 + $0x5c] sm:$0x1]
        %v264 = vld [vmem:[%s206 + $0x68] sm:$0x1]
        %v265 = vld [vmem:[%s206 + $0x74] sm:$0x1]
        %v266 = vld [vmem:[%s206 + $0x80] sm:$0x1]
        %v267 = vld [vmem:[%s206 + $0x8c] sm:$0x1]
        %v268 = vld [vmem:[%s206 + $0x98] sm:$0x1]
        %v269 = vld [vmem:[%s206 + $0xa4] sm:$0x1]
        %v270 = vld [vmem:[%s206 + $0xb0] sm:$0x1]
        %v271 = vld [vmem:[%s206 + $0xbc] sm:$0x1]
        %vm272 = vsmask.f32 3328
        %vm273 = vsmask.f32 7440
        %vm274 = vmor %vm272, %vm273
        %v276 = vshrl.u32 %v208, 16
        %v278 = vrot.slane %v276, 4
        %v279 = vshll.u32 %v208, 16
        %v281 = vrot.slane %v279, 5
        %v282 = vor.u32 %v278, %v281
        %v283 = vrot.slane %v282, 4
        %v285 = vshll.u32 %v209, 16
        %v287 = vrot.slane %v285, 5
        %v288 = vsel %vm274, %v283, %v287
        %v289 = vshrl.u32 %v209, 16
        %v291 = vrot.slane %v289, 4
        %v292 = vor.u32 %v291, %v287
        %v293 = vrot.slane %v292, 4
        %v295 = vshll.u32 %v256, 16
        %v297 = vrot.slane %v295, 5
        %v298 = vsel %vm274, %v293, %v297
        %v300 = vshrl.u32 %v210, 16
        %v302 = vrot.slane %v300, 4
        %v303 = vshll.u32 %v210, 16
        %v305 = vrot.slane %v303, 5
        %v306 = vor.u32 %v302, %v305
        %v307 = vrot.slane %v306, 4
        %v309 = vshll.u32 %v211, 16
        %v311 = vrot.slane %v309, 5
        %v312 = vsel %vm274, %v307, %v311
        %v313 = vshrl.u32 %v211, 16
        %v315 = vrot.slane %v313, 4
        %v316 = vor.u32 %v315, %v311
        %v317 = vrot.slane %v316, 4
        %v319 = vshll.u32 %v257, 16
        %v321 = vrot.slane %v319, 5
        %v322 = vsel %vm274, %v317, %v321
        %v324 = vshrl.u32 %v212, 16
        %v326 = vrot.slane %v324, 4
        %v327 = vshll.u32 %v212, 16
        %v329 = vrot.slane %v327, 5
        %v330 = vor.u32 %v326, %v329
        %v331 = vrot.slane %v330, 4
        %v333 = vshll.u32 %v213, 16
        %v335 = vrot.slane %v333, 5
        %v336 = vsel %vm274, %v331, %v335
        %v337 = vshrl.u32 %v213, 16
        %v339 = vrot.slane %v337, 4
        %v340 = vor.u32 %v339, %v335
        %v341 = vrot.slane %v340, 4
        %v343 = vshll.u32 %v258, 16
        %v345 = vrot.slane %v343, 5
        %v346 = vsel %vm274, %v341, %v345
        %v348 = vshrl.u32 %v214, 16
        %v350 = vrot.slane %v348, 4
        %v351 = vshll.u32 %v214, 16
        %v353 = vrot.slane %v351, 5
        %v354 = vor.u32 %v350, %v353
        %v355 = vrot.slane %v354, 4
        %v357 = vshll.u32 %v215, 16
        %v359 = vrot.slane %v357, 5
        %v360 = vsel %vm274, %v355, %v359
        %v361 = vshrl.u32 %v215, 16
        %v363 = vrot.slane %v361, 4
        %v364 = vor.u32 %v363, %v359
        %v365 = vrot.slane %v364, 4
        %v367 = vshll.u32 %v259, 16
        %v369 = vrot.slane %v367, 5
        %v370 = vsel %vm274, %v365, %v369
        %v372 = vshrl.u32 %v216, 16
        %v374 = vrot.slane %v372, 4
        %v375 = vshll.u32 %v216, 16
        %v377 = vrot.slane %v375, 5
        %v378 = vor.u32 %v374, %v377
        %v379 = vrot.slane %v378, 4
        %v381 = vshll.u32 %v217, 16
        %v383 = vrot.slane %v381, 5
        %v384 = vsel %vm274, %v379, %v383
        %v385 = vshrl.u32 %v217, 16
        %v387 = vrot.slane %v385, 4
        %v388 = vor.u32 %v387, %v383
        %v389 = vrot.slane %v388, 4
        %v391 = vshll.u32 %v260, 16
        %v393 = vrot.slane %v391, 5
        %v394 = vsel %vm274, %v389, %v393
        %v396 = vshrl.u32 %v218, 16
        %v398 = vrot.slane %v396, 4
        %v399 = vshll.u32 %v218, 16
        %v401 = vrot.slane %v399, 5
        %v402 = vor.u32 %v398, %v401
        %v403 = vrot.slane %v402, 4
        %v405 = vshll.u32 %v219, 16
        %v407 = vrot.slane %v405, 5
        %v408 = vsel %vm274, %v403, %v407
        %v409 = vshrl.u32 %v219, 16
        %v411 = vrot.slane %v409, 4
        %v412 = vor.u32 %v411, %v407
        %v413 = vrot.slane %v412, 4
        %v415 = vshll.u32 %v261, 16
        %v417 = vrot.slane %v415, 5
        %v418 = vsel %vm274, %v413, %v417
        %v420 = vshrl.u32 %v220, 16
        %v422 = vrot.slane %v420, 4
        %v423 = vshll.u32 %v220, 16
        %v425 = vrot.slane %v423, 5
        %v426 = vor.u32 %v422, %v425
        %v427 = vrot.slane %v426, 4
        %v429 = vshll.u32 %v221, 16
        %v431 = vrot.slane %v429, 5
        %v432 = vsel %vm274, %v427, %v431
        %v433 = vshrl.u32 %v221, 16
        %v435 = vrot.slane %v433, 4
        %v436 = vor.u32 %v435, %v431
        %v437 = vrot.slane %v436, 4
        %v439 = vshll.u32 %v262, 16
        %v441 = vrot.slane %v439, 5
        %v442 = vsel %vm274, %v437, %v441
        %v444 = vshrl.u32 %v222, 16
        %v446 = vrot.slane %v444, 4
        %v447 = vshll.u32 %v222, 16
        %v449 = vrot.slane %v447, 5
        %v450 = vor.u32 %v446, %v449
        %v451 = vrot.slane %v450, 4
        %v453 = vshll.u32 %v223, 16
        %v455 = vrot.slane %v453, 5
        %v456 = vsel %vm274, %v451, %v455
        %v457 = vshrl.u32 %v223, 16
        %v459 = vrot.slane %v457, 4
        %v460 = vor.u32 %v459, %v455
        %v461 = vrot.slane %v460, 4
        %v463 = vshll.u32 %v263, 16
        %v465 = vrot.slane %v463, 5
        %v466 = vsel %vm274, %v461, %v465
        %v468 = vshrl.u32 %v224, 16
        %v470 = vrot.slane %v468, 4
        %v471 = vshll.u32 %v224, 16
        %v473 = vrot.slane %v471, 5
        %v474 = vor.u32 %v470, %v473
        %v475 = vrot.slane %v474, 4
        %v477 = vshll.u32 %v225, 16
        %v479 = vrot.slane %v477, 5
        %v480 = vsel %vm274, %v475, %v479
        %v481 = vshrl.u32 %v225, 16
        %v483 = vrot.slane %v481, 4
        %v484 = vor.u32 %v483, %v479
        %v485 = vrot.slane %v484, 4
        %v487 = vshll.u32 %v264, 16
        %v489 = vrot.slane %v487, 5
        %v490 = vsel %vm274, %v485, %v489
        %v492 = vshrl.u32 %v226, 16
        %v494 = vrot.slane %v492, 4
        %v495 = vshll.u32 %v226, 16
        %v497 = vrot.slane %v495, 5
        %v498 = vor.u32 %v494, %v497
        %v499 = vrot.slane %v498, 4
        %v501 = vshll.u32 %v227, 16
        %v503 = vrot.slane %v501, 5
        %v504 = vsel %vm274, %v499, %v503
        %v505 = vshrl.u32 %v227, 16
        %v507 = vrot.slane %v505, 4
        %v508 = vor.u32 %v507, %v503
        %v509 = vrot.slane %v508, 4
        %v511 = vshll.u32 %v265, 16
        %v513 = vrot.slane %v511, 5
        %v514 = vsel %vm274, %v509, %v513
        %v516 = vshrl.u32 %v228, 16
        %v518 = vrot.slane %v516, 4
        %v519 = vshll.u32 %v228, 16
        %v521 = vrot.slane %v519, 5
        %v522 = vor.u32 %v518, %v521
        %v523 = vrot.slane %v522, 4
        %v525 = vshll.u32 %v229, 16
        %v527 = vrot.slane %v525, 5
        %v528 = vsel %vm274, %v523, %v527
        %v529 = vshrl.u32 %v229, 16
        %v531 = vrot.slane %v529, 4
        %v532 = vor.u32 %v531, %v527
        %v533 = vrot.slane %v532, 4
        %v535 = vshll.u32 %v266, 16
        %v537 = vrot.slane %v535, 5
        %v538 = vsel %vm274, %v533, %v537
        %v540 = vshrl.u32 %v230, 16
        %v542 = vrot.slane %v540, 4
        %v543 = vshll.u32 %v230, 16
        %v545 = vrot.slane %v543, 5
        %v546 = vor.u32 %v542, %v545
        %v547 = vrot.slane %v546, 4
        %v549 = vshll.u32 %v231, 16
        %v551 = vrot.slane %v549, 5
        %v552 = vsel %vm274, %v547, %v551
        %v553 = vshrl.u32 %v231, 16
        %v555 = vrot.slane %v553, 4
        %v556 = vor.u32 %v555, %v551
        %v557 = vrot.slane %v556, 4
        %v559 = vshll.u32 %v267, 16
        %v561 = vrot.slane %v559, 5
        %v562 = vsel %vm274, %v557, %v561
        %v564 = vshrl.u32 %v232, 16
        %v566 = vrot.slane %v564, 4
        %v567 = vshll.u32 %v232, 16
        %v569 = vrot.slane %v567, 5
        %v570 = vor.u32 %v566, %v569
        %v571 = vrot.slane %v570, 4
        %v573 = vshll.u32 %v233, 16
        %v575 = vrot.slane %v573, 5
        %v576 = vsel %vm274, %v571, %v575
        %v577 = vshrl.u32 %v233, 16
        %v579 = vrot.slane %v577, 4
        %v580 = vor.u32 %v579, %v575
        %v581 = vrot.slane %v580, 4
        %v583 = vshll.u32 %v268, 16
        %v585 = vrot.slane %v583, 5
        %v586 = vsel %vm274, %v581, %v585
        %v588 = vshrl.u32 %v234, 16
        %v590 = vrot.slane %v588, 4
        %v591 = vshll.u32 %v234, 16
        %v593 = vrot.slane %v591, 5
        %v594 = vor.u32 %v590, %v593
        %v595 = vrot.slane %v594, 4
        %v597 = vshll.u32 %v235, 16
        %v599 = vrot.slane %v597, 5
        %v600 = vsel %vm274, %v595, %v599
        %v601 = vshrl.u32 %v235, 16
        %v603 = vrot.slane %v601, 4
        %v604 = vor.u32 %v603, %v599
        %v605 = vrot.slane %v604, 4
        %v607 = vshll.u32 %v269, 16
        %v609 = vrot.slane %v607, 5
        %v610 = vsel %vm274, %v605, %v609
        %v612 = vshrl.u32 %v236, 16
        %v614 = vrot.slane %v612, 4
        %v615 = vshll.u32 %v236, 16
        %v617 = vrot.slane %v615, 5
        %v618 = vor.u32 %v614, %v617
        %v619 = vrot.slane %v618, 4
        %v621 = vshll.u32 %v237, 16
        %v623 = vrot.slane %v621, 5
        %v624 = vsel %vm274, %v619, %v623
        %v625 = vshrl.u32 %v237, 16
        %v627 = vrot.slane %v625, 4
        %v628 = vor.u32 %v627, %v623
        %v629 = vrot.slane %v628, 4
        %v631 = vshll.u32 %v270, 16
        %v633 = vrot.slane %v631, 5
        %v634 = vsel %vm274, %v629, %v633
        %v636 = vshrl.u32 %v238, 16
        %v638 = vrot.slane %v636, 4
        %v639 = vshll.u32 %v238, 16
        %v641 = vrot.slane %v639, 5
        %v642 = vor.u32 %v638, %v641
        %v643 = vrot.slane %v642, 4
        %v645 = vshll.u32 %v239, 16
        %v647 = vrot.slane %v645, 5
        %v648 = vsel %vm274, %v643, %v647
        %v649 = vshrl.u32 %v239, 16
        %v651 = vrot.slane %v649, 4
        %v652 = vor.u32 %v651, %v647
        %v653 = vrot.slane %v652, 4
        %v655 = vshll.u32 %v271, 16
        %v657 = vrot.slane %v655, 5
        %v658 = vsel %vm274, %v653, %v657
        %s659 = scalar_lea.vmem %s1, 64
        %v660 = vld [vmem:[%s659] sm:$0xf]
        %v661 = vld [vmem:[%s659 + $0x4] sm:$0xf]
        %v662 = vld [vmem:[%s659 + $0x8] sm:$0xf]
        %v663 = vld [vmem:[%s659 + $0xc] sm:$0xf]
        %v664 = vld [vmem:[%s659 + $0x10] sm:$0xf]
        %v665 = vld [vmem:[%s659 + $0x14] sm:$0xf]
        %v666 = vld [vmem:[%s659 + $0x18] sm:$0xf]
        %v667 = vld [vmem:[%s659 + $0x1c] sm:$0xf]
        %v668 = vld [vmem:[%s659 + $0x20] sm:$0xf]
        %v669 = vld [vmem:[%s659 + $0x24] sm:$0xf]
        %v670 = vld [vmem:[%s659 + $0x28] sm:$0xf]
        %v671 = vld [vmem:[%s659 + $0x2c] sm:$0xf]
        %v672 = vld [vmem:[%s659 + $0x30] sm:$0xf]
        %v673 = vld [vmem:[%s659 + $0x34] sm:$0xf]
        %v674 = vld [vmem:[%s659 + $0x38] sm:$0xf]
        %v675 = vld [vmem:[%s659 + $0x3c] sm:$0xf]
        %v676 = vunpack.c.l.b16 %v288
        %v677 = vunpack.c.l.b16 %v298
        %v678 = vunpack.c.l.b16 %v312
        %v679 = vunpack.c.l.b16 %v322
        %v680 = vunpack.c.l.b16 %v336
        %v681 = vunpack.c.l.b16 %v346
        %v682 = vunpack.c.l.b16 %v360
        %v683 = vunpack.c.l.b16 %v370
        %v684 = vunpack.c.l.b16 %v384
        %v685 = vunpack.c.l.b16 %v394
        %v686 = vunpack.c.l.b16 %v408
        %v687 = vunpack.c.l.b16 %v418
        %v688 = vunpack.c.l.b16 %v432
        %v689 = vunpack.c.l.b16 %v442
        %v690 = vunpack.c.l.b16 %v456
        %v691 = vunpack.c.l.b16 %v466
        %v692 = vunpack.c.l.b16 %v480
        %v693 = vunpack.c.l.b16 %v490
        %v694 = vunpack.c.l.b16 %v504
        %v695 = vunpack.c.l.b16 %v514
        %v696 = vunpack.c.l.b16 %v528
        %v697 = vunpack.c.l.b16 %v538
        %v698 = vunpack.c.l.b16 %v552
        %v699 = vunpack.c.l.b16 %v562
        %v700 = vunpack.c.l.b16 %v576
        %v701 = vunpack.c.l.b16 %v586
        %v702 = vunpack.c.l.b16 %v600
        %v703 = vunpack.c.l.b16 %v610
        %v704 = vunpack.c.l.b16 %v624
        %v705 = vunpack.c.l.b16 %v634
        %v706 = vunpack.c.l.b16 %v648
        %v707 = vunpack.c.l.b16 %v658
        %v708 = vpack.c.b16 %v677, %v676
        %v709 = vpack.c.b16 %v679, %v678
        %v710 = vpack.c.b16 %v681, %v680
        %v711 = vpack.c.b16 %v683, %v682
        %v712 = vpack.c.b16 %v685, %v684
        %v713 = vpack.c.b16 %v687, %v686
        %v714 = vpack.c.b16 %v689, %v688
        %v715 = vpack.c.b16 %v691, %v690
        %v716 = vpack.c.b16 %v693, %v692
        %v717 = vpack.c.b16 %v695, %v694
        %v718 = vpack.c.b16 %v697, %v696
        %v719 = vpack.c.b16 %v699, %v698
        %v720 = vpack.c.b16 %v701, %v700
        %v721 = vpack.c.b16 %v703, %v702
        %v722 = vpack.c.b16 %v705, %v704
        %v723 = vpack.c.b16 %v707, %v706
        %v756 = vunpack.c.l.b16 %v660
        %v757 = vunpack.c.l.b16 %v661
        %v758 = vunpack.c.l.b16 %v662
        %v759 = vunpack.c.l.b16 %v663
        %v760 = vunpack.c.l.b16 %v664
        %v761 = vunpack.c.l.b16 %v665
        %v762 = vunpack.c.l.b16 %v666
        %v763 = vunpack.c.l.b16 %v667
        %v764 = vunpack.c.l.b16 %v668
        %v765 = vunpack.c.l.b16 %v669
        %v766 = vunpack.c.l.b16 %v670
        %v767 = vunpack.c.l.b16 %v671
        %v768 = vunpack.c.l.b16 %v672
        %v769 = vunpack.c.l.b16 %v673
        %v770 = vunpack.c.l.b16 %v674
        %v771 = vunpack.c.l.b16 %v675
        %v772 = vpack.c.b16 %v757, %v756
        %v773 = vpack.c.b16 %v759, %v758
        %v774 = vpack.c.b16 %v761, %v760
        %v775 = vpack.c.b16 %v763, %v762
        %v776 = vpack.c.b16 %v765, %v764
        %v777 = vpack.c.b16 %v767, %v766
        %v778 = vpack.c.b16 %v769, %v768
        %v779 = vpack.c.b16 %v771, %v770
        %788 = vmatprep.subr.bf16.mxu0 0
        %789 = vmatpush1.bf16.msra.mxu0 %v779
        %790 = vmatprep.subr.bf16.mxu0 0
        %791 = vmatpush1.bf16.msra.mxu0 %v778
        %792 = vmatprep.subr.bf16.mxu0 0
        %793 = vmatpush1.bf16.msra.mxu0 %v777
        %794 = vmatprep.subr.bf16.mxu0 0
        %795 = vmatpush1.bf16.msra.mxu0 %v776
        %796 = vmatprep.subr.bf16.mxu0 0
        %797 = vmatpush1.bf16.msra.mxu0 %v775
        %798 = vmatprep.subr.bf16.mxu0 0
        %799 = vmatpush1.bf16.msra.mxu0 %v774
        %800 = vmatprep.subr.bf16.mxu0 0
        %801 = vmatpush1.bf16.msra.mxu0 %v773
        %802 = vmatprep.subr.bf16.mxu0 0
        %803 = vmatpush1.bf16.msra.mxu0 %v772
        %804 = vmatprep.subr.bf16.mxu0 0
        %805 = vmatpush2.bf16.msra.mxu0 0
        %806 = vmatprep.subr.bf16.mxu0 0
        %807 = vmatpush2.bf16.msra.mxu0 0
        %808 = vmatprep.subr.bf16.mxu0 0
        %809 = vmatpush2.bf16.msra.mxu0 0
        %810 = vmatprep.subr.bf16.mxu0 0
        %811 = vmatpush2.bf16.msra.mxu0 0
        %812 = vmatprep.subr.bf16.mxu0 0
        %813 = vmatpush2.bf16.msra.mxu0 0
        %814 = vmatprep.subr.bf16.mxu0 0
        %815 = vmatpush2.bf16.msra.mxu0 0
        %816 = vmatprep.subr.bf16.mxu0 0
        %817 = vmatpush2.bf16.msra.mxu0 0
        %818 = vmatprep.subr.bf16.mxu0 0
        %819 = vmatpush2.bf16.msra.mxu0 0
        %820 = vmatprep.mubr.bf16.mxu0 0
        %821 = vmatmul.mubr.bf16.gmra.mxu0 %v708
        %v822 = vpop.f32.mrf.mxu0
        %v823 = vadd.f32 0.0, %v822
        %v824 = vpop.f32.mrf.mxu0
        %v825 = vpop.f32.mrf.mxu0
        %v826 = vadd.f32 0.0, %v825
        %v827 = vpop.f32.mrf.mxu0
        %828 = vmatprep.mubr.bf16.mxu0 0
        %829 = vmatmul.mubr.bf16.gmra.mxu0 %v709
        %v830 = vpop.f32.mrf.mxu0
        %v831 = vadd.f32 0.0, %v830
        %v832 = vpop.f32.mrf.mxu0
        %v833 = vpop.f32.mrf.mxu0
        %v834 = vadd.f32 0.0, %v833
        %v835 = vpop.f32.mrf.mxu0
        %836 = vmatprep.mubr.bf16.mxu0 0
        %837 = vmatmul.mubr.bf16.gmra.mxu0 %v710
        %v838 = vpop.f32.mrf.mxu0
        %v839 = vadd.f32 0.0, %v838
        %v840 = vpop.f32.mrf.mxu0
        %v841 = vpop.f32.mrf.mxu0
        %v842 = vadd.f32 0.0, %v841
        %v843 = vpop.f32.mrf.mxu0
        %844 = vmatprep.mubr.bf16.mxu0 0
        %845 = vmatmul.mubr.bf16.gmra.mxu0 %v711
        %v846 = vpop.f32.mrf.mxu0
        %v847 = vadd.f32 0.0, %v846
        %v848 = vpop.f32.mrf.mxu0
        %v849 = vpop.f32.mrf.mxu0
        %v850 = vadd.f32 0.0, %v849
        %v851 = vpop.f32.mrf.mxu0
        %852 = vmatprep.mubr.bf16.mxu0 0
        %853 = vmatmul.mubr.bf16.gmra.mxu0 %v712
        %v854 = vpop.f32.mrf.mxu0
        %v855 = vadd.f32 0.0, %v854
        %v856 = vpop.f32.mrf.mxu0
        %v857 = vpop.f32.mrf.mxu0
        %v858 = vadd.f32 0.0, %v857
        %v859 = vpop.f32.mrf.mxu0
        %860 = vmatprep.mubr.bf16.mxu0 0
        %861 = vmatmul.mubr.bf16.gmra.mxu0 %v713
        %v862 = vpop.f32.mrf.mxu0
        %v863 = vadd.f32 0.0, %v862
        %v864 = vpop.f32.mrf.mxu0
        %v865 = vpop.f32.mrf.mxu0
        %v866 = vadd.f32 0.0, %v865
        %v867 = vpop.f32.mrf.mxu0
        %868 = vmatprep.mubr.bf16.mxu0 0
        %869 = vmatmul.mubr.bf16.gmra.mxu0 %v714
        %v870 = vpop.f32.mrf.mxu0
        %v871 = vadd.f32 0.0, %v870
        %v872 = vpop.f32.mrf.mxu0
        %v873 = vpop.f32.mrf.mxu0
        %v874 = vadd.f32 0.0, %v873
        %v875 = vpop.f32.mrf.mxu0
        %876 = vmatprep.mubr.bf16.mxu0 0
        %877 = vmatmul.mubr.bf16.gmra.mxu0 %v715
        %v878 = vpop.f32.mrf.mxu0
        %v879 = vadd.f32 0.0, %v878
        %v880 = vpop.f32.mrf.mxu0
        %v881 = vpop.f32.mrf.mxu0
        %v882 = vadd.f32 0.0, %v881
        %v883 = vpop.f32.mrf.mxu0
        %884 = vmatprep.mubr.bf16.mxu0 0
        %885 = vmatmul.mubr.bf16.gmra.mxu0 %v716
        %v886 = vpop.f32.mrf.mxu0
        %v887 = vadd.f32 0.0, %v886
        %v888 = vpop.f32.mrf.mxu0
        %v889 = vpop.f32.mrf.mxu0
        %v890 = vadd.f32 0.0, %v889
        %v891 = vpop.f32.mrf.mxu0
        %892 = vmatprep.mubr.bf16.mxu0 0
        %893 = vmatmul.mubr.bf16.gmra.mxu0 %v717
        %v894 = vpop.f32.mrf.mxu0
        %v895 = vadd.f32 0.0, %v894
        %v896 = vpop.f32.mrf.mxu0
        %v897 = vpop.f32.mrf.mxu0
        %v898 = vadd.f32 0.0, %v897
        %v899 = vpop.f32.mrf.mxu0
        %900 = vmatprep.mubr.bf16.mxu0 0
        %901 = vmatmul.mubr.bf16.gmra.mxu0 %v718
        %v902 = vpop.f32.mrf.mxu0
        %v903 = vadd.f32 0.0, %v902
        %v904 = vpop.f32.mrf.mxu0
        %v905 = vpop.f32.mrf.mxu0
        %v906 = vadd.f32 0.0, %v905
        %v907 = vpop.f32.mrf.mxu0
        %908 = vmatprep.mubr.bf16.mxu0 0
        %909 = vmatmul.mubr.bf16.gmra.mxu0 %v719
        %v910 = vpop.f32.mrf.mxu0
        %v911 = vadd.f32 0.0, %v910
        %v912 = vpop.f32.mrf.mxu0
        %v913 = vpop.f32.mrf.mxu0
        %v914 = vadd.f32 0.0, %v913
        %v915 = vpop.f32.mrf.mxu0
        %916 = vmatprep.mubr.bf16.mxu0 0
        %917 = vmatmul.mubr.bf16.gmra.mxu0 %v720
        %v918 = vpop.f32.mrf.mxu0
        %v919 = vadd.f32 0.0, %v918
        %v920 = vpop.f32.mrf.mxu0
        %v921 = vpop.f32.mrf.mxu0
        %v922 = vadd.f32 0.0, %v921
        %v923 = vpop.f32.mrf.mxu0
        %924 = vmatprep.mubr.bf16.mxu0 0
        %925 = vmatmul.mubr.bf16.gmra.mxu0 %v721
        %v926 = vpop.f32.mrf.mxu0
        %v927 = vadd.f32 0.0, %v926
        %v928 = vpop.f32.mrf.mxu0
        %v929 = vpop.f32.mrf.mxu0
        %v930 = vadd.f32 0.0, %v929
        %v931 = vpop.f32.mrf.mxu0
        %932 = vmatprep.mubr.bf16.mxu0 0
        %933 = vmatmul.mubr.bf16.gmra.mxu0 %v722
        %v934 = vpop.f32.mrf.mxu0
        %v935 = vadd.f32 0.0, %v934
        %v936 = vpop.f32.mrf.mxu0
        %v937 = vpop.f32.mrf.mxu0
        %v938 = vadd.f32 0.0, %v937
        %v939 = vpop.f32.mrf.mxu0
        %940 = vmatprep.mubr.bf16.mxu0 0
        %941 = vmatmul.mubr.bf16.gmra.mxu0 %v723
        %v942 = vpop.f32.mrf.mxu0
        %v943 = vadd.f32 0.0, %v942
        %v944 = vpop.f32.mrf.mxu0
        %v945 = vpop.f32.mrf.mxu0
        %v946 = vadd.f32 0.0, %v945
        %v947 = vpop.f32.mrf.mxu0
        %948 = vdwg.mxu0
        %v981 = vunpack.c.l.b16 %v208
        %v982 = vunpack.c.l.b16 %v209
        %v983 = vunpack.c.l.b16 %v210
        %v984 = vunpack.c.l.b16 %v211
        %v985 = vunpack.c.l.b16 %v212
        %v986 = vunpack.c.l.b16 %v213
        %v987 = vunpack.c.l.b16 %v214
        %v988 = vunpack.c.l.b16 %v215
        %v989 = vunpack.c.l.b16 %v216
        %v990 = vunpack.c.l.b16 %v217
        %v991 = vunpack.c.l.b16 %v218
        %v992 = vunpack.c.l.b16 %v219
        %v993 = vunpack.c.l.b16 %v220
        %v994 = vunpack.c.l.b16 %v221
        %v995 = vunpack.c.l.b16 %v222
        %v996 = vunpack.c.l.b16 %v223
        %v997 = vunpack.c.l.b16 %v224
        %v998 = vunpack.c.l.b16 %v225
        %v999 = vunpack.c.l.b16 %v226
        %v1000 = vunpack.c.l.b16 %v227
        %v1001 = vunpack.c.l.b16 %v228
        %v1002 = vunpack.c.l.b16 %v229
        %v1003 = vunpack.c.l.b16 %v230
        %v1004 = vunpack.c.l.b16 %v231
        %v1005 = vunpack.c.l.b16 %v232
        %v1006 = vunpack.c.l.b16 %v233
        %v1007 = vunpack.c.l.b16 %v234
        %v1008 = vunpack.c.l.b16 %v235
        %v1009 = vunpack.c.l.b16 %v236
        %v1010 = vunpack.c.l.b16 %v237
        %v1011 = vunpack.c.l.b16 %v238
        %v1012 = vunpack.c.l.b16 %v239
        %v1013 = vpack.c.b16 %v982, %v981
        %v1014 = vpack.c.b16 %v984, %v983
        %v1015 = vpack.c.b16 %v986, %v985
        %v1016 = vpack.c.b16 %v988, %v987
        %v1017 = vpack.c.b16 %v990, %v989
        %v1018 = vpack.c.b16 %v992, %v991
        %v1019 = vpack.c.b16 %v994, %v993
        %v1020 = vpack.c.b16 %v996, %v995
        %v1021 = vpack.c.b16 %v998, %v997
        %v1022 = vpack.c.b16 %v1000, %v999
        %v1023 = vpack.c.b16 %v1002, %v1001
        %v1024 = vpack.c.b16 %v1004, %v1003
        %v1025 = vpack.c.b16 %v1006, %v1005
        %v1026 = vpack.c.b16 %v1008, %v1007
        %v1027 = vpack.c.b16 %v1010, %v1009
        %v1028 = vpack.c.b16 %v1012, %v1011
        %v1061 = vunpack.c.l.b16 %v240
        %v1062 = vunpack.c.l.b16 %v241
        %v1063 = vunpack.c.l.b16 %v242
        %v1064 = vunpack.c.l.b16 %v243
        %v1065 = vunpack.c.l.b16 %v244
        %v1066 = vunpack.c.l.b16 %v245
        %v1067 = vunpack.c.l.b16 %v246
        %v1068 = vunpack.c.l.b16 %v247
        %v1069 = vunpack.c.l.b16 %v248
        %v1070 = vunpack.c.l.b16 %v249
        %v1071 = vunpack.c.l.b16 %v250
        %v1072 = vunpack.c.l.b16 %v251
        %v1073 = vunpack.c.l.b16 %v252
        %v1074 = vunpack.c.l.b16 %v253
        %v1075 = vunpack.c.l.b16 %v254
        %v1076 = vunpack.c.l.b16 %v255
        %v1077 = vpack.c.b16 %v1062, %v1061
        %v1078 = vpack.c.b16 %v1064, %v1063
        %v1079 = vpack.c.b16 %v1066, %v1065
        %v1080 = vpack.c.b16 %v1068, %v1067
        %v1081 = vpack.c.b16 %v1070, %v1069
        %v1082 = vpack.c.b16 %v1072, %v1071
        %v1083 = vpack.c.b16 %v1074, %v1073
        %v1084 = vpack.c.b16 %v1076, %v1075
        %1093 = vmatprep.subr.bf16.mxu0 0
        %1094 = vmatpush1.bf16.msra.mxu0 %v1084
        %1095 = vmatprep.subr.bf16.mxu0 0
        %1096 = vmatpush1.bf16.msra.mxu0 %v1083
        %1097 = vmatprep.subr.bf16.mxu0 0
        %1098 = vmatpush1.bf16.msra.mxu0 %v1082
        %1099 = vmatprep.subr.bf16.mxu0 0
        %1100 = vmatpush1.bf16.msra.mxu0 %v1081
        %1101 = vmatprep.subr.bf16.mxu0 0
        %1102 = vmatpush1.bf16.msra.mxu0 %v1080
        %1103 = vmatprep.subr.bf16.mxu0 0
        %1104 = vmatpush1.bf16.msra.mxu0 %v1079
        %1105 = vmatprep.subr.bf16.mxu0 0
        %1106 = vmatpush1.bf16.msra.mxu0 %v1078
        %1107 = vmatprep.subr.bf16.mxu0 0
        %1108 = vmatpush1.bf16.msra.mxu0 %v1077
        %1109 = vmatprep.subr.bf16.mxu0 0
        %1110 = vmatpush2.bf16.msra.mxu0 0
        %1111 = vmatprep.subr.bf16.mxu0 0
        %1112 = vmatpush2.bf16.msra.mxu0 0
        %1113 = vmatprep.subr.bf16.mxu0 0
        %1114 = vmatpush2.bf16.msra.mxu0 0
        %1115 = vmatprep.subr.bf16.mxu0 0
        %1116 = vmatpush2.bf16.msra.mxu0 0
        %1117 = vmatprep.subr.bf16.mxu0 0
        %1118 = vmatpush2.bf16.msra.mxu0 0
        %1119 = vmatprep.subr.bf16.mxu0 0
        %1120 = vmatpush2.bf16.msra.mxu0 0
        %1121 = vmatprep.subr.bf16.mxu0 0
        %1122 = vmatpush2.bf16.msra.mxu0 0
        %1123 = vmatprep.subr.bf16.mxu0 0
        %1124 = vmatpush2.bf16.msra.mxu0 0
        %1125 = vmatprep.mubr.bf16.mxu0 0
        %1126 = vmatmul.mubr.bf16.gmra.mxu0 %v1013
        %v1127 = vpop.f32.mrf.mxu0
        %v1128 = vadd.f32 %v823, %v1127
        %v1129 = vpop.f32.mrf.mxu0
        %v1130 = vpop.f32.mrf.mxu0
        %v1131 = vadd.f32 %v826, %v1130
        %v1132 = vpop.f32.mrf.mxu0
        %1133 = vmatprep.mubr.bf16.mxu0 0
        %1134 = vmatmul.mubr.bf16.gmra.mxu0 %v1014
        %v1135 = vpop.f32.mrf.mxu0
        %v1136 = vadd.f32 %v831, %v1135
        %v1137 = vpop.f32.mrf.mxu0
        %v1138 = vpop.f32.mrf.mxu0
        %v1139 = vadd.f32 %v834, %v1138
        %v1140 = vpop.f32.mrf.mxu0
        %1141 = vmatprep.mubr.bf16.mxu0 0
        %1142 = vmatmul.mubr.bf16.gmra.mxu0 %v1015
        %v1143 = vpop.f32.mrf.mxu0
        %v1144 = vadd.f32 %v839, %v1143
        %v1145 = vpop.f32.mrf.mxu0
        %v1146 = vpop.f32.mrf.mxu0
        %v1147 = vadd.f32 %v842, %v1146
        %v1148 = vpop.f32.mrf.mxu0
        %1149 = vmatprep.mubr.bf16.mxu0 0
        %1150 = vmatmul.mubr.bf16.gmra.mxu0 %v1016
        %v1151 = vpop.f32.mrf.mxu0
        %v1152 = vadd.f32 %v847, %v1151
        %v1153 = vpop.f32.mrf.mxu0
        %v1154 = vpop.f32.mrf.mxu0
        %v1155 = vadd.f32 %v850, %v1154
        %v1156 = vpop.f32.mrf.mxu0
        %1157 = vmatprep.mubr.bf16.mxu0 0
        %1158 = vmatmul.mubr.bf16.gmra.mxu0 %v1017
        %v1159 = vpop.f32.mrf.mxu0
        %v1160 = vadd.f32 %v855, %v1159
        %v1161 = vpop.f32.mrf.mxu0
        %v1162 = vpop.f32.mrf.mxu0
        %v1163 = vadd.f32 %v858, %v1162
        %v1164 = vpop.f32.mrf.mxu0
        %1165 = vmatprep.mubr.bf16.mxu0 0
        %1166 = vmatmul.mubr.bf16.gmra.mxu0 %v1018
        %v1167 = vpop.f32.mrf.mxu0
        %v1168 = vadd.f32 %v863, %v1167
        %v1169 = vpop.f32.mrf.mxu0
        %v1170 = vpop.f32.mrf.mxu0
        %v1171 = vadd.f32 %v866, %v1170
        %v1172 = vpop.f32.mrf.mxu0
        %1173 = vmatprep.mubr.bf16.mxu0 0
        %1174 = vmatmul.mubr.bf16.gmra.mxu0 %v1019
        %v1175 = vpop.f32.mrf.mxu0
        %v1176 = vadd.f32 %v871, %v1175
        %v1177 = vpop.f32.mrf.mxu0
        %v1178 = vpop.f32.mrf.mxu0
        %v1179 = vadd.f32 %v874, %v1178
        %v1180 = vpop.f32.mrf.mxu0
        %1181 = vmatprep.mubr.bf16.mxu0 0
        %1182 = vmatmul.mubr.bf16.gmra.mxu0 %v1020
        %v1183 = vpop.f32.mrf.mxu0
        %v1184 = vadd.f32 %v879, %v1183
        %v1185 = vpop.f32.mrf.mxu0
        %v1186 = vpop.f32.mrf.mxu0
        %v1187 = vadd.f32 %v882, %v1186
        %v1188 = vpop.f32.mrf.mxu0
        %1189 = vmatprep.mubr.bf16.mxu0 0
        %1190 = vmatmul.mubr.bf16.gmra.mxu0 %v1021
        %v1191 = vpop.f32.mrf.mxu0
        %v1192 = vadd.f32 %v887, %v1191
        %v1193 = vpop.f32.mrf.mxu0
        %v1194 = vpop.f32.mrf.mxu0
        %v1195 = vadd.f32 %v890, %v1194
        %v1196 = vpop.f32.mrf.mxu0
        %1197 = vmatprep.mubr.bf16.mxu0 0
        %1198 = vmatmul.mubr.bf16.gmra.mxu0 %v1022
        %v1199 = vpop.f32.mrf.mxu0
        %v1200 = vadd.f32 %v895, %v1199
        %v1201 = vpop.f32.mrf.mxu0
        %v1202 = vpop.f32.mrf.mxu0
        %v1203 = vadd.f32 %v898, %v1202
        %v1204 = vpop.f32.mrf.mxu0
        %1205 = vmatprep.mubr.bf16.mxu0 0
        %1206 = vmatmul.mubr.bf16.gmra.mxu0 %v1023
        %v1207 = vpop.f32.mrf.mxu0
        %v1208 = vadd.f32 %v903, %v1207
        %v1209 = vpop.f32.mrf.mxu0
        %v1210 = vpop.f32.mrf.mxu0
        %v1211 = vadd.f32 %v906, %v1210
        %v1212 = vpop.f32.mrf.mxu0
        %1213 = vmatprep.mubr.bf16.mxu0 0
        %1214 = vmatmul.mubr.bf16.gmra.mxu0 %v1024
        %v1215 = vpop.f32.mrf.mxu0
        %v1216 = vadd.f32 %v911, %v1215
        %v1217 = vpop.f32.mrf.mxu0
        %v1218 = vpop.f32.mrf.mxu0
        %v1219 = vadd.f32 %v914, %v1218
        %v1220 = vpop.f32.mrf.mxu0
        %1221 = vmatprep.mubr.bf16.mxu0 0
        %1222 = vmatmul.mubr.bf16.gmra.mxu0 %v1025
        %v1223 = vpop.f32.mrf.mxu0
        %v1224 = vadd.f32 %v919, %v1223
        %v1225 = vpop.f32.mrf.mxu0
        %v1226 = vpop.f32.mrf.mxu0
        %v1227 = vadd.f32 %v922, %v1226
        %v1228 = vpop.f32.mrf.mxu0
        %1229 = vmatprep.mubr.bf16.mxu0 0
        %1230 = vmatmul.mubr.bf16.gmra.mxu0 %v1026
        %v1231 = vpop.f32.mrf.mxu0
        %v1232 = vadd.f32 %v927, %v1231
        %v1233 = vpop.f32.mrf.mxu0
        %v1234 = vpop.f32.mrf.mxu0
        %v1235 = vadd.f32 %v930, %v1234
        %v1236 = vpop.f32.mrf.mxu0
        %1237 = vmatprep.mubr.bf16.mxu0 0
        %1238 = vmatmul.mubr.bf16.gmra.mxu0 %v1027
        %v1239 = vpop.f32.mrf.mxu0
        %v1240 = vadd.f32 %v935, %v1239
        %v1241 = vpop.f32.mrf.mxu0
        %v1242 = vpop.f32.mrf.mxu0
        %v1243 = vadd.f32 %v938, %v1242
        %v1244 = vpop.f32.mrf.mxu0
        %1245 = vmatprep.mubr.bf16.mxu0 0
        %1246 = vmatmul.mubr.bf16.gmra.mxu0 %v1028
        %v1247 = vpop.f32.mrf.mxu0
        %v1248 = vadd.f32 %v943, %v1247
        %v1249 = vpop.f32.mrf.mxu0
        %v1250 = vpop.f32.mrf.mxu0
        %v1251 = vadd.f32 %v946, %v1250
        %v1252 = vpop.f32.mrf.mxu0
        %1253 = vdwg.mxu0
        %v1254 = vld [vmem:[%s206] sm:$0xe]
        %v1255 = vld [vmem:[%s206 + $0xc] sm:$0xe]
        %v1256 = vld [vmem:[%s206 + $0x18] sm:$0xe]
        %v1257 = vld [vmem:[%s206 + $0x24] sm:$0xe]
        %v1258 = vld [vmem:[%s206 + $0x30] sm:$0xe]
        %v1259 = vld [vmem:[%s206 + $0x3c] sm:$0xe]
        %v1260 = vld [vmem:[%s206 + $0x48] sm:$0xe]
        %v1261 = vld [vmem:[%s206 + $0x54] sm:$0xe]
        %v1262 = vld [vmem:[%s206 + $0x60] sm:$0xe]
        %v1263 = vld [vmem:[%s206 + $0x6c] sm:$0xe]
        %v1264 = vld [vmem:[%s206 + $0x78] sm:$0xe]
        %v1265 = vld [vmem:[%s206 + $0x84] sm:$0xe]
        %v1266 = vld [vmem:[%s206 + $0x90] sm:$0xe]
        %v1267 = vld [vmem:[%s206 + $0x9c] sm:$0xe]
        %v1268 = vld [vmem:[%s206 + $0xa8] sm:$0xe]
        %v1269 = vld [vmem:[%s206 + $0xb4] sm:$0xe]
        %vm1302 = vcmask 1042432
        %vm1303 = vcmask 1046532
        %vm1304 = vmor %vm1302, %vm1303
        %v1305 = vrot.slane %v1254, 5
        %v1306 = vrot.slane %v1305, 4
        %v1307 = vrot.slane %v209, 5
        %v1308 = vsel %vm1304, %v1306, %v1307
        %v1309 = vrot.slane %v1307, 4
        %v1310 = vrot.slane %v256, 5
        %v1311 = vsel %vm1304, %v1309, %v1310
        %v1312 = vrot.slane %v1255, 5
        %v1313 = vrot.slane %v1312, 4
        %v1314 = vrot.slane %v211, 5
        %v1315 = vsel %vm1304, %v1313, %v1314
        %v1316 = vrot.slane %v1314, 4
        %v1317 = vrot.slane %v257, 5
        %v1318 = vsel %vm1304, %v1316, %v1317
        %v1319 = vrot.slane %v1256, 5
        %v1320 = vrot.slane %v1319, 4
        %v1321 = vrot.slane %v213, 5
        %v1322 = vsel %vm1304, %v1320, %v1321
        %v1323 = vrot.slane %v1321, 4
        %v1324 = vrot.slane %v258, 5
        %v1325 = vsel %vm1304, %v1323, %v1324
        %v1326 = vrot.slane %v1257, 5
        %v1327 = vrot.slane %v1326, 4
        %v1328 = vrot.slane %v215, 5
        %v1329 = vsel %vm1304, %v1327, %v1328
        %v1330 = vrot.slane %v1328, 4
        %v1331 = vrot.slane %v259, 5
        %v1332 = vsel %vm1304, %v1330, %v1331
        %v1333 = vrot.slane %v1258, 5
        %v1334 = vrot.slane %v1333, 4
        %v1335 = vrot.slane %v217, 5
        %v1336 = vsel %vm1304, %v1334, %v1335
        %v1337 = vrot.slane %v1335, 4
        %v1338 = vrot.slane %v260, 5
        %v1339 = vsel %vm1304, %v1337, %v1338
        %v1340 = vrot.slane %v1259, 5
        %v1341 = vrot.slane %v1340, 4
        %v1342 = vrot.slane %v219, 5
        %v1343 = vsel %vm1304, %v1341, %v1342
        %v1344 = vrot.slane %v1342, 4
        %v1345 = vrot.slane %v261, 5
        %v1346 = vsel %vm1304, %v1344, %v1345
        %v1347 = vrot.slane %v1260, 5
        %v1348 = vrot.slane %v1347, 4
        %v1349 = vrot.slane %v221, 5
        %v1350 = vsel %vm1304, %v1348, %v1349
        %v1351 = vrot.slane %v1349, 4
        %v1352 = vrot.slane %v262, 5
        %v1353 = vsel %vm1304, %v1351, %v1352
        %v1354 = vrot.slane %v1261, 5
        %v1355 = vrot.slane %v1354, 4
        %v1356 = vrot.slane %v223, 5
        %v1357 = vsel %vm1304, %v1355, %v1356
        %v1358 = vrot.slane %v1356, 4
        %v1359 = vrot.slane %v263, 5
        %v1360 = vsel %vm1304, %v1358, %v1359
        %v1361 = vrot.slane %v1262, 5
        %v1362 = vrot.slane %v1361, 4
        %v1363 = vrot.slane %v225, 5
        %v1364 = vsel %vm1304, %v1362, %v1363
        %v1365 = vrot.slane %v1363, 4
        %v1366 = vrot.slane %v264, 5
        %v1367 = vsel %vm1304, %v1365, %v1366
        %v1368 = vrot.slane %v1263, 5
        %v1369 = vrot.slane %v1368, 4
        %v1370 = vrot.slane %v227, 5
        %v1371 = vsel %vm1304, %v1369, %v1370
        %v1372 = vrot.slane %v1370, 4
        %v1373 = vrot.slane %v265, 5
        %v1374 = vsel %vm1304, %v1372, %v1373
        %v1375 = vrot.slane %v1264, 5
        %v1376 = vrot.slane %v1375, 4
        %v1377 = vrot.slane %v229, 5
        %v1378 = vsel %vm1304, %v1376, %v1377
        %v1379 = vrot.slane %v1377, 4
        %v1380 = vrot.slane %v266, 5
        %v1381 = vsel %vm1304, %v1379, %v1380
        %v1382 = vrot.slane %v1265, 5
        %v1383 = vrot.slane %v1382, 4
        %v1384 = vrot.slane %v231, 5
        %v1385 = vsel %vm1304, %v1383, %v1384
        %v1386 = vrot.slane %v1384, 4
        %v1387 = vrot.slane %v267, 5
        %v1388 = vsel %vm1304, %v1386, %v1387
        %v1389 = vrot.slane %v1266, 5
        %v1390 = vrot.slane %v1389, 4
        %v1391 = vrot.slane %v233, 5
        %v1392 = vsel %vm1304, %v1390, %v1391
        %v1393 = vrot.slane %v1391, 4
        %v1394 = vrot.slane %v268, 5
        %v1395 = vsel %vm1304, %v1393, %v1394
        %v1396 = vrot.slane %v1267, 5
        %v1397 = vrot.slane %v1396, 4
        %v1398 = vrot.slane %v235, 5
        %v1399 = vsel %vm1304, %v1397, %v1398
        %v1400 = vrot.slane %v1398, 4
        %v1401 = vrot.slane %v269, 5
        %v1402 = vsel %vm1304, %v1400, %v1401
        %v1403 = vrot.slane %v1268, 5
        %v1404 = vrot.slane %v1403, 4
        %v1405 = vrot.slane %v237, 5
        %v1406 = vsel %vm1304, %v1404, %v1405
        %v1407 = vrot.slane %v1405, 4
        %v1408 = vrot.slane %v270, 5
        %v1409 = vsel %vm1304, %v1407, %v1408
        %v1410 = vrot.slane %v1269, 5
        %v1411 = vrot.slane %v1410, 4
        %v1412 = vrot.slane %v239, 5
        %v1413 = vsel %vm1304, %v1411, %v1412
        %v1414 = vrot.slane %v1412, 4
        %v1415 = vrot.slane %v271, 5
        %v1416 = vsel %vm1304, %v1414, %v1415
        %s1417 = scalar_lea.vmem %s1, 128
        %v1418 = vld [vmem:[%s1417] sm:$0xf]
        %v1419 = vld [vmem:[%s1417 + $0x4] sm:$0xf]
        %v1420 = vld [vmem:[%s1417 + $0x8] sm:$0xf]
        %v1421 = vld [vmem:[%s1417 + $0xc] sm:$0xf]
        %v1422 = vld [vmem:[%s1417 + $0x10] sm:$0xf]
        %v1423 = vld [vmem:[%s1417 + $0x14] sm:$0xf]
        %v1424 = vld [vmem:[%s1417 + $0x18] sm:$0xf]
        %v1425 = vld [vmem:[%s1417 + $0x1c] sm:$0xf]
        %v1426 = vld [vmem:[%s1417 + $0x20] sm:$0xf]
        %v1427 = vld [vmem:[%s1417 + $0x24] sm:$0xf]
        %v1428 = vld [vmem:[%s1417 + $0x28] sm:$0xf]
        %v1429 = vld [vmem:[%s1417 + $0x2c] sm:$0xf]
        %v1430 = vld [vmem:[%s1417 + $0x30] sm:$0xf]
        %v1431 = vld [vmem:[%s1417 + $0x34] sm:$0xf]
        %v1432 = vld [vmem:[%s1417 + $0x38] sm:$0xf]
        %v1433 = vld [vmem:[%s1417 + $0x3c] sm:$0xf]
        %v1434 = vunpack.c.l.b16 %v1308
        %v1435 = vunpack.c.l.b16 %v1311
        %v1436 = vunpack.c.l.b16 %v1315
        %v1437 = vunpack.c.l.b16 %v1318
        %v1438 = vunpack.c.l.b16 %v1322
        %v1439 = vunpack.c.l.b16 %v1325
        %v1440 = vunpack.c.l.b16 %v1329
        %v1441 = vunpack.c.l.b16 %v1332
        %v1442 = vunpack.c.l.b16 %v1336
        %v1443 = vunpack.c.l.b16 %v1339
        %v1444 = vunpack.c.l.b16 %v1343
        %v1445 = vunpack.c.l.b16 %v1346
        %v1446 = vunpack.c.l.b16 %v1350
        %v1447 = vunpack.c.l.b16 %v1353
        %v1448 = vunpack.c.l.b16 %v1357
        %v1449 = vunpack.c.l.b16 %v1360
        %v1450 = vunpack.c.l.b16 %v1364
        %v1451 = vunpack.c.l.b16 %v1367
        %v1452 = vunpack.c.l.b16 %v1371
        %v1453 = vunpack.c.l.b16 %v1374
        %v1454 = vunpack.c.l.b16 %v1378
        %v1455 = vunpack.c.l.b16 %v1381
        %v1456 = vunpack.c.l.b16 %v1385
        %v1457 = vunpack.c.l.b16 %v1388
        %v1458 = vunpack.c.l.b16 %v1392
        %v1459 = vunpack.c.l.b16 %v1395
        %v1460 = vunpack.c.l.b16 %v1399
        %v1461 = vunpack.c.l.b16 %v1402
        %v1462 = vunpack.c.l.b16 %v1406
        %v1463 = vunpack.c.l.b16 %v1409
        %v1464 = vunpack.c.l.b16 %v1413
        %v1465 = vunpack.c.l.b16 %v1416
        %v1466 = vpack.c.b16 %v1435, %v1434
        %v1467 = vpack.c.b16 %v1437, %v1436
        %v1468 = vpack.c.b16 %v1439, %v1438
        %v1469 = vpack.c.b16 %v1441, %v1440
        %v1470 = vpack.c.b16 %v1443, %v1442
        %v1471 = vpack.c.b16 %v1445, %v1444
        %v1472 = vpack.c.b16 %v1447, %v1446
        %v1473 = vpack.c.b16 %v1449, %v1448
        %v1474 = vpack.c.b16 %v1451, %v1450
        %v1475 = vpack.c.b16 %v1453, %v1452
        %v1476 = vpack.c.b16 %v1455, %v1454
        %v1477 = vpack.c.b16 %v1457, %v1456
        %v1478 = vpack.c.b16 %v1459, %v1458
        %v1479 = vpack.c.b16 %v1461, %v1460
        %v1480 = vpack.c.b16 %v1463, %v1462
        %v1481 = vpack.c.b16 %v1465, %v1464
        %v1514 = vunpack.c.l.b16 %v1418
        %v1515 = vunpack.c.l.b16 %v1419
        %v1516 = vunpack.c.l.b16 %v1420
        %v1517 = vunpack.c.l.b16 %v1421
        %v1518 = vunpack.c.l.b16 %v1422
        %v1519 = vunpack.c.l.b16 %v1423
        %v1520 = vunpack.c.l.b16 %v1424
        %v1521 = vunpack.c.l.b16 %v1425
        %v1522 = vunpack.c.l.b16 %v1426
        %v1523 = vunpack.c.l.b16 %v1427
        %v1524 = vunpack.c.l.b16 %v1428
        %v1525 = vunpack.c.l.b16 %v1429
        %v1526 = vunpack.c.l.b16 %v1430
        %v1527 = vunpack.c.l.b16 %v1431
        %v1528 = vunpack.c.l.b16 %v1432
        %v1529 = vunpack.c.l.b16 %v1433
        %v1530 = vpack.c.b16 %v1515, %v1514
        %v1531 = vpack.c.b16 %v1517, %v1516
        %v1532 = vpack.c.b16 %v1519, %v1518
        %v1533 = vpack.c.b16 %v1521, %v1520
        %v1534 = vpack.c.b16 %v1523, %v1522
        %v1535 = vpack.c.b16 %v1525, %v1524
        %v1536 = vpack.c.b16 %v1527, %v1526
        %v1537 = vpack.c.b16 %v1529, %v1528
        %1546 = vmatprep.subr.bf16.mxu0 0
        %1547 = vmatpush1.bf16.msra.mxu0 %v1537
        %1548 = vmatprep.subr.bf16.mxu0 0
        %1549 = vmatpush1.bf16.msra.mxu0 %v1536
        %1550 = vmatprep.subr.bf16.mxu0 0
        %1551 = vmatpush1.bf16.msra.mxu0 %v1535
        %1552 = vmatprep.subr.bf16.mxu0 0
        %1553 = vmatpush1.bf16.msra.mxu0 %v1534
        %1554 = vmatprep.subr.bf16.mxu0 0
        %1555 = vmatpush1.bf16.msra.mxu0 %v1533
        %1556 = vmatprep.subr.bf16.mxu0 0
        %1557 = vmatpush1.bf16.msra.mxu0 %v1532
        %1558 = vmatprep.subr.bf16.mxu0 0
        %1559 = vmatpush1.bf16.msra.mxu0 %v1531
        %1560 = vmatprep.subr.bf16.mxu0 0
        %1561 = vmatpush1.bf16.msra.mxu0 %v1530
        %1562 = vmatprep.subr.bf16.mxu0 0
        %1563 = vmatpush2.bf16.msra.mxu0 0
        %1564 = vmatprep.subr.bf16.mxu0 0
        %1565 = vmatpush2.bf16.msra.mxu0 0
        %1566 = vmatprep.subr.bf16.mxu0 0
        %1567 = vmatpush2.bf16.msra.mxu0 0
        %1568 = vmatprep.subr.bf16.mxu0 0
        %1569 = vmatpush2.bf16.msra.mxu0 0
        %1570 = vmatprep.subr.bf16.mxu0 0
        %1571 = vmatpush2.bf16.msra.mxu0 0
        %1572 = vmatprep.subr.bf16.mxu0 0
        %1573 = vmatpush2.bf16.msra.mxu0 0
        %1574 = vmatprep.subr.bf16.mxu0 0
        %1575 = vmatpush2.bf16.msra.mxu0 0
        %1576 = vmatprep.subr.bf16.mxu0 0
        %1577 = vmatpush2.bf16.msra.mxu0 0
        %1578 = vmatprep.mubr.bf16.mxu0 0
        %1579 = vmatmul.mubr.bf16.gmra.mxu0 %v1466
        %v1580 = vpop.f32.mrf.mxu0
        %v1581 = vadd.f32 0.0, %v1580
        %v1582 = vpop.f32.mrf.mxu0
        %v1583 = vpop.f32.mrf.mxu0
        %v1584 = vadd.f32 0.0, %v1583
        %v1585 = vpop.f32.mrf.mxu0
        %1586 = vmatprep.mubr.bf16.mxu0 0
        %1587 = vmatmul.mubr.bf16.gmra.mxu0 %v1467
        %v1588 = vpop.f32.mrf.mxu0
        %v1589 = vadd.f32 0.0, %v1588
        %v1590 = vpop.f32.mrf.mxu0
        %v1591 = vpop.f32.mrf.mxu0
        %v1592 = vadd.f32 0.0, %v1591
        %v1593 = vpop.f32.mrf.mxu0
        %1594 = vmatprep.mubr.bf16.mxu0 0
        %1595 = vmatmul.mubr.bf16.gmra.mxu0 %v1468
        %v1596 = vpop.f32.mrf.mxu0
        %v1597 = vadd.f32 0.0, %v1596
        %v1598 = vpop.f32.mrf.mxu0
        %v1599 = vpop.f32.mrf.mxu0
        %v1600 = vadd.f32 0.0, %v1599
        %v1601 = vpop.f32.mrf.mxu0
        %1602 = vmatprep.mubr.bf16.mxu0 0
        %1603 = vmatmul.mubr.bf16.gmra.mxu0 %v1469
        %v1604 = vpop.f32.mrf.mxu0
        %v1605 = vadd.f32 0.0, %v1604
        %v1606 = vpop.f32.mrf.mxu0
        %v1607 = vpop.f32.mrf.mxu0
        %v1608 = vadd.f32 0.0, %v1607
        %v1609 = vpop.f32.mrf.mxu0
        %1610 = vmatprep.mubr.bf16.mxu0 0
        %1611 = vmatmul.mubr.bf16.gmra.mxu0 %v1470
        %v1612 = vpop.f32.mrf.mxu0
        %v1613 = vadd.f32 0.0, %v1612
        %v1614 = vpop.f32.mrf.mxu0
        %v1615 = vpop.f32.mrf.mxu0
        %v1616 = vadd.f32 0.0, %v1615
        %v1617 = vpop.f32.mrf.mxu0
        %1618 = vmatprep.mubr.bf16.mxu0 0
        %1619 = vmatmul.mubr.bf16.gmra.mxu0 %v1471
        %v1620 = vpop.f32.mrf.mxu0
        %v1621 = vadd.f32 0.0, %v1620
        %v1622 = vpop.f32.mrf.mxu0
        %v1623 = vpop.f32.mrf.mxu0
        %v1624 = vadd.f32 0.0, %v1623
        %v1625 = vpop.f32.mrf.mxu0
        %1626 = vmatprep.mubr.bf16.mxu0 0
        %1627 = vmatmul.mubr.bf16.gmra.mxu0 %v1472
        %v1628 = vpop.f32.mrf.mxu0
        %v1629 = vadd.f32 0.0, %v1628
        %v1630 = vpop.f32.mrf.mxu0
        %v1631 = vpop.f32.mrf.mxu0
        %v1632 = vadd.f32 0.0, %v1631
        %v1633 = vpop.f32.mrf.mxu0
        %1634 = vmatprep.mubr.bf16.mxu0 0
        %1635 = vmatmul.mubr.bf16.gmra.mxu0 %v1473
        %v1636 = vpop.f32.mrf.mxu0
        %v1637 = vadd.f32 0.0, %v1636
        %v1638 = vpop.f32.mrf.mxu0
        %v1639 = vpop.f32.mrf.mxu0
        %v1640 = vadd.f32 0.0, %v1639
        %v1641 = vpop.f32.mrf.mxu0
        %1642 = vmatprep.mubr.bf16.mxu0 0
        %1643 = vmatmul.mubr.bf16.gmra.mxu0 %v1474
        %v1644 = vpop.f32.mrf.mxu0
        %v1645 = vadd.f32 0.0, %v1644
        %v1646 = vpop.f32.mrf.mxu0
        %v1647 = vpop.f32.mrf.mxu0
        %v1648 = vadd.f32 0.0, %v1647
        %v1649 = vpop.f32.mrf.mxu0
        %1650 = vmatprep.mubr.bf16.mxu0 0
        %1651 = vmatmul.mubr.bf16.gmra.mxu0 %v1475
        %v1652 = vpop.f32.mrf.mxu0
        %v1653 = vadd.f32 0.0, %v1652
        %v1654 = vpop.f32.mrf.mxu0
        %v1655 = vpop.f32.mrf.mxu0
        %v1656 = vadd.f32 0.0, %v1655
        %v1657 = vpop.f32.mrf.mxu0
        %1658 = vmatprep.mubr.bf16.mxu0 0
        %1659 = vmatmul.mubr.bf16.gmra.mxu0 %v1476
        %v1660 = vpop.f32.mrf.mxu0
        %v1661 = vadd.f32 0.0, %v1660
        %v1662 = vpop.f32.mrf.mxu0
        %v1663 = vpop.f32.mrf.mxu0
        %v1664 = vadd.f32 0.0, %v1663
        %v1665 = vpop.f32.mrf.mxu0
        %1666 = vmatprep.mubr.bf16.mxu0 0
        %1667 = vmatmul.mubr.bf16.gmra.mxu0 %v1477
        %v1668 = vpop.f32.mrf.mxu0
        %v1669 = vadd.f32 0.0, %v1668
        %v1670 = vpop.f32.mrf.mxu0
        %v1671 = vpop.f32.mrf.mxu0
        %v1672 = vadd.f32 0.0, %v1671
        %v1673 = vpop.f32.mrf.mxu0
        %1674 = vmatprep.mubr.bf16.mxu0 0
        %1675 = vmatmul.mubr.bf16.gmra.mxu0 %v1478
        %v1676 = vpop.f32.mrf.mxu0
        %v1677 = vadd.f32 0.0, %v1676
        %v1678 = vpop.f32.mrf.mxu0
        %v1679 = vpop.f32.mrf.mxu0
        %v1680 = vadd.f32 0.0, %v1679
        %v1681 = vpop.f32.mrf.mxu0
        %1682 = vmatprep.mubr.bf16.mxu0 0
        %1683 = vmatmul.mubr.bf16.gmra.mxu0 %v1479
        %v1684 = vpop.f32.mrf.mxu0
        %v1685 = vadd.f32 0.0, %v1684
        %v1686 = vpop.f32.mrf.mxu0
        %v1687 = vpop.f32.mrf.mxu0
        %v1688 = vadd.f32 0.0, %v1687
        %v1689 = vpop.f32.mrf.mxu0
        %1690 = vmatprep.mubr.bf16.mxu0 0
        %1691 = vmatmul.mubr.bf16.gmra.mxu0 %v1480
        %v1692 = vpop.f32.mrf.mxu0
        %v1693 = vadd.f32 0.0, %v1692
        %v1694 = vpop.f32.mrf.mxu0
        %v1695 = vpop.f32.mrf.mxu0
        %v1696 = vadd.f32 0.0, %v1695
        %v1697 = vpop.f32.mrf.mxu0
        %1698 = vmatprep.mubr.bf16.mxu0 0
        %1699 = vmatmul.mubr.bf16.gmra.mxu0 %v1481
        %v1700 = vpop.f32.mrf.mxu0
        %v1701 = vadd.f32 0.0, %v1700
        %v1702 = vpop.f32.mrf.mxu0
        %v1703 = vpop.f32.mrf.mxu0
        %v1704 = vadd.f32 0.0, %v1703
        %v1705 = vpop.f32.mrf.mxu0
        %1706 = vdwg.mxu0
        %v1707 = vadd.f32 %v1128, %v1581
        %v1708 = vadd.f32 %v1131, %v1584
        %v1709 = vadd.f32 %v1136, %v1589
        %v1710 = vadd.f32 %v1139, %v1592
        %v1711 = vadd.f32 %v1144, %v1597
        %v1712 = vadd.f32 %v1147, %v1600
        %v1713 = vadd.f32 %v1152, %v1605
        %v1714 = vadd.f32 %v1155, %v1608
        %v1715 = vadd.f32 %v1160, %v1613
        %v1716 = vadd.f32 %v1163, %v1616
        %v1717 = vadd.f32 %v1168, %v1621
        %v1718 = vadd.f32 %v1171, %v1624
        %v1719 = vadd.f32 %v1176, %v1629
        %v1720 = vadd.f32 %v1179, %v1632
        %v1721 = vadd.f32 %v1184, %v1637
        %v1722 = vadd.f32 %v1187, %v1640
        %v1723 = vadd.f32 %v1192, %v1645
        %v1724 = vadd.f32 %v1195, %v1648
        %v1725 = vadd.f32 %v1200, %v1653
        %v1726 = vadd.f32 %v1203, %v1656
        %v1727 = vadd.f32 %v1208, %v1661
        %v1728 = vadd.f32 %v1211, %v1664
        %v1729 = vadd.f32 %v1216, %v1669
        %v1730 = vadd.f32 %v1219, %v1672
        %v1731 = vadd.f32 %v1224, %v1677
        %v1732 = vadd.f32 %v1227, %v1680
        %v1733 = vadd.f32 %v1232, %v1685
        %v1734 = vadd.f32 %v1235, %v1688
        %v1735 = vadd.f32 %v1240, %v1693
        %v1736 = vadd.f32 %v1243, %v1696
        %v1737 = vadd.f32 %v1248, %v1701
        %v1738 = vadd.f32 %v1251, %v1704
        %s1739 = scalar_lea.vmem %s206, 12
        %v1740 = vld [vmem:[%s1739] sm:$0xf]
        %v1741 = vld [vmem:[%s1739 + $0x4] sm:$0xf]
        %v1742 = vld [vmem:[%s1739 + $0xc] sm:$0xf]
        %v1743 = vld [vmem:[%s1739 + $0x10] sm:$0xf]
        %v1744 = vld [vmem:[%s1739 + $0x18] sm:$0xf]
        %v1745 = vld [vmem:[%s1739 + $0x1c] sm:$0xf]
        %v1746 = vld [vmem:[%s1739 + $0x24] sm:$0xf]
        %v1747 = vld [vmem:[%s1739 + $0x28] sm:$0xf]
        %v1748 = vld [vmem:[%s1739 + $0x30] sm:$0xf]
        %v1749 = vld [vmem:[%s1739 + $0x34] sm:$0xf]
        %v1750 = vld [vmem:[%s1739 + $0x3c] sm:$0xf]
        %v1751 = vld [vmem:[%s1739 + $0x40] sm:$0xf]
        %v1752 = vld [vmem:[%s1739 + $0x48] sm:$0xf]
        %v1753 = vld [vmem:[%s1739 + $0x4c] sm:$0xf]
        %v1754 = vld [vmem:[%s1739 + $0x54] sm:$0xf]
        %v1755 = vld [vmem:[%s1739 + $0x58] sm:$0xf]
        %v1756 = vld [vmem:[%s1739 + $0x60] sm:$0xf]
        %v1757 = vld [vmem:[%s1739 + $0x64] sm:$0xf]
        %v1758 = vld [vmem:[%s1739 + $0x6c] sm:$0xf]
        %v1759 = vld [vmem:[%s1739 + $0x70] sm:$0xf]
        %v1760 = vld [vmem:[%s1739 + $0x78] sm:$0xf]
        %v1761 = vld [vmem:[%s1739 + $0x7c] sm:$0xf]
        %v1762 = vld [vmem:[%s1739 + $0x84] sm:$0xf]
        %v1763 = vld [vmem:[%s1739 + $0x88] sm:$0xf]
        %v1764 = vld [vmem:[%s1739 + $0x90] sm:$0xf]
        %v1765 = vld [vmem:[%s1739 + $0x94] sm:$0xf]
        %v1766 = vld [vmem:[%s1739 + $0x9c] sm:$0xf]
        %v1767 = vld [vmem:[%s1739 + $0xa0] sm:$0xf]
        %v1768 = vld [vmem:[%s1739 + $0xa8] sm:$0xf]
        %v1769 = vld [vmem:[%s1739 + $0xac] sm:$0xf]
        %v1770 = vld [vmem:[%s1739 + $0xb4] sm:$0xf]
        %v1771 = vld [vmem:[%s1739 + $0xb8] sm:$0xf]
        %s1772 = scalar_lea.vmem %s1, 192
        %v1773 = vld [vmem:[%s1772] sm:$0xf]
        %v1774 = vld [vmem:[%s1772 + $0x4] sm:$0xf]
        %v1775 = vld [vmem:[%s1772 + $0x8] sm:$0xf]
        %v1776 = vld [vmem:[%s1772 + $0xc] sm:$0xf]
        %v1777 = vld [vmem:[%s1772 + $0x10] sm:$0xf]
        %v1778 = vld [vmem:[%s1772 + $0x14] sm:$0xf]
        %v1779 = vld [vmem:[%s1772 + $0x18] sm:$0xf]
        %v1780 = vld [vmem:[%s1772 + $0x1c] sm:$0xf]
        %v1781 = vld [vmem:[%s1772 + $0x20] sm:$0xf]
        %v1782 = vld [vmem:[%s1772 + $0x24] sm:$0xf]
        %v1783 = vld [vmem:[%s1772 + $0x28] sm:$0xf]
        %v1784 = vld [vmem:[%s1772 + $0x2c] sm:$0xf]
        %v1785 = vld [vmem:[%s1772 + $0x30] sm:$0xf]
        %v1786 = vld [vmem:[%s1772 + $0x34] sm:$0xf]
        %v1787 = vld [vmem:[%s1772 + $0x38] sm:$0xf]
        %v1788 = vld [vmem:[%s1772 + $0x3c] sm:$0xf]
        %v1821 = vunpack.c.l.b16 %v1740
        %v1822 = vunpack.c.l.b16 %v1741
        %v1823 = vunpack.c.l.b16 %v1742
        %v1824 = vunpack.c.l.b16 %v1743
        %v1825 = vunpack.c.l.b16 %v1744
        %v1826 = vunpack.c.l.b16 %v1745
        %v1827 = vunpack.c.l.b16 %v1746
        %v1828 = vunpack.c.l.b16 %v1747
        %v1829 = vunpack.c.l.b16 %v1748
        %v1830 = vunpack.c.l.b16 %v1749
        %v1831 = vunpack.c.l.b16 %v1750
        %v1832 = vunpack.c.l.b16 %v1751
        %v1833 = vunpack.c.l.b16 %v1752
        %v1834 = vunpack.c.l.b16 %v1753
        %v1835 = vunpack.c.l.b16 %v1754
        %v1836 = vunpack.c.l.b16 %v1755
        %v1837 = vunpack.c.l.b16 %v1756
        %v1838 = vunpack.c.l.b16 %v1757
        %v1839 = vunpack.c.l.b16 %v1758
        %v1840 = vunpack.c.l.b16 %v1759
        %v1841 = vunpack.c.l.b16 %v1760
        %v1842 = vunpack.c.l.b16 %v1761
        %v1843 = vunpack.c.l.b16 %v1762
        %v1844 = vunpack.c.l.b16 %v1763
        %v1845 = vunpack.c.l.b16 %v1764
        %v1846 = vunpack.c.l.b16 %v1765
        %v1847 = vunpack.c.l.b16 %v1766
        %v1848 = vunpack.c.l.b16 %v1767
        %v1849 = vunpack.c.l.b16 %v1768
        %v1850 = vunpack.c.l.b16 %v1769
        %v1851 = vunpack.c.l.b16 %v1770
        %v1852 = vunpack.c.l.b16 %v1771
        %v1853 = vpack.c.b16 %v1822, %v1821
        %v1854 = vpack.c.b16 %v1824, %v1823
        %v1855 = vpack.c.b16 %v1826, %v1825
        %v1856 = vpack.c.b16 %v1828, %v1827
        %v1857 = vpack.c.b16 %v1830, %v1829
        %v1858 = vpack.c.b16 %v1832, %v1831
        %v1859 = vpack.c.b16 %v1834, %v1833
        %v1860 = vpack.c.b16 %v1836, %v1835
        %v1861 = vpack.c.b16 %v1838, %v1837
        %v1862 = vpack.c.b16 %v1840, %v1839
        %v1863 = vpack.c.b16 %v1842, %v1841
        %v1864 = vpack.c.b16 %v1844, %v1843
        %v1865 = vpack.c.b16 %v1846, %v1845
        %v1866 = vpack.c.b16 %v1848, %v1847
        %v1867 = vpack.c.b16 %v1850, %v1849
        %v1868 = vpack.c.b16 %v1852, %v1851
        %v1901 = vunpack.c.l.b16 %v1773
        %v1902 = vunpack.c.l.b16 %v1774
        %v1903 = vunpack.c.l.b16 %v1775
        %v1904 = vunpack.c.l.b16 %v1776
        %v1905 = vunpack.c.l.b16 %v1777
        %v1906 = vunpack.c.l.b16 %v1778
        %v1907 = vunpack.c.l.b16 %v1779
        %v1908 = vunpack.c.l.b16 %v1780
        %v1909 = vunpack.c.l.b16 %v1781
        %v1910 = vunpack.c.l.b16 %v1782
        %v1911 = vunpack.c.l.b16 %v1783
        %v1912 = vunpack.c.l.b16 %v1784
        %v1913 = vunpack.c.l.b16 %v1785
        %v1914 = vunpack.c.l.b16 %v1786
        %v1915 = vunpack.c.l.b16 %v1787
        %v1916 = vunpack.c.l.b16 %v1788
        %v1917 = vpack.c.b16 %v1902, %v1901
        %v1918 = vpack.c.b16 %v1904, %v1903
        %v1919 = vpack.c.b16 %v1906, %v1905
        %v1920 = vpack.c.b16 %v1908, %v1907
        %v1921 = vpack.c.b16 %v1910, %v1909
        %v1922 = vpack.c.b16 %v1912, %v1911
        %v1923 = vpack.c.b16 %v1914, %v1913
        %v1924 = vpack.c.b16 %v1916, %v1915
        %1933 = vmatprep.subr.bf16.mxu0 0
        %1934 = vmatpush1.bf16.msra.mxu0 %v1924
        %1935 = vmatprep.subr.bf16.mxu0 0
        %1936 = vmatpush1.bf16.msra.mxu0 %v1923
        %1937 = vmatprep.subr.bf16.mxu0 0
        %1938 = vmatpush1.bf16.msra.mxu0 %v1922
        %1939 = vmatprep.subr.bf16.mxu0 0
        %1940 = vmatpush1.bf16.msra.mxu0 %v1921
        %1941 = vmatprep.subr.bf16.mxu0 0
        %1942 = vmatpush1.bf16.msra.mxu0 %v1920
        %1943 = vmatprep.subr.bf16.mxu0 0
        %1944 = vmatpush1.bf16.msra.mxu0 %v1919
        %1945 = vmatprep.subr.bf16.mxu0 0
        %1946 = vmatpush1.bf16.msra.mxu0 %v1918
        %1947 = vmatprep.subr.bf16.mxu0 0
        %1948 = vmatpush1.bf16.msra.mxu0 %v1917
        %1949 = vmatprep.subr.bf16.mxu0 0
        %1950 = vmatpush2.bf16.msra.mxu0 0
        %1951 = vmatprep.subr.bf16.mxu0 0
        %1952 = vmatpush2.bf16.msra.mxu0 0
        %1953 = vmatprep.subr.bf16.mxu0 0
        %1954 = vmatpush2.bf16.msra.mxu0 0
        %1955 = vmatprep.subr.bf16.mxu0 0
        %1956 = vmatpush2.bf16.msra.mxu0 0
        %1957 = vmatprep.subr.bf16.mxu0 0
        %1958 = vmatpush2.bf16.msra.mxu0 0
        %1959 = vmatprep.subr.bf16.mxu0 0
        %1960 = vmatpush2.bf16.msra.mxu0 0
        %1961 = vmatprep.subr.bf16.mxu0 0
        %1962 = vmatpush2.bf16.msra.mxu0 0
        %1963 = vmatprep.subr.bf16.mxu0 0
        %1964 = vmatpush2.bf16.msra.mxu0 0
        %1965 = vmatprep.mubr.bf16.mxu0 0
        %1966 = vmatmul.mubr.bf16.gmra.mxu0 %v1853
        %v1967 = vpop.f32.mrf.mxu0
        %v1968 = vadd.f32 0.0, %v1967
        %v1969 = vpop.f32.mrf.mxu0
        %v1970 = vpop.f32.mrf.mxu0
        %v1971 = vadd.f32 0.0, %v1970
        %v1972 = vpop.f32.mrf.mxu0
        %1973 = vmatprep.mubr.bf16.mxu0 0
        %1974 = vmatmul.mubr.bf16.gmra.mxu0 %v1854
        %v1975 = vpop.f32.mrf.mxu0
        %v1976 = vadd.f32 0.0, %v1975
        %v1977 = vpop.f32.mrf.mxu0
        %v1978 = vpop.f32.mrf.mxu0
        %v1979 = vadd.f32 0.0, %v1978
        %v1980 = vpop.f32.mrf.mxu0
        %1981 = vmatprep.mubr.bf16.mxu0 0
        %1982 = vmatmul.mubr.bf16.gmra.mxu0 %v1855
        %v1983 = vpop.f32.mrf.mxu0
        %v1984 = vadd.f32 0.0, %v1983
        %v1985 = vpop.f32.mrf.mxu0
        %v1986 = vpop.f32.mrf.mxu0
        %v1987 = vadd.f32 0.0, %v1986
        %v1988 = vpop.f32.mrf.mxu0
        %1989 = vmatprep.mubr.bf16.mxu0 0
        %1990 = vmatmul.mubr.bf16.gmra.mxu0 %v1856
        %v1991 = vpop.f32.mrf.mxu0
        %v1992 = vadd.f32 0.0, %v1991
        %v1993 = vpop.f32.mrf.mxu0
        %v1994 = vpop.f32.mrf.mxu0
        %v1995 = vadd.f32 0.0, %v1994
        %v1996 = vpop.f32.mrf.mxu0
        %1997 = vmatprep.mubr.bf16.mxu0 0
        %1998 = vmatmul.mubr.bf16.gmra.mxu0 %v1857
        %v1999 = vpop.f32.mrf.mxu0
        %v2000 = vadd.f32 0.0, %v1999
        %v2001 = vpop.f32.mrf.mxu0
        %v2002 = vpop.f32.mrf.mxu0
        %v2003 = vadd.f32 0.0, %v2002
        %v2004 = vpop.f32.mrf.mxu0
        %2005 = vmatprep.mubr.bf16.mxu0 0
        %2006 = vmatmul.mubr.bf16.gmra.mxu0 %v1858
        %v2007 = vpop.f32.mrf.mxu0
        %v2008 = vadd.f32 0.0, %v2007
        %v2009 = vpop.f32.mrf.mxu0
        %v2010 = vpop.f32.mrf.mxu0
        %v2011 = vadd.f32 0.0, %v2010
        %v2012 = vpop.f32.mrf.mxu0
        %2013 = vmatprep.mubr.bf16.mxu0 0
        %2014 = vmatmul.mubr.bf16.gmra.mxu0 %v1859
        %v2015 = vpop.f32.mrf.mxu0
        %v2016 = vadd.f32 0.0, %v2015
        %v2017 = vpop.f32.mrf.mxu0
        %v2018 = vpop.f32.mrf.mxu0
        %v2019 = vadd.f32 0.0, %v2018
        %v2020 = vpop.f32.mrf.mxu0
        %2021 = vmatprep.mubr.bf16.mxu0 0
        %2022 = vmatmul.mubr.bf16.gmra.mxu0 %v1860
        %v2023 = vpop.f32.mrf.mxu0
        %v2024 = vadd.f32 0.0, %v2023
        %v2025 = vpop.f32.mrf.mxu0
        %v2026 = vpop.f32.mrf.mxu0
        %v2027 = vadd.f32 0.0, %v2026
        %v2028 = vpop.f32.mrf.mxu0
        %2029 = vmatprep.mubr.bf16.mxu0 0
        %2030 = vmatmul.mubr.bf16.gmra.mxu0 %v1861
        %v2031 = vpop.f32.mrf.mxu0
        %v2032 = vadd.f32 0.0, %v2031
        %v2033 = vpop.f32.mrf.mxu0
        %v2034 = vpop.f32.mrf.mxu0
        %v2035 = vadd.f32 0.0, %v2034
        %v2036 = vpop.f32.mrf.mxu0
        %2037 = vmatprep.mubr.bf16.mxu0 0
        %2038 = vmatmul.mubr.bf16.gmra.mxu0 %v1862
        %v2039 = vpop.f32.mrf.mxu0
        %v2040 = vadd.f32 0.0, %v2039
        %v2041 = vpop.f32.mrf.mxu0
        %v2042 = vpop.f32.mrf.mxu0
        %v2043 = vadd.f32 0.0, %v2042
        %v2044 = vpop.f32.mrf.mxu0
        %2045 = vmatprep.mubr.bf16.mxu0 0
        %2046 = vmatmul.mubr.bf16.gmra.mxu0 %v1863
        %v2047 = vpop.f32.mrf.mxu0
        %v2048 = vadd.f32 0.0, %v2047
        %v2049 = vpop.f32.mrf.mxu0
        %v2050 = vpop.f32.mrf.mxu0
        %v2051 = vadd.f32 0.0, %v2050
        %v2052 = vpop.f32.mrf.mxu0
        %2053 = vmatprep.mubr.bf16.mxu0 0
        %2054 = vmatmul.mubr.bf16.gmra.mxu0 %v1864
        %v2055 = vpop.f32.mrf.mxu0
        %v2056 = vadd.f32 0.0, %v2055
        %v2057 = vpop.f32.mrf.mxu0
        %v2058 = vpop.f32.mrf.mxu0
        %v2059 = vadd.f32 0.0, %v2058
        %v2060 = vpop.f32.mrf.mxu0
        %2061 = vmatprep.mubr.bf16.mxu0 0
        %2062 = vmatmul.mubr.bf16.gmra.mxu0 %v1865
        %v2063 = vpop.f32.mrf.mxu0
        %v2064 = vadd.f32 0.0, %v2063
        %v2065 = vpop.f32.mrf.mxu0
        %v2066 = vpop.f32.mrf.mxu0
        %v2067 = vadd.f32 0.0, %v2066
        %v2068 = vpop.f32.mrf.mxu0
        %2069 = vmatprep.mubr.bf16.mxu0 0
        %2070 = vmatmul.mubr.bf16.gmra.mxu0 %v1866
        %v2071 = vpop.f32.mrf.mxu0
        %v2072 = vadd.f32 0.0, %v2071
        %v2073 = vpop.f32.mrf.mxu0
        %v2074 = vpop.f32.mrf.mxu0
        %v2075 = vadd.f32 0.0, %v2074
        %v2076 = vpop.f32.mrf.mxu0
        %2077 = vmatprep.mubr.bf16.mxu0 0
        %2078 = vmatmul.mubr.bf16.gmra.mxu0 %v1867
        %v2079 = vpop.f32.mrf.mxu0
        %v2080 = vadd.f32 0.0, %v2079
        %v2081 = vpop.f32.mrf.mxu0
        %v2082 = vpop.f32.mrf.mxu0
        %v2083 = vadd.f32 0.0, %v2082
        %v2084 = vpop.f32.mrf.mxu0
        %2085 = vmatprep.mubr.bf16.mxu0 0
        %2086 = vmatmul.mubr.bf16.gmra.mxu0 %v1868
        %v2087 = vpop.f32.mrf.mxu0
        %v2088 = vadd.f32 0.0, %v2087
        %v2089 = vpop.f32.mrf.mxu0
        %v2090 = vpop.f32.mrf.mxu0
        %v2091 = vadd.f32 0.0, %v2090
        %v2092 = vpop.f32.mrf.mxu0
        %2093 = vdwg.mxu0
        %v2094 = vadd.f32 %v1707, %v1968
        %v2095 = vadd.f32 %v1708, %v1971
        %v2096 = vadd.f32 %v1709, %v1976
        %v2097 = vadd.f32 %v1710, %v1979
        %v2098 = vadd.f32 %v1711, %v1984
        %v2099 = vadd.f32 %v1712, %v1987
        %v2100 = vadd.f32 %v1713, %v1992
        %v2101 = vadd.f32 %v1714, %v1995
        %v2102 = vadd.f32 %v1715, %v2000
        %v2103 = vadd.f32 %v1716, %v2003
        %v2104 = vadd.f32 %v1717, %v2008
        %v2105 = vadd.f32 %v1718, %v2011
        %v2106 = vadd.f32 %v1719, %v2016
        %v2107 = vadd.f32 %v1720, %v2019
        %v2108 = vadd.f32 %v1721, %v2024
        %v2109 = vadd.f32 %v1722, %v2027
        %v2110 = vadd.f32 %v1723, %v2032
        %v2111 = vadd.f32 %v1724, %v2035
        %v2112 = vadd.f32 %v1725, %v2040
        %v2113 = vadd.f32 %v1726, %v2043
        %v2114 = vadd.f32 %v1727, %v2048
        %v2115 = vadd.f32 %v1728, %v2051
        %v2116 = vadd.f32 %v1729, %v2056
        %v2117 = vadd.f32 %v1730, %v2059
        %v2118 = vadd.f32 %v1731, %v2064
        %v2119 = vadd.f32 %v1732, %v2067
        %v2120 = vadd.f32 %v1733, %v2072
        %v2121 = vadd.f32 %v1734, %v2075
        %v2122 = vadd.f32 %v1735, %v2080
        %v2123 = vadd.f32 %v1736, %v2083
        %v2124 = vadd.f32 %v1737, %v2088
        %v2125 = vadd.f32 %v1738, %v2091
        %v2126 = vld [vmem:[%s1739] sm:$0xf]
        %v2127 = vld [vmem:[%s1739 + $0x4] sm:$0xf]
        %v2128 = vld [vmem:[%s1739 + $0x8] sm:$0x1]
        %v2129 = vld [vmem:[%s1739 + $0xc] sm:$0xf]
        %v2130 = vld [vmem:[%s1739 + $0x10] sm:$0xf]
        %v2131 = vld [vmem:[%s1739 + $0x14] sm:$0x1]
        %v2132 = vld [vmem:[%s1739 + $0x18] sm:$0xf]
        %v2133 = vld [vmem:[%s1739 + $0x1c] sm:$0xf]
        %v2134 = vld [vmem:[%s1739 + $0x20] sm:$0x1]
        %v2135 = vld [vmem:[%s1739 + $0x24] sm:$0xf]
        %v2136 = vld [vmem:[%s1739 + $0x28] sm:$0xf]
        %v2137 = vld [vmem:[%s1739 + $0x2c] sm:$0x1]
        %v2138 = vld [vmem:[%s1739 + $0x30] sm:$0xf]
        %v2139 = vld [vmem:[%s1739 + $0x34] sm:$0xf]
        %v2140 = vld [vmem:[%s1739 + $0x38] sm:$0x1]
        %v2141 = vld [vmem:[%s1739 + $0x3c] sm:$0xf]
        %v2142 = vld [vmem:[%s1739 + $0x40] sm:$0xf]
        %v2143 = vld [vmem:[%s1739 + $0x44] sm:$0x1]
        %v2144 = vld [vmem:[%s1739 + $0x48] sm:$0xf]
        %v2145 = vld [vmem:[%s1739 + $0x4c] sm:$0xf]
        %v2146 = vld [vmem:[%s1739 + $0x50] sm:$0x1]
        %v2147 = vld [vmem:[%s1739 + $0x54] sm:$0xf]
        %v2148 = vld [vmem:[%s1739 + $0x58] sm:$0xf]
        %v2149 = vld [vmem:[%s1739 + $0x5c] sm:$0x1]
        %v2150 = vld [vmem:[%s1739 + $0x60] sm:$0xf]
        %v2151 = vld [vmem:[%s1739 + $0x64] sm:$0xf]
        %v2152 = vld [vmem:[%s1739 + $0x68] sm:$0x1]
        %v2153 = vld [vmem:[%s1739 + $0x6c] sm:$0xf]
        %v2154 = vld [vmem:[%s1739 + $0x70] sm:$0xf]
        %v2155 = vld [vmem:[%s1739 + $0x74] sm:$0x1]
        %v2156 = vld [vmem:[%s1739 + $0x78] sm:$0xf]
        %v2157 = vld [vmem:[%s1739 + $0x7c] sm:$0xf]
        %v2158 = vld [vmem:[%s1739 + $0x80] sm:$0x1]
        %v2159 = vld [vmem:[%s1739 + $0x84] sm:$0xf]
        %v2160 = vld [vmem:[%s1739 + $0x88] sm:$0xf]
        %v2161 = vld [vmem:[%s1739 + $0x8c] sm:$0x1]
        %v2162 = vld [vmem:[%s1739 + $0x90] sm:$0xf]
        %v2163 = vld [vmem:[%s1739 + $0x94] sm:$0xf]
        %v2164 = vld [vmem:[%s1739 + $0x98] sm:$0x1]
        %v2165 = vld [vmem:[%s1739 + $0x9c] sm:$0xf]
        %v2166 = vld [vmem:[%s1739 + $0xa0] sm:$0xf]
        %v2167 = vld [vmem:[%s1739 + $0xa4] sm:$0x1]
        %v2168 = vld [vmem:[%s1739 + $0xa8] sm:$0xf]
        %v2169 = vld [vmem:[%s1739 + $0xac] sm:$0xf]
        %v2170 = vld [vmem:[%s1739 + $0xb0] sm:$0x1]
        %v2171 = vld [vmem:[%s1739 + $0xb4] sm:$0xf]
        %v2172 = vld [vmem:[%s1739 + $0xb8] sm:$0xf]
        %v2173 = vld [vmem:[%s1739 + $0xbc] sm:$0x1]
        %v2175 = vshrl.u32 %v2126, 16
        %v2177 = vrot.slane %v2175, 4
        %v2178 = vshll.u32 %v2126, 16
        %v2180 = vrot.slane %v2178, 5
        %v2181 = vor.u32 %v2177, %v2180
        %v2182 = vrot.slane %v2181, 4
        %v2184 = vshll.u32 %v2127, 16
        %v2186 = vrot.slane %v2184, 5
        %v2187 = vsel %vm274, %v2182, %v2186
        %v2188 = vshrl.u32 %v2127, 16
        %v2190 = vrot.slane %v2188, 4
        %v2191 = vor.u32 %v2190, %v2186
        %v2192 = vrot.slane %v2191, 4
        %v2194 = vshll.u32 %v2128, 16
        %v2196 = vrot.slane %v2194, 5
        %v2197 = vsel %vm274, %v2192, %v2196
        %v2199 = vshrl.u32 %v2129, 16
        %v2201 = vrot.slane %v2199, 4
        %v2202 = vshll.u32 %v2129, 16
        %v2204 = vrot.slane %v2202, 5
        %v2205 = vor.u32 %v2201, %v2204
        %v2206 = vrot.slane %v2205, 4
        %v2208 = vshll.u32 %v2130, 16
        %v2210 = vrot.slane %v2208, 5
        %v2211 = vsel %vm274, %v2206, %v2210
        %v2212 = vshrl.u32 %v2130, 16
        %v2214 = vrot.slane %v2212, 4
        %v2215 = vor.u32 %v2214, %v2210
        %v2216 = vrot.slane %v2215, 4
        %v2218 = vshll.u32 %v2131, 16
        %v2220 = vrot.slane %v2218, 5
        %v2221 = vsel %vm274, %v2216, %v2220
        %v2223 = vshrl.u32 %v2132, 16
        %v2225 = vrot.slane %v2223, 4
        %v2226 = vshll.u32 %v2132, 16
        %v2228 = vrot.slane %v2226, 5
        %v2229 = vor.u32 %v2225, %v2228
        %v2230 = vrot.slane %v2229, 4
        %v2232 = vshll.u32 %v2133, 16
        %v2234 = vrot.slane %v2232, 5
        %v2235 = vsel %vm274, %v2230, %v2234
        %v2236 = vshrl.u32 %v2133, 16
        %v2238 = vrot.slane %v2236, 4
        %v2239 = vor.u32 %v2238, %v2234
        %v2240 = vrot.slane %v2239, 4
        %v2242 = vshll.u32 %v2134, 16
        %v2244 = vrot.slane %v2242, 5
        %v2245 = vsel %vm274, %v2240, %v2244
        %v2247 = vshrl.u32 %v2135, 16
        %v2249 = vrot.slane %v2247, 4
        %v2250 = vshll.u32 %v2135, 16
        %v2252 = vrot.slane %v2250, 5
        %v2253 = vor.u32 %v2249, %v2252
        %v2254 = vrot.slane %v2253, 4
        %v2256 = vshll.u32 %v2136, 16
        %v2258 = vrot.slane %v2256, 5
        %v2259 = vsel %vm274, %v2254, %v2258
        %v2260 = vshrl.u32 %v2136, 16
        %v2262 = vrot.slane %v2260, 4
        %v2263 = vor.u32 %v2262, %v2258
        %v2264 = vrot.slane %v2263, 4
        %v2266 = vshll.u32 %v2137, 16
        %v2268 = vrot.slane %v2266, 5
        %v2269 = vsel %vm274, %v2264, %v2268
        %v2271 = vshrl.u32 %v2138, 16
        %v2273 = vrot.slane %v2271, 4
        %v2274 = vshll.u32 %v2138, 16
        %v2276 = vrot.slane %v2274, 5
        %v2277 = vor.u32 %v2273, %v2276
        %v2278 = vrot.slane %v2277, 4
        %v2280 = vshll.u32 %v2139, 16
        %v2282 = vrot.slane %v2280, 5
        %v2283 = vsel %vm274, %v2278, %v2282
        %v2284 = vshrl.u32 %v2139, 16
        %v2286 = vrot.slane %v2284, 4
        %v2287 = vor.u32 %v2286, %v2282
        %v2288 = vrot.slane %v2287, 4
        %v2290 = vshll.u32 %v2140, 16
        %v2292 = vrot.slane %v2290, 5
        %v2293 = vsel %vm274, %v2288, %v2292
        %v2295 = vshrl.u32 %v2141, 16
        %v2297 = vrot.slane %v2295, 4
        %v2298 = vshll.u32 %v2141, 16
        %v2300 = vrot.slane %v2298, 5
        %v2301 = vor.u32 %v2297, %v2300
        %v2302 = vrot.slane %v2301, 4
        %v2304 = vshll.u32 %v2142, 16
        %v2306 = vrot.slane %v2304, 5
        %v2307 = vsel %vm274, %v2302, %v2306
        %v2308 = vshrl.u32 %v2142, 16
        %v2310 = vrot.slane %v2308, 4
        %v2311 = vor.u32 %v2310, %v2306
        %v2312 = vrot.slane %v2311, 4
        %v2314 = vshll.u32 %v2143, 16
        %v2316 = vrot.slane %v2314, 5
        %v2317 = vsel %vm274, %v2312, %v2316
        %v2319 = vshrl.u32 %v2144, 16
        %v2321 = vrot.slane %v2319, 4
        %v2322 = vshll.u32 %v2144, 16
        %v2324 = vrot.slane %v2322, 5
        %v2325 = vor.u32 %v2321, %v2324
        %v2326 = vrot.slane %v2325, 4
        %v2328 = vshll.u32 %v2145, 16
        %v2330 = vrot.slane %v2328, 5
        %v2331 = vsel %vm274, %v2326, %v2330
        %v2332 = vshrl.u32 %v2145, 16
        %v2334 = vrot.slane %v2332, 4
        %v2335 = vor.u32 %v2334, %v2330
        %v2336 = vrot.slane %v2335, 4
        %v2338 = vshll.u32 %v2146, 16
        %v2340 = vrot.slane %v2338, 5
        %v2341 = vsel %vm274, %v2336, %v2340
        %v2343 = vshrl.u32 %v2147, 16
        %v2345 = vrot.slane %v2343, 4
        %v2346 = vshll.u32 %v2147, 16
        %v2348 = vrot.slane %v2346, 5
        %v2349 = vor.u32 %v2345, %v2348
        %v2350 = vrot.slane %v2349, 4
        %v2352 = vshll.u32 %v2148, 16
        %v2354 = vrot.slane %v2352, 5
        %v2355 = vsel %vm274, %v2350, %v2354
        %v2356 = vshrl.u32 %v2148, 16
        %v2358 = vrot.slane %v2356, 4
        %v2359 = vor.u32 %v2358, %v2354
        %v2360 = vrot.slane %v2359, 4
        %v2362 = vshll.u32 %v2149, 16
        %v2364 = vrot.slane %v2362, 5
        %v2365 = vsel %vm274, %v2360, %v2364
        %v2367 = vshrl.u32 %v2150, 16
        %v2369 = vrot.slane %v2367, 4
        %v2370 = vshll.u32 %v2150, 16
        %v2372 = vrot.slane %v2370, 5
        %v2373 = vor.u32 %v2369, %v2372
        %v2374 = vrot.slane %v2373, 4
        %v2376 = vshll.u32 %v2151, 16
        %v2378 = vrot.slane %v2376, 5
        %v2379 = vsel %vm274, %v2374, %v2378
        %v2380 = vshrl.u32 %v2151, 16
        %v2382 = vrot.slane %v2380, 4
        %v2383 = vor.u32 %v2382, %v2378
        %v2384 = vrot.slane %v2383, 4
        %v2386 = vshll.u32 %v2152, 16
        %v2388 = vrot.slane %v2386, 5
        %v2389 = vsel %vm274, %v2384, %v2388
        %v2391 = vshrl.u32 %v2153, 16
        %v2393 = vrot.slane %v2391, 4
        %v2394 = vshll.u32 %v2153, 16
        %v2396 = vrot.slane %v2394, 5
        %v2397 = vor.u32 %v2393, %v2396
        %v2398 = vrot.slane %v2397, 4
        %v2400 = vshll.u32 %v2154, 16
        %v2402 = vrot.slane %v2400, 5
        %v2403 = vsel %vm274, %v2398, %v2402
        %v2404 = vshrl.u32 %v2154, 16
        %v2406 = vrot.slane %v2404, 4
        %v2407 = vor.u32 %v2406, %v2402
        %v2408 = vrot.slane %v2407, 4
        %v2410 = vshll.u32 %v2155, 16
        %v2412 = vrot.slane %v2410, 5
        %v2413 = vsel %vm274, %v2408, %v2412
        %v2415 = vshrl.u32 %v2156, 16
        %v2417 = vrot.slane %v2415, 4
        %v2418 = vshll.u32 %v2156, 16
        %v2420 = vrot.slane %v2418, 5
        %v2421 = vor.u32 %v2417, %v2420
        %v2422 = vrot.slane %v2421, 4
        %v2424 = vshll.u32 %v2157, 16
        %v2426 = vrot.slane %v2424, 5
        %v2427 = vsel %vm274, %v2422, %v2426
        %v2428 = vshrl.u32 %v2157, 16
        %v2430 = vrot.slane %v2428, 4
        %v2431 = vor.u32 %v2430, %v2426
        %v2432 = vrot.slane %v2431, 4
        %v2434 = vshll.u32 %v2158, 16
        %v2436 = vrot.slane %v2434, 5
        %v2437 = vsel %vm274, %v2432, %v2436
        %v2439 = vshrl.u32 %v2159, 16
        %v2441 = vrot.slane %v2439, 4
        %v2442 = vshll.u32 %v2159, 16
        %v2444 = vrot.slane %v2442, 5
        %v2445 = vor.u32 %v2441, %v2444
        %v2446 = vrot.slane %v2445, 4
        %v2448 = vshll.u32 %v2160, 16
        %v2450 = vrot.slane %v2448, 5
        %v2451 = vsel %vm274, %v2446, %v2450
        %v2452 = vshrl.u32 %v2160, 16
        %v2454 = vrot.slane %v2452, 4
        %v2455 = vor.u32 %v2454, %v2450
        %v2456 = vrot.slane %v2455, 4
        %v2458 = vshll.u32 %v2161, 16
        %v2460 = vrot.slane %v2458, 5
        %v2461 = vsel %vm274, %v2456, %v2460
        %v2463 = vshrl.u32 %v2162, 16
        %v2465 = vrot.slane %v2463, 4
        %v2466 = vshll.u32 %v2162, 16
        %v2468 = vrot.slane %v2466, 5
        %v2469 = vor.u32 %v2465, %v2468
        %v2470 = vrot.slane %v2469, 4
        %v2472 = vshll.u32 %v2163, 16
        %v2474 = vrot.slane %v2472, 5
        %v2475 = vsel %vm274, %v2470, %v2474
        %v2476 = vshrl.u32 %v2163, 16
        %v2478 = vrot.slane %v2476, 4
        %v2479 = vor.u32 %v2478, %v2474
        %v2480 = vrot.slane %v2479, 4
        %v2482 = vshll.u32 %v2164, 16
        %v2484 = vrot.slane %v2482, 5
        %v2485 = vsel %vm274, %v2480, %v2484
        %v2487 = vshrl.u32 %v2165, 16
        %v2489 = vrot.slane %v2487, 4
        %v2490 = vshll.u32 %v2165, 16
        %v2492 = vrot.slane %v2490, 5
        %v2493 = vor.u32 %v2489, %v2492
        %v2494 = vrot.slane %v2493, 4
        %v2496 = vshll.u32 %v2166, 16
        %v2498 = vrot.slane %v2496, 5
        %v2499 = vsel %vm274, %v2494, %v2498
        %v2500 = vshrl.u32 %v2166, 16
        %v2502 = vrot.slane %v2500, 4
        %v2503 = vor.u32 %v2502, %v2498
        %v2504 = vrot.slane %v2503, 4
        %v2506 = vshll.u32 %v2167, 16
        %v2508 = vrot.slane %v2506, 5
        %v2509 = vsel %vm274, %v2504, %v2508
        %v2511 = vshrl.u32 %v2168, 16
        %v2513 = vrot.slane %v2511, 4
        %v2514 = vshll.u32 %v2168, 16
        %v2516 = vrot.slane %v2514, 5
        %v2517 = vor.u32 %v2513, %v2516
        %v2518 = vrot.slane %v2517, 4
        %v2520 = vshll.u32 %v2169, 16
        %v2522 = vrot.slane %v2520, 5
        %v2523 = vsel %vm274, %v2518, %v2522
        %v2524 = vshrl.u32 %v2169, 16
        %v2526 = vrot.slane %v2524, 4
        %v2527 = vor.u32 %v2526, %v2522
        %v2528 = vrot.slane %v2527, 4
        %v2530 = vshll.u32 %v2170, 16
        %v2532 = vrot.slane %v2530, 5
        %v2533 = vsel %vm274, %v2528, %v2532
        %v2535 = vshrl.u32 %v2171, 16
        %v2537 = vrot.slane %v2535, 4
        %v2538 = vshll.u32 %v2171, 16
        %v2540 = vrot.slane %v2538, 5
        %v2541 = vor.u32 %v2537, %v2540
        %v2542 = vrot.slane %v2541, 4
        %v2544 = vshll.u32 %v2172, 16
        %v2546 = vrot.slane %v2544, 5
        %v2547 = vsel %vm274, %v2542, %v2546
        %v2548 = vshrl.u32 %v2172, 16
        %v2550 = vrot.slane %v2548, 4
        %v2551 = vor.u32 %v2550, %v2546
        %v2552 = vrot.slane %v2551, 4
        %v2554 = vshll.u32 %v2173, 16
        %v2556 = vrot.slane %v2554, 5
        %v2557 = vsel %vm274, %v2552, %v2556
        %s2558 = scalar_lea.vmem %s1, 256
        %v2559 = vld [vmem:[%s2558] sm:$0xf]
        %v2560 = vld [vmem:[%s2558 + $0x4] sm:$0xf]
        %v2561 = vld [vmem:[%s2558 + $0x8] sm:$0xf]
        %v2562 = vld [vmem:[%s2558 + $0xc] sm:$0xf]
        %v2563 = vld [vmem:[%s2558 + $0x10] sm:$0xf]
        %v2564 = vld [vmem:[%s2558 + $0x14] sm:$0xf]
        %v2565 = vld [vmem:[%s2558 + $0x18] sm:$0xf]
        %v2566 = vld [vmem:[%s2558 + $0x1c] sm:$0xf]
        %v2567 = vld [vmem:[%s2558 + $0x20] sm:$0xf]
        %v2568 = vld [vmem:[%s2558 + $0x24] sm:$0xf]
        %v2569 = vld [vmem:[%s2558 + $0x28] sm:$0xf]
        %v2570 = vld [vmem:[%s2558 + $0x2c] sm:$0xf]
        %v2571 = vld [vmem:[%s2558 + $0x30] sm:$0xf]
        %v2572 = vld [vmem:[%s2558 + $0x34] sm:$0xf]
        %v2573 = vld [vmem:[%s2558 + $0x38] sm:$0xf]
        %v2574 = vld [vmem:[%s2558 + $0x3c] sm:$0xf]
        %v2575 = vunpack.c.l.b16 %v2187
        %v2576 = vunpack.c.l.b16 %v2197
        %v2577 = vunpack.c.l.b16 %v2211
        %v2578 = vunpack.c.l.b16 %v2221
        %v2579 = vunpack.c.l.b16 %v2235
        %v2580 = vunpack.c.l.b16 %v2245
        %v2581 = vunpack.c.l.b16 %v2259
        %v2582 = vunpack.c.l.b16 %v2269
        %v2583 = vunpack.c.l.b16 %v2283
        %v2584 = vunpack.c.l.b16 %v2293
        %v2585 = vunpack.c.l.b16 %v2307
        %v2586 = vunpack.c.l.b16 %v2317
        %v2587 = vunpack.c.l.b16 %v2331
        %v2588 = vunpack.c.l.b16 %v2341
        %v2589 = vunpack.c.l.b16 %v2355
        %v2590 = vunpack.c.l.b16 %v2365
        %v2591 = vunpack.c.l.b16 %v2379
        %v2592 = vunpack.c.l.b16 %v2389
        %v2593 = vunpack.c.l.b16 %v2403
        %v2594 = vunpack.c.l.b16 %v2413
        %v2595 = vunpack.c.l.b16 %v2427
        %v2596 = vunpack.c.l.b16 %v2437
        %v2597 = vunpack.c.l.b16 %v2451
        %v2598 = vunpack.c.l.b16 %v2461
        %v2599 = vunpack.c.l.b16 %v2475
        %v2600 = vunpack.c.l.b16 %v2485
        %v2601 = vunpack.c.l.b16 %v2499
        %v2602 = vunpack.c.l.b16 %v2509
        %v2603 = vunpack.c.l.b16 %v2523
        %v2604 = vunpack.c.l.b16 %v2533
        %v2605 = vunpack.c.l.b16 %v2547
        %v2606 = vunpack.c.l.b16 %v2557
        %v2607 = vpack.c.b16 %v2576, %v2575
        %v2608 = vpack.c.b16 %v2578, %v2577
        %v2609 = vpack.c.b16 %v2580, %v2579
        %v2610 = vpack.c.b16 %v2582, %v2581
        %v2611 = vpack.c.b16 %v2584, %v2583
        %v2612 = vpack.c.b16 %v2586, %v2585
        %v2613 = vpack.c.b16 %v2588, %v2587
        %v2614 = vpack.c.b16 %v2590, %v2589
        %v2615 = vpack.c.b16 %v2592, %v2591
        %v2616 = vpack.c.b16 %v2594, %v2593
        %v2617 = vpack.c.b16 %v2596, %v2595
        %v2618 = vpack.c.b16 %v2598, %v2597
        %v2619 = vpack.c.b16 %v2600, %v2599
        %v2620 = vpack.c.b16 %v2602, %v2601
        %v2621 = vpack.c.b16 %v2604, %v2603
        %v2622 = vpack.c.b16 %v2606, %v2605
        %v2655 = vunpack.c.l.b16 %v2559
        %v2656 = vunpack.c.l.b16 %v2560
        %v2657 = vunpack.c.l.b16 %v2561
        %v2658 = vunpack.c.l.b16 %v2562
        %v2659 = vunpack.c.l.b16 %v2563
        %v2660 = vunpack.c.l.b16 %v2564
        %v2661 = vunpack.c.l.b16 %v2565
        %v2662 = vunpack.c.l.b16 %v2566
        %v2663 = vunpack.c.l.b16 %v2567
        %v2664 = vunpack.c.l.b16 %v2568
        %v2665 = vunpack.c.l.b16 %v2569
        %v2666 = vunpack.c.l.b16 %v2570
        %v2667 = vunpack.c.l.b16 %v2571
        %v2668 = vunpack.c.l.b16 %v2572
        %v2669 = vunpack.c.l.b16 %v2573
        %v2670 = vunpack.c.l.b16 %v2574
        %v2671 = vpack.c.b16 %v2656, %v2655
        %v2672 = vpack.c.b16 %v2658, %v2657
        %v2673 = vpack.c.b16 %v2660, %v2659
        %v2674 = vpack.c.b16 %v2662, %v2661
        %v2675 = vpack.c.b16 %v2664, %v2663
        %v2676 = vpack.c.b16 %v2666, %v2665
        %v2677 = vpack.c.b16 %v2668, %v2667
        %v2678 = vpack.c.b16 %v2670, %v2669
        %2687 = vmatprep.subr.bf16.mxu0 0
        %2688 = vmatpush1.bf16.msra.mxu0 %v2678
        %2689 = vmatprep.subr.bf16.mxu0 0
        %2690 = vmatpush1.bf16.msra.mxu0 %v2677
        %2691 = vmatprep.subr.bf16.mxu0 0
        %2692 = vmatpush1.bf16.msra.mxu0 %v2676
        %2693 = vmatprep.subr.bf16.mxu0 0
        %2694 = vmatpush1.bf16.msra.mxu0 %v2675
        %2695 = vmatprep.subr.bf16.mxu0 0
        %2696 = vmatpush1.bf16.msra.mxu0 %v2674
        %2697 = vmatprep.subr.bf16.mxu0 0
        %2698 = vmatpush1.bf16.msra.mxu0 %v2673
        %2699 = vmatprep.subr.bf16.mxu0 0
        %2700 = vmatpush1.bf16.msra.mxu0 %v2672
        %2701 = vmatprep.subr.bf16.mxu0 0
        %2702 = vmatpush1.bf16.msra.mxu0 %v2671
        %2703 = vmatprep.subr.bf16.mxu0 0
        %2704 = vmatpush2.bf16.msra.mxu0 0
        %2705 = vmatprep.subr.bf16.mxu0 0
        %2706 = vmatpush2.bf16.msra.mxu0 0
        %2707 = vmatprep.subr.bf16.mxu0 0
        %2708 = vmatpush2.bf16.msra.mxu0 0
        %2709 = vmatprep.subr.bf16.mxu0 0
        %2710 = vmatpush2.bf16.msra.mxu0 0
        %2711 = vmatprep.subr.bf16.mxu0 0
        %2712 = vmatpush2.bf16.msra.mxu0 0
        %2713 = vmatprep.subr.bf16.mxu0 0
        %2714 = vmatpush2.bf16.msra.mxu0 0
        %2715 = vmatprep.subr.bf16.mxu0 0
        %2716 = vmatpush2.bf16.msra.mxu0 0
        %2717 = vmatprep.subr.bf16.mxu0 0
        %2718 = vmatpush2.bf16.msra.mxu0 0
        %2719 = vmatprep.mubr.bf16.mxu0 0
        %2720 = vmatmul.mubr.bf16.gmra.mxu0 %v2607
        %v2721 = vpop.f32.mrf.mxu0
        %v2722 = vadd.f32 0.0, %v2721
        %v2723 = vpop.f32.mrf.mxu0
        %v2724 = vpop.f32.mrf.mxu0
        %v2725 = vadd.f32 0.0, %v2724
        %v2726 = vpop.f32.mrf.mxu0
        %2727 = vmatprep.mubr.bf16.mxu0 0
        %2728 = vmatmul.mubr.bf16.gmra.mxu0 %v2608
        %v2729 = vpop.f32.mrf.mxu0
        %v2730 = vadd.f32 0.0, %v2729
        %v2731 = vpop.f32.mrf.mxu0
        %v2732 = vpop.f32.mrf.mxu0
        %v2733 = vadd.f32 0.0, %v2732
        %v2734 = vpop.f32.mrf.mxu0
        %2735 = vmatprep.mubr.bf16.mxu0 0
        %2736 = vmatmul.mubr.bf16.gmra.mxu0 %v2609
        %v2737 = vpop.f32.mrf.mxu0
        %v2738 = vadd.f32 0.0, %v2737
        %v2739 = vpop.f32.mrf.mxu0
        %v2740 = vpop.f32.mrf.mxu0
        %v2741 = vadd.f32 0.0, %v2740
        %v2742 = vpop.f32.mrf.mxu0
        %2743 = vmatprep.mubr.bf16.mxu0 0
        %2744 = vmatmul.mubr.bf16.gmra.mxu0 %v2610
        %v2745 = vpop.f32.mrf.mxu0
        %v2746 = vadd.f32 0.0, %v2745
        %v2747 = vpop.f32.mrf.mxu0
        %v2748 = vpop.f32.mrf.mxu0
        %v2749 = vadd.f32 0.0, %v2748
        %v2750 = vpop.f32.mrf.mxu0
        %2751 = vmatprep.mubr.bf16.mxu0 0
        %2752 = vmatmul.mubr.bf16.gmra.mxu0 %v2611
        %v2753 = vpop.f32.mrf.mxu0
        %v2754 = vadd.f32 0.0, %v2753
        %v2755 = vpop.f32.mrf.mxu0
        %v2756 = vpop.f32.mrf.mxu0
        %v2757 = vadd.f32 0.0, %v2756
        %v2758 = vpop.f32.mrf.mxu0
        %2759 = vmatprep.mubr.bf16.mxu0 0
        %2760 = vmatmul.mubr.bf16.gmra.mxu0 %v2612
        %v2761 = vpop.f32.mrf.mxu0
        %v2762 = vadd.f32 0.0, %v2761
        %v2763 = vpop.f32.mrf.mxu0
        %v2764 = vpop.f32.mrf.mxu0
        %v2765 = vadd.f32 0.0, %v2764
        %v2766 = vpop.f32.mrf.mxu0
        %2767 = vmatprep.mubr.bf16.mxu0 0
        %2768 = vmatmul.mubr.bf16.gmra.mxu0 %v2613
        %v2769 = vpop.f32.mrf.mxu0
        %v2770 = vadd.f32 0.0, %v2769
        %v2771 = vpop.f32.mrf.mxu0
        %v2772 = vpop.f32.mrf.mxu0
        %v2773 = vadd.f32 0.0, %v2772
        %v2774 = vpop.f32.mrf.mxu0
        %2775 = vmatprep.mubr.bf16.mxu0 0
        %2776 = vmatmul.mubr.bf16.gmra.mxu0 %v2614
        %v2777 = vpop.f32.mrf.mxu0
        %v2778 = vadd.f32 0.0, %v2777
        %v2779 = vpop.f32.mrf.mxu0
        %v2780 = vpop.f32.mrf.mxu0
        %v2781 = vadd.f32 0.0, %v2780
        %v2782 = vpop.f32.mrf.mxu0
        %2783 = vmatprep.mubr.bf16.mxu0 0
        %2784 = vmatmul.mubr.bf16.gmra.mxu0 %v2615
        %v2785 = vpop.f32.mrf.mxu0
        %v2786 = vadd.f32 0.0, %v2785
        %v2787 = vpop.f32.mrf.mxu0
        %v2788 = vpop.f32.mrf.mxu0
        %v2789 = vadd.f32 0.0, %v2788
        %v2790 = vpop.f32.mrf.mxu0
        %2791 = vmatprep.mubr.bf16.mxu0 0
        %2792 = vmatmul.mubr.bf16.gmra.mxu0 %v2616
        %v2793 = vpop.f32.mrf.mxu0
        %v2794 = vadd.f32 0.0, %v2793
        %v2795 = vpop.f32.mrf.mxu0
        %v2796 = vpop.f32.mrf.mxu0
        %v2797 = vadd.f32 0.0, %v2796
        %v2798 = vpop.f32.mrf.mxu0
        %2799 = vmatprep.mubr.bf16.mxu0 0
        %2800 = vmatmul.mubr.bf16.gmra.mxu0 %v2617
        %v2801 = vpop.f32.mrf.mxu0
        %v2802 = vadd.f32 0.0, %v2801
        %v2803 = vpop.f32.mrf.mxu0
        %v2804 = vpop.f32.mrf.mxu0
        %v2805 = vadd.f32 0.0, %v2804
        %v2806 = vpop.f32.mrf.mxu0
        %2807 = vmatprep.mubr.bf16.mxu0 0
        %2808 = vmatmul.mubr.bf16.gmra.mxu0 %v2618
        %v2809 = vpop.f32.mrf.mxu0
        %v2810 = vadd.f32 0.0, %v2809
        %v2811 = vpop.f32.mrf.mxu0
        %v2812 = vpop.f32.mrf.mxu0
        %v2813 = vadd.f32 0.0, %v2812
        %v2814 = vpop.f32.mrf.mxu0
        %2815 = vmatprep.mubr.bf16.mxu0 0
        %2816 = vmatmul.mubr.bf16.gmra.mxu0 %v2619
        %v2817 = vpop.f32.mrf.mxu0
        %v2818 = vadd.f32 0.0, %v2817
        %v2819 = vpop.f32.mrf.mxu0
        %v2820 = vpop.f32.mrf.mxu0
        %v2821 = vadd.f32 0.0, %v2820
        %v2822 = vpop.f32.mrf.mxu0
        %2823 = vmatprep.mubr.bf16.mxu0 0
        %2824 = vmatmul.mubr.bf16.gmra.mxu0 %v2620
        %v2825 = vpop.f32.mrf.mxu0
        %v2826 = vadd.f32 0.0, %v2825
        %v2827 = vpop.f32.mrf.mxu0
        %v2828 = vpop.f32.mrf.mxu0
        %v2829 = vadd.f32 0.0, %v2828
        %v2830 = vpop.f32.mrf.mxu0
        %2831 = vmatprep.mubr.bf16.mxu0 0
        %2832 = vmatmul.mubr.bf16.gmra.mxu0 %v2621
        %v2833 = vpop.f32.mrf.mxu0
        %v2834 = vadd.f32 0.0, %v2833
        %v2835 = vpop.f32.mrf.mxu0
        %v2836 = vpop.f32.mrf.mxu0
        %v2837 = vadd.f32 0.0, %v2836
        %v2838 = vpop.f32.mrf.mxu0
        %2839 = vmatprep.mubr.bf16.mxu0 0
        %2840 = vmatmul.mubr.bf16.gmra.mxu0 %v2622
        %v2841 = vpop.f32.mrf.mxu0
        %v2842 = vadd.f32 0.0, %v2841
        %v2843 = vpop.f32.mrf.mxu0
        %v2844 = vpop.f32.mrf.mxu0
        %v2845 = vadd.f32 0.0, %v2844
        %v2846 = vpop.f32.mrf.mxu0
        %2847 = vdwg.mxu0
        %v2848 = vadd.f32 %v2094, %v2722
        %v2849 = vadd.f32 %v2095, %v2725
        %v2850 = vadd.f32 %v2096, %v2730
        %v2851 = vadd.f32 %v2097, %v2733
        %v2852 = vadd.f32 %v2098, %v2738
        %v2853 = vadd.f32 %v2099, %v2741
        %v2854 = vadd.f32 %v2100, %v2746
        %v2855 = vadd.f32 %v2101, %v2749
        %v2856 = vadd.f32 %v2102, %v2754
        %v2857 = vadd.f32 %v2103, %v2757
        %v2858 = vadd.f32 %v2104, %v2762
        %v2859 = vadd.f32 %v2105, %v2765
        %v2860 = vadd.f32 %v2106, %v2770
        %v2861 = vadd.f32 %v2107, %v2773
        %v2862 = vadd.f32 %v2108, %v2778
        %v2863 = vadd.f32 %v2109, %v2781
        %v2864 = vadd.f32 %v2110, %v2786
        %v2865 = vadd.f32 %v2111, %v2789
        %v2866 = vadd.f32 %v2112, %v2794
        %v2867 = vadd.f32 %v2113, %v2797
        %v2868 = vadd.f32 %v2114, %v2802
        %v2869 = vadd.f32 %v2115, %v2805
        %v2870 = vadd.f32 %v2116, %v2810
        %v2871 = vadd.f32 %v2117, %v2813
        %v2872 = vadd.f32 %v2118, %v2818
        %v2873 = vadd.f32 %v2119, %v2821
        %v2874 = vadd.f32 %v2120, %v2826
        %v2875 = vadd.f32 %v2121, %v2829
        %v2876 = vadd.f32 %v2122, %v2834
        %v2877 = vadd.f32 %v2123, %v2837
        %v2878 = vadd.f32 %v2124, %v2842
        %v2879 = vadd.f32 %v2125, %v2845
        %v2880 = vld [vmem:[%s1739] sm:$0xe]
        %v2881 = vld [vmem:[%s1739 + $0xc] sm:$0xe]
        %v2882 = vld [vmem:[%s1739 + $0x18] sm:$0xe]
        %v2883 = vld [vmem:[%s1739 + $0x24] sm:$0xe]
        %v2884 = vld [vmem:[%s1739 + $0x30] sm:$0xe]
        %v2885 = vld [vmem:[%s1739 + $0x3c] sm:$0xe]
        %v2886 = vld [vmem:[%s1739 + $0x48] sm:$0xe]
        %v2887 = vld [vmem:[%s1739 + $0x54] sm:$0xe]
        %v2888 = vld [vmem:[%s1739 + $0x60] sm:$0xe]
        %v2889 = vld [vmem:[%s1739 + $0x6c] sm:$0xe]
        %v2890 = vld [vmem:[%s1739 + $0x78] sm:$0xe]
        %v2891 = vld [vmem:[%s1739 + $0x84] sm:$0xe]
        %v2892 = vld [vmem:[%s1739 + $0x90] sm:$0xe]
        %v2893 = vld [vmem:[%s1739 + $0x9c] sm:$0xe]
        %v2894 = vld [vmem:[%s1739 + $0xa8] sm:$0xe]
        %v2895 = vld [vmem:[%s1739 + $0xb4] sm:$0xe]
        %v2944 = vrot.slane %v2880, 5
        %v2945 = vrot.slane %v2944, 4
        %v2946 = vrot.slane %v2127, 5
        %v2947 = vsel %vm1304, %v2945, %v2946
        %v2948 = vrot.slane %v2946, 4
        %v2949 = vrot.slane %v2128, 5
        %v2950 = vsel %vm1304, %v2948, %v2949
        %v2951 = vrot.slane %v2881, 5
        %v2952 = vrot.slane %v2951, 4
        %v2953 = vrot.slane %v2130, 5
        %v2954 = vsel %vm1304, %v2952, %v2953
        %v2955 = vrot.slane %v2953, 4
        %v2956 = vrot.slane %v2131, 5
        %v2957 = vsel %vm1304, %v2955, %v2956
        %v2958 = vrot.slane %v2882, 5
        %v2959 = vrot.slane %v2958, 4
        %v2960 = vrot.slane %v2133, 5
        %v2961 = vsel %vm1304, %v2959, %v2960
        %v2962 = vrot.slane %v2960, 4
        %v2963 = vrot.slane %v2134, 5
        %v2964 = vsel %vm1304, %v2962, %v2963
        %v2965 = vrot.slane %v2883, 5
        %v2966 = vrot.slane %v2965, 4
        %v2967 = vrot.slane %v2136, 5
        %v2968 = vsel %vm1304, %v2966, %v2967
        %v2969 = vrot.slane %v2967, 4
        %v2970 = vrot.slane %v2137, 5
        %v2971 = vsel %vm1304, %v2969, %v2970
        %v2972 = vrot.slane %v2884, 5
        %v2973 = vrot.slane %v2972, 4
        %v2974 = vrot.slane %v2139, 5
        %v2975 = vsel %vm1304, %v2973, %v2974
        %v2976 = vrot.slane %v2974, 4
        %v2977 = vrot.slane %v2140, 5
        %v2978 = vsel %vm1304, %v2976, %v2977
        %v2979 = vrot.slane %v2885, 5
        %v2980 = vrot.slane %v2979, 4
        %v2981 = vrot.slane %v2142, 5
        %v2982 = vsel %vm1304, %v2980, %v2981
        %v2983 = vrot.slane %v2981, 4
        %v2984 = vrot.slane %v2143, 5
        %v2985 = vsel %vm1304, %v2983, %v2984
        %v2986 = vrot.slane %v2886, 5
        %v2987 = vrot.slane %v2986, 4
        %v2988 = vrot.slane %v2145, 5
        %v2989 = vsel %vm1304, %v2987, %v2988
        %v2990 = vrot.slane %v2988, 4
        %v2991 = vrot.slane %v2146, 5
        %v2992 = vsel %vm1304, %v2990, %v2991
        %v2993 = vrot.slane %v2887, 5
        %v2994 = vrot.slane %v2993, 4
        %v2995 = vrot.slane %v2148, 5
        %v2996 = vsel %vm1304, %v2994, %v2995
        %v2997 = vrot.slane %v2995, 4
        %v2998 = vrot.slane %v2149, 5
        %v2999 = vsel %vm1304, %v2997, %v2998
        %v3000 = vrot.slane %v2888, 5
        %v3001 = vrot.slane %v3000, 4
        %v3002 = vrot.slane %v2151, 5
        %v3003 = vsel %vm1304, %v3001, %v3002
        %v3004 = vrot.slane %v3002, 4
        %v3005 = vrot.slane %v2152, 5
        %v3006 = vsel %vm1304, %v3004, %v3005
        %v3007 = vrot.slane %v2889, 5
        %v3008 = vrot.slane %v3007, 4
        %v3009 = vrot.slane %v2154, 5
        %v3010 = vsel %vm1304, %v3008, %v3009
        %v3011 = vrot.slane %v3009, 4
        %v3012 = vrot.slane %v2155, 5
        %v3013 = vsel %vm1304, %v3011, %v3012
        %v3014 = vrot.slane %v2890, 5
        %v3015 = vrot.slane %v3014, 4
        %v3016 = vrot.slane %v2157, 5
        %v3017 = vsel %vm1304, %v3015, %v3016
        %v3018 = vrot.slane %v3016, 4
        %v3019 = vrot.slane %v2158, 5
        %v3020 = vsel %vm1304, %v3018, %v3019
        %v3021 = vrot.slane %v2891, 5
        %v3022 = vrot.slane %v3021, 4
        %v3023 = vrot.slane %v2160, 5
        %v3024 = vsel %vm1304, %v3022, %v3023
        %v3025 = vrot.slane %v3023, 4
        %v3026 = vrot.slane %v2161, 5
        %v3027 = vsel %vm1304, %v3025, %v3026
        %v3028 = vrot.slane %v2892, 5
        %v3029 = vrot.slane %v3028, 4
        %v3030 = vrot.slane %v2163, 5
        %v3031 = vsel %vm1304, %v3029, %v3030
        %v3032 = vrot.slane %v3030, 4
        %v3033 = vrot.slane %v2164, 5
        %v3034 = vsel %vm1304, %v3032, %v3033
        %v3035 = vrot.slane %v2893, 5
        %v3036 = vrot.slane %v3035, 4
        %v3037 = vrot.slane %v2166, 5
        %v3038 = vsel %vm1304, %v3036, %v3037
        %v3039 = vrot.slane %v3037, 4
        %v3040 = vrot.slane %v2167, 5
        %v3041 = vsel %vm1304, %v3039, %v3040
        %v3042 = vrot.slane %v2894, 5
        %v3043 = vrot.slane %v3042, 4
        %v3044 = vrot.slane %v2169, 5
        %v3045 = vsel %vm1304, %v3043, %v3044
        %v3046 = vrot.slane %v3044, 4
        %v3047 = vrot.slane %v2170, 5
        %v3048 = vsel %vm1304, %v3046, %v3047
        %v3049 = vrot.slane %v2895, 5
        %v3050 = vrot.slane %v3049, 4
        %v3051 = vrot.slane %v2172, 5
        %v3052 = vsel %vm1304, %v3050, %v3051
        %v3053 = vrot.slane %v3051, 4
        %v3054 = vrot.slane %v2173, 5
        %v3055 = vsel %vm1304, %v3053, %v3054
        %s3056 = scalar_lea.vmem %s1, 320
        %v3057 = vld [vmem:[%s3056] sm:$0xf]
        %v3058 = vld [vmem:[%s3056 + $0x4] sm:$0xf]
        %v3059 = vld [vmem:[%s3056 + $0x8] sm:$0xf]
        %v3060 = vld [vmem:[%s3056 + $0xc] sm:$0xf]
        %v3061 = vld [vmem:[%s3056 + $0x10] sm:$0xf]
        %v3062 = vld [vmem:[%s3056 + $0x14] sm:$0xf]
        %v3063 = vld [vmem:[%s3056 + $0x18] sm:$0xf]
        %v3064 = vld [vmem:[%s3056 + $0x1c] sm:$0xf]
        %v3065 = vld [vmem:[%s3056 + $0x20] sm:$0xf]
        %v3066 = vld [vmem:[%s3056 + $0x24] sm:$0xf]
        %v3067 = vld [vmem:[%s3056 + $0x28] sm:$0xf]
        %v3068 = vld [vmem:[%s3056 + $0x2c] sm:$0xf]
        %v3069 = vld [vmem:[%s3056 + $0x30] sm:$0xf]
        %v3070 = vld [vmem:[%s3056 + $0x34] sm:$0xf]
        %v3071 = vld [vmem:[%s3056 + $0x38] sm:$0xf]
        %v3072 = vld [vmem:[%s3056 + $0x3c] sm:$0xf]
        %v3073 = vunpack.c.l.b16 %v2947
        %v3074 = vunpack.c.l.b16 %v2950
        %v3075 = vunpack.c.l.b16 %v2954
        %v3076 = vunpack.c.l.b16 %v2957
        %v3077 = vunpack.c.l.b16 %v2961
        %v3078 = vunpack.c.l.b16 %v2964
        %v3079 = vunpack.c.l.b16 %v2968
        %v3080 = vunpack.c.l.b16 %v2971
        %v3081 = vunpack.c.l.b16 %v2975
        %v3082 = vunpack.c.l.b16 %v2978
        %v3083 = vunpack.c.l.b16 %v2982
        %v3084 = vunpack.c.l.b16 %v2985
        %v3085 = vunpack.c.l.b16 %v2989
        %v3086 = vunpack.c.l.b16 %v2992
        %v3087 = vunpack.c.l.b16 %v2996
        %v3088 = vunpack.c.l.b16 %v2999
        %v3089 = vunpack.c.l.b16 %v3003
        %v3090 = vunpack.c.l.b16 %v3006
        %v3091 = vunpack.c.l.b16 %v3010
        %v3092 = vunpack.c.l.b16 %v3013
        %v3093 = vunpack.c.l.b16 %v3017
        %v3094 = vunpack.c.l.b16 %v3020
        %v3095 = vunpack.c.l.b16 %v3024
        %v3096 = vunpack.c.l.b16 %v3027
        %v3097 = vunpack.c.l.b16 %v3031
        %v3098 = vunpack.c.l.b16 %v3034
        %v3099 = vunpack.c.l.b16 %v3038
        %v3100 = vunpack.c.l.b16 %v3041
        %v3101 = vunpack.c.l.b16 %v3045
        %v3102 = vunpack.c.l.b16 %v3048
        %v3103 = vunpack.c.l.b16 %v3052
        %v3104 = vunpack.c.l.b16 %v3055
        %v3105 = vpack.c.b16 %v3074, %v3073
        %v3106 = vpack.c.b16 %v3076, %v3075
        %v3107 = vpack.c.b16 %v3078, %v3077
        %v3108 = vpack.c.b16 %v3080, %v3079
        %v3109 = vpack.c.b16 %v3082, %v3081
        %v3110 = vpack.c.b16 %v3084, %v3083
        %v3111 = vpack.c.b16 %v3086, %v3085
        %v3112 = vpack.c.b16 %v3088, %v3087
        %v3113 = vpack.c.b16 %v3090, %v3089
        %v3114 = vpack.c.b16 %v3092, %v3091
        %v3115 = vpack.c.b16 %v3094, %v3093
        %v3116 = vpack.c.b16 %v3096, %v3095
        %v3117 = vpack.c.b16 %v3098, %v3097
        %v3118 = vpack.c.b16 %v3100, %v3099
        %v3119 = vpack.c.b16 %v3102, %v3101
        %v3120 = vpack.c.b16 %v3104, %v3103
        %v3153 = vunpack.c.l.b16 %v3057
        %v3154 = vunpack.c.l.b16 %v3058
        %v3155 = vunpack.c.l.b16 %v3059
        %v3156 = vunpack.c.l.b16 %v3060
        %v3157 = vunpack.c.l.b16 %v3061
        %v3158 = vunpack.c.l.b16 %v3062
        %v3159 = vunpack.c.l.b16 %v3063
        %v3160 = vunpack.c.l.b16 %v3064
        %v3161 = vunpack.c.l.b16 %v3065
        %v3162 = vunpack.c.l.b16 %v3066
        %v3163 = vunpack.c.l.b16 %v3067
        %v3164 = vunpack.c.l.b16 %v3068
        %v3165 = vunpack.c.l.b16 %v3069
        %v3166 = vunpack.c.l.b16 %v3070
        %v3167 = vunpack.c.l.b16 %v3071
        %v3168 = vunpack.c.l.b16 %v3072
        %v3169 = vpack.c.b16 %v3154, %v3153
        %v3170 = vpack.c.b16 %v3156, %v3155
        %v3171 = vpack.c.b16 %v3158, %v3157
        %v3172 = vpack.c.b16 %v3160, %v3159
        %v3173 = vpack.c.b16 %v3162, %v3161
        %v3174 = vpack.c.b16 %v3164, %v3163
        %v3175 = vpack.c.b16 %v3166, %v3165
        %v3176 = vpack.c.b16 %v3168, %v3167
        %3185 = vmatprep.subr.bf16.mxu0 0
        %3186 = vmatpush1.bf16.msra.mxu0 %v3176
        %3187 = vmatprep.subr.bf16.mxu0 0
        %3188 = vmatpush1.bf16.msra.mxu0 %v3175
        %3189 = vmatprep.subr.bf16.mxu0 0
        %3190 = vmatpush1.bf16.msra.mxu0 %v3174
        %3191 = vmatprep.subr.bf16.mxu0 0
        %3192 = vmatpush1.bf16.msra.mxu0 %v3173
        %3193 = vmatprep.subr.bf16.mxu0 0
        %3194 = vmatpush1.bf16.msra.mxu0 %v3172
        %3195 = vmatprep.subr.bf16.mxu0 0
        %3196 = vmatpush1.bf16.msra.mxu0 %v3171
        %3197 = vmatprep.subr.bf16.mxu0 0
        %3198 = vmatpush1.bf16.msra.mxu0 %v3170
        %3199 = vmatprep.subr.bf16.mxu0 0
        %3200 = vmatpush1.bf16.msra.mxu0 %v3169
        %3201 = vmatprep.subr.bf16.mxu0 0
        %3202 = vmatpush2.bf16.msra.mxu0 0
        %3203 = vmatprep.subr.bf16.mxu0 0
        %3204 = vmatpush2.bf16.msra.mxu0 0
        %3205 = vmatprep.subr.bf16.mxu0 0
        %3206 = vmatpush2.bf16.msra.mxu0 0
        %3207 = vmatprep.subr.bf16.mxu0 0
        %3208 = vmatpush2.bf16.msra.mxu0 0
        %3209 = vmatprep.subr.bf16.mxu0 0
        %3210 = vmatpush2.bf16.msra.mxu0 0
        %3211 = vmatprep.subr.bf16.mxu0 0
        %3212 = vmatpush2.bf16.msra.mxu0 0
        %3213 = vmatprep.subr.bf16.mxu0 0
        %3214 = vmatpush2.bf16.msra.mxu0 0
        %3215 = vmatprep.subr.bf16.mxu0 0
        %3216 = vmatpush2.bf16.msra.mxu0 0
        %3217 = vmatprep.mubr.bf16.mxu0 0
        %3218 = vmatmul.mubr.bf16.gmra.mxu0 %v3105
        %v3219 = vpop.f32.mrf.mxu0
        %v3220 = vadd.f32 0.0, %v3219
        %v3221 = vpop.f32.mrf.mxu0
        %v3222 = vpop.f32.mrf.mxu0
        %v3223 = vadd.f32 0.0, %v3222
        %v3224 = vpop.f32.mrf.mxu0
        %3225 = vmatprep.mubr.bf16.mxu0 0
        %3226 = vmatmul.mubr.bf16.gmra.mxu0 %v3106
        %v3227 = vpop.f32.mrf.mxu0
        %v3228 = vadd.f32 0.0, %v3227
        %v3229 = vpop.f32.mrf.mxu0
        %v3230 = vpop.f32.mrf.mxu0
        %v3231 = vadd.f32 0.0, %v3230
        %v3232 = vpop.f32.mrf.mxu0
        %3233 = vmatprep.mubr.bf16.mxu0 0
        %3234 = vmatmul.mubr.bf16.gmra.mxu0 %v3107
        %v3235 = vpop.f32.mrf.mxu0
        %v3236 = vadd.f32 0.0, %v3235
        %v3237 = vpop.f32.mrf.mxu0
        %v3238 = vpop.f32.mrf.mxu0
        %v3239 = vadd.f32 0.0, %v3238
        %v3240 = vpop.f32.mrf.mxu0
        %3241 = vmatprep.mubr.bf16.mxu0 0
        %3242 = vmatmul.mubr.bf16.gmra.mxu0 %v3108
        %v3243 = vpop.f32.mrf.mxu0
        %v3244 = vadd.f32 0.0, %v3243
        %v3245 = vpop.f32.mrf.mxu0
        %v3246 = vpop.f32.mrf.mxu0
        %v3247 = vadd.f32 0.0, %v3246
        %v3248 = vpop.f32.mrf.mxu0
        %3249 = vmatprep.mubr.bf16.mxu0 0
        %3250 = vmatmul.mubr.bf16.gmra.mxu0 %v3109
        %v3251 = vpop.f32.mrf.mxu0
        %v3252 = vadd.f32 0.0, %v3251
        %v3253 = vpop.f32.mrf.mxu0
        %v3254 = vpop.f32.mrf.mxu0
        %v3255 = vadd.f32 0.0, %v3254
        %v3256 = vpop.f32.mrf.mxu0
        %3257 = vmatprep.mubr.bf16.mxu0 0
        %3258 = vmatmul.mubr.bf16.gmra.mxu0 %v3110
        %v3259 = vpop.f32.mrf.mxu0
        %v3260 = vadd.f32 0.0, %v3259
        %v3261 = vpop.f32.mrf.mxu0
        %v3262 = vpop.f32.mrf.mxu0
        %v3263 = vadd.f32 0.0, %v3262
        %v3264 = vpop.f32.mrf.mxu0
        %3265 = vmatprep.mubr.bf16.mxu0 0
        %3266 = vmatmul.mubr.bf16.gmra.mxu0 %v3111
        %v3267 = vpop.f32.mrf.mxu0
        %v3268 = vadd.f32 0.0, %v3267
        %v3269 = vpop.f32.mrf.mxu0
        %v3270 = vpop.f32.mrf.mxu0
        %v3271 = vadd.f32 0.0, %v3270
        %v3272 = vpop.f32.mrf.mxu0
        %3273 = vmatprep.mubr.bf16.mxu0 0
        %3274 = vmatmul.mubr.bf16.gmra.mxu0 %v3112
        %v3275 = vpop.f32.mrf.mxu0
        %v3276 = vadd.f32 0.0, %v3275
        %v3277 = vpop.f32.mrf.mxu0
        %v3278 = vpop.f32.mrf.mxu0
        %v3279 = vadd.f32 0.0, %v3278
        %v3280 = vpop.f32.mrf.mxu0
        %3281 = vmatprep.mubr.bf16.mxu0 0
        %3282 = vmatmul.mubr.bf16.gmra.mxu0 %v3113
        %v3283 = vpop.f32.mrf.mxu0
        %v3284 = vadd.f32 0.0, %v3283
        %v3285 = vpop.f32.mrf.mxu0
        %v3286 = vpop.f32.mrf.mxu0
        %v3287 = vadd.f32 0.0, %v3286
        %v3288 = vpop.f32.mrf.mxu0
        %3289 = vmatprep.mubr.bf16.mxu0 0
        %3290 = vmatmul.mubr.bf16.gmra.mxu0 %v3114
        %v3291 = vpop.f32.mrf.mxu0
        %v3292 = vadd.f32 0.0, %v3291
        %v3293 = vpop.f32.mrf.mxu0
        %v3294 = vpop.f32.mrf.mxu0
        %v3295 = vadd.f32 0.0, %v3294
        %v3296 = vpop.f32.mrf.mxu0
        %3297 = vmatprep.mubr.bf16.mxu0 0
        %3298 = vmatmul.mubr.bf16.gmra.mxu0 %v3115
        %v3299 = vpop.f32.mrf.mxu0
        %v3300 = vadd.f32 0.0, %v3299
        %v3301 = vpop.f32.mrf.mxu0
        %v3302 = vpop.f32.mrf.mxu0
        %v3303 = vadd.f32 0.0, %v3302
        %v3304 = vpop.f32.mrf.mxu0
        %3305 = vmatprep.mubr.bf16.mxu0 0
        %3306 = vmatmul.mubr.bf16.gmra.mxu0 %v3116
        %v3307 = vpop.f32.mrf.mxu0
        %v3308 = vadd.f32 0.0, %v3307
        %v3309 = vpop.f32.mrf.mxu0
        %v3310 = vpop.f32.mrf.mxu0
        %v3311 = vadd.f32 0.0, %v3310
        %v3312 = vpop.f32.mrf.mxu0
        %3313 = vmatprep.mubr.bf16.mxu0 0
        %3314 = vmatmul.mubr.bf16.gmra.mxu0 %v3117
        %v3315 = vpop.f32.mrf.mxu0
        %v3316 = vadd.f32 0.0, %v3315
        %v3317 = vpop.f32.mrf.mxu0
        %v3318 = vpop.f32.mrf.mxu0
        %v3319 = vadd.f32 0.0, %v3318
        %v3320 = vpop.f32.mrf.mxu0
        %3321 = vmatprep.mubr.bf16.mxu0 0
        %3322 = vmatmul.mubr.bf16.gmra.mxu0 %v3118
        %v3323 = vpop.f32.mrf.mxu0
        %v3324 = vadd.f32 0.0, %v3323
        %v3325 = vpop.f32.mrf.mxu0
        %v3326 = vpop.f32.mrf.mxu0
        %v3327 = vadd.f32 0.0, %v3326
        %v3328 = vpop.f32.mrf.mxu0
        %3329 = vmatprep.mubr.bf16.mxu0 0
        %3330 = vmatmul.mubr.bf16.gmra.mxu0 %v3119
        %v3331 = vpop.f32.mrf.mxu0
        %v3332 = vadd.f32 0.0, %v3331
        %v3333 = vpop.f32.mrf.mxu0
        %v3334 = vpop.f32.mrf.mxu0
        %v3335 = vadd.f32 0.0, %v3334
        %v3336 = vpop.f32.mrf.mxu0
        %3337 = vmatprep.mubr.bf16.mxu0 0
        %3338 = vmatmul.mubr.bf16.gmra.mxu0 %v3120
        %v3339 = vpop.f32.mrf.mxu0
        %v3340 = vadd.f32 0.0, %v3339
        %v3341 = vpop.f32.mrf.mxu0
        %v3342 = vpop.f32.mrf.mxu0
        %v3343 = vadd.f32 0.0, %v3342
        %v3344 = vpop.f32.mrf.mxu0
        %3345 = vdwg.mxu0
        %v3346 = vadd.f32 %v2848, %v3220
        %v3347 = vadd.f32 %v2849, %v3223
        %v3348 = vadd.f32 %v2850, %v3228
        %v3349 = vadd.f32 %v2851, %v3231
        %v3350 = vadd.f32 %v2852, %v3236
        %v3351 = vadd.f32 %v2853, %v3239
        %v3352 = vadd.f32 %v2854, %v3244
        %v3353 = vadd.f32 %v2855, %v3247
        %v3354 = vadd.f32 %v2856, %v3252
        %v3355 = vadd.f32 %v2857, %v3255
        %v3356 = vadd.f32 %v2858, %v3260
        %v3357 = vadd.f32 %v2859, %v3263
        %v3358 = vadd.f32 %v2860, %v3268
        %v3359 = vadd.f32 %v2861, %v3271
        %v3360 = vadd.f32 %v2862, %v3276
        %v3361 = vadd.f32 %v2863, %v3279
        %v3362 = vadd.f32 %v2864, %v3284
        %v3363 = vadd.f32 %v2865, %v3287
        %v3364 = vadd.f32 %v2866, %v3292
        %v3365 = vadd.f32 %v2867, %v3295
        %v3366 = vadd.f32 %v2868, %v3300
        %v3367 = vadd.f32 %v2869, %v3303
        %v3368 = vadd.f32 %v2870, %v3308
        %v3369 = vadd.f32 %v2871, %v3311
        %v3370 = vadd.f32 %v2872, %v3316
        %v3371 = vadd.f32 %v2873, %v3319
        %v3372 = vadd.f32 %v2874, %v3324
        %v3373 = vadd.f32 %v2875, %v3327
        %v3374 = vadd.f32 %v2876, %v3332
        %v3375 = vadd.f32 %v2877, %v3335
        %v3376 = vadd.f32 %v2878, %v3340
        %v3377 = vadd.f32 %v2879, %v3343
        %s3378 = scalar_lea.vmem %s206, 24
        %v3379 = vld [vmem:[%s3378] sm:$0xf]
        %v3380 = vld [vmem:[%s3378 + $0x4] sm:$0xf]
        %v3381 = vld [vmem:[%s3378 + $0xc] sm:$0xf]
        %v3382 = vld [vmem:[%s3378 + $0x10] sm:$0xf]
        %v3383 = vld [vmem:[%s3378 + $0x18] sm:$0xf]
        %v3384 = vld [vmem:[%s3378 + $0x1c] sm:$0xf]
        %v3385 = vld [vmem:[%s3378 + $0x24] sm:$0xf]
        %v3386 = vld [vmem:[%s3378 + $0x28] sm:$0xf]
        %v3387 = vld [vmem:[%s3378 + $0x30] sm:$0xf]
        %v3388 = vld [vmem:[%s3378 + $0x34] sm:$0xf]
        %v3389 = vld [vmem:[%s3378 + $0x3c] sm:$0xf]
        %v3390 = vld [vmem:[%s3378 + $0x40] sm:$0xf]
        %v3391 = vld [vmem:[%s3378 + $0x48] sm:$0xf]
        %v3392 = vld [vmem:[%s3378 + $0x4c] sm:$0xf]
        %v3393 = vld [vmem:[%s3378 + $0x54] sm:$0xf]
        %v3394 = vld [vmem:[%s3378 + $0x58] sm:$0xf]
        %v3395 = vld [vmem:[%s3378 + $0x60] sm:$0xf]
        %v3396 = vld [vmem:[%s3378 + $0x64] sm:$0xf]
        %v3397 = vld [vmem:[%s3378 + $0x6c] sm:$0xf]
        %v3398 = vld [vmem:[%s3378 + $0x70] sm:$0xf]
        %v3399 = vld [vmem:[%s3378 + $0x78] sm:$0xf]
        %v3400 = vld [vmem:[%s3378 + $0x7c] sm:$0xf]
        %v3401 = vld [vmem:[%s3378 + $0x84] sm:$0xf]
        %v3402 = vld [vmem:[%s3378 + $0x88] sm:$0xf]
        %v3403 = vld [vmem:[%s3378 + $0x90] sm:$0xf]
        %v3404 = vld [vmem:[%s3378 + $0x94] sm:$0xf]
        %v3405 = vld [vmem:[%s3378 + $0x9c] sm:$0xf]
        %v3406 = vld [vmem:[%s3378 + $0xa0] sm:$0xf]
        %v3407 = vld [vmem:[%s3378 + $0xa8] sm:$0xf]
        %v3408 = vld [vmem:[%s3378 + $0xac] sm:$0xf]
        %v3409 = vld [vmem:[%s3378 + $0xb4] sm:$0xf]
        %v3410 = vld [vmem:[%s3378 + $0xb8] sm:$0xf]
        %s3411 = scalar_lea.vmem %s1, 384
        %v3412 = vld [vmem:[%s3411] sm:$0xf]
        %v3413 = vld [vmem:[%s3411 + $0x4] sm:$0xf]
        %v3414 = vld [vmem:[%s3411 + $0x8] sm:$0xf]
        %v3415 = vld [vmem:[%s3411 + $0xc] sm:$0xf]
        %v3416 = vld [vmem:[%s3411 + $0x10] sm:$0xf]
        %v3417 = vld [vmem:[%s3411 + $0x14] sm:$0xf]
        %v3418 = vld [vmem:[%s3411 + $0x18] sm:$0xf]
        %v3419 = vld [vmem:[%s3411 + $0x1c] sm:$0xf]
        %v3420 = vld [vmem:[%s3411 + $0x20] sm:$0xf]
        %v3421 = vld [vmem:[%s3411 + $0x24] sm:$0xf]
        %v3422 = vld [vmem:[%s3411 + $0x28] sm:$0xf]
        %v3423 = vld [vmem:[%s3411 + $0x2c] sm:$0xf]
        %v3424 = vld [vmem:[%s3411 + $0x30] sm:$0xf]
        %v3425 = vld [vmem:[%s3411 + $0x34] sm:$0xf]
        %v3426 = vld [vmem:[%s3411 + $0x38] sm:$0xf]
        %v3427 = vld [vmem:[%s3411 + $0x3c] sm:$0xf]
        %v3460 = vunpack.c.l.b16 %v3379
        %v3461 = vunpack.c.l.b16 %v3380
        %v3462 = vunpack.c.l.b16 %v3381
        %v3463 = vunpack.c.l.b16 %v3382
        %v3464 = vunpack.c.l.b16 %v3383
        %v3465 = vunpack.c.l.b16 %v3384
        %v3466 = vunpack.c.l.b16 %v3385
        %v3467 = vunpack.c.l.b16 %v3386
        %v3468 = vunpack.c.l.b16 %v3387
        %v3469 = vunpack.c.l.b16 %v3388
        %v3470 = vunpack.c.l.b16 %v3389
        %v3471 = vunpack.c.l.b16 %v3390
        %v3472 = vunpack.c.l.b16 %v3391
        %v3473 = vunpack.c.l.b16 %v3392
        %v3474 = vunpack.c.l.b16 %v3393
        %v3475 = vunpack.c.l.b16 %v3394
        %v3476 = vunpack.c.l.b16 %v3395
        %v3477 = vunpack.c.l.b16 %v3396
        %v3478 = vunpack.c.l.b16 %v3397
        %v3479 = vunpack.c.l.b16 %v3398
        %v3480 = vunpack.c.l.b16 %v3399
        %v3481 = vunpack.c.l.b16 %v3400
        %v3482 = vunpack.c.l.b16 %v3401
        %v3483 = vunpack.c.l.b16 %v3402
        %v3484 = vunpack.c.l.b16 %v3403
        %v3485 = vunpack.c.l.b16 %v3404
        %v3486 = vunpack.c.l.b16 %v3405
        %v3487 = vunpack.c.l.b16 %v3406
        %v3488 = vunpack.c.l.b16 %v3407
        %v3489 = vunpack.c.l.b16 %v3408
        %v3490 = vunpack.c.l.b16 %v3409
        %v3491 = vunpack.c.l.b16 %v3410
        %v3492 = vpack.c.b16 %v3461, %v3460
        %v3493 = vpack.c.b16 %v3463, %v3462
        %v3494 = vpack.c.b16 %v3465, %v3464
        %v3495 = vpack.c.b16 %v3467, %v3466
        %v3496 = vpack.c.b16 %v3469, %v3468
        %v3497 = vpack.c.b16 %v3471, %v3470
        %v3498 = vpack.c.b16 %v3473, %v3472
        %v3499 = vpack.c.b16 %v3475, %v3474
        %v3500 = vpack.c.b16 %v3477, %v3476
        %v3501 = vpack.c.b16 %v3479, %v3478
        %v3502 = vpack.c.b16 %v3481, %v3480
        %v3503 = vpack.c.b16 %v3483, %v3482
        %v3504 = vpack.c.b16 %v3485, %v3484
        %v3505 = vpack.c.b16 %v3487, %v3486
        %v3506 = vpack.c.b16 %v3489, %v3488
        %v3507 = vpack.c.b16 %v3491, %v3490
        %v3540 = vunpack.c.l.b16 %v3412
        %v3541 = vunpack.c.l.b16 %v3413
        %v3542 = vunpack.c.l.b16 %v3414
        %v3543 = vunpack.c.l.b16 %v3415
        %v3544 = vunpack.c.l.b16 %v3416
        %v3545 = vunpack.c.l.b16 %v3417
        %v3546 = vunpack.c.l.b16 %v3418
        %v3547 = vunpack.c.l.b16 %v3419
        %v3548 = vunpack.c.l.b16 %v3420
        %v3549 = vunpack.c.l.b16 %v3421
        %v3550 = vunpack.c.l.b16 %v3422
        %v3551 = vunpack.c.l.b16 %v3423
        %v3552 = vunpack.c.l.b16 %v3424
        %v3553 = vunpack.c.l.b16 %v3425
        %v3554 = vunpack.c.l.b16 %v3426
        %v3555 = vunpack.c.l.b16 %v3427
        %v3556 = vpack.c.b16 %v3541, %v3540
        %v3557 = vpack.c.b16 %v3543, %v3542
        %v3558 = vpack.c.b16 %v3545, %v3544
        %v3559 = vpack.c.b16 %v3547, %v3546
        %v3560 = vpack.c.b16 %v3549, %v3548
        %v3561 = vpack.c.b16 %v3551, %v3550
        %v3562 = vpack.c.b16 %v3553, %v3552
        %v3563 = vpack.c.b16 %v3555, %v3554
        %3572 = vmatprep.subr.bf16.mxu0 0
        %3573 = vmatpush1.bf16.msra.mxu0 %v3563
        %3574 = vmatprep.subr.bf16.mxu0 0
        %3575 = vmatpush1.bf16.msra.mxu0 %v3562
        %3576 = vmatprep.subr.bf16.mxu0 0
        %3577 = vmatpush1.bf16.msra.mxu0 %v3561
        %3578 = vmatprep.subr.bf16.mxu0 0
        %3579 = vmatpush1.bf16.msra.mxu0 %v3560
        %3580 = vmatprep.subr.bf16.mxu0 0
        %3581 = vmatpush1.bf16.msra.mxu0 %v3559
        %3582 = vmatprep.subr.bf16.mxu0 0
        %3583 = vmatpush1.bf16.msra.mxu0 %v3558
        %3584 = vmatprep.subr.bf16.mxu0 0
        %3585 = vmatpush1.bf16.msra.mxu0 %v3557
        %3586 = vmatprep.subr.bf16.mxu0 0
        %3587 = vmatpush1.bf16.msra.mxu0 %v3556
        %3588 = vmatprep.subr.bf16.mxu0 0
        %3589 = vmatpush2.bf16.msra.mxu0 0
        %3590 = vmatprep.subr.bf16.mxu0 0
        %3591 = vmatpush2.bf16.msra.mxu0 0
        %3592 = vmatprep.subr.bf16.mxu0 0
        %3593 = vmatpush2.bf16.msra.mxu0 0
        %3594 = vmatprep.subr.bf16.mxu0 0
        %3595 = vmatpush2.bf16.msra.mxu0 0
        %3596 = vmatprep.subr.bf16.mxu0 0
        %3597 = vmatpush2.bf16.msra.mxu0 0
        %3598 = vmatprep.subr.bf16.mxu0 0
        %3599 = vmatpush2.bf16.msra.mxu0 0
        %3600 = vmatprep.subr.bf16.mxu0 0
        %3601 = vmatpush2.bf16.msra.mxu0 0
        %3602 = vmatprep.subr.bf16.mxu0 0
        %3603 = vmatpush2.bf16.msra.mxu0 0
        %3604 = vmatprep.mubr.bf16.mxu0 0
        %3605 = vmatmul.mubr.bf16.gmra.mxu0 %v3492
        %v3606 = vpop.f32.mrf.mxu0
        %v3607 = vadd.f32 0.0, %v3606
        %v3608 = vpop.f32.mrf.mxu0
        %v3609 = vpop.f32.mrf.mxu0
        %v3610 = vadd.f32 0.0, %v3609
        %v3611 = vpop.f32.mrf.mxu0
        %3612 = vmatprep.mubr.bf16.mxu0 0
        %3613 = vmatmul.mubr.bf16.gmra.mxu0 %v3493
        %v3614 = vpop.f32.mrf.mxu0
        %v3615 = vadd.f32 0.0, %v3614
        %v3616 = vpop.f32.mrf.mxu0
        %v3617 = vpop.f32.mrf.mxu0
        %v3618 = vadd.f32 0.0, %v3617
        %v3619 = vpop.f32.mrf.mxu0
        %3620 = vmatprep.mubr.bf16.mxu0 0
        %3621 = vmatmul.mubr.bf16.gmra.mxu0 %v3494
        %v3622 = vpop.f32.mrf.mxu0
        %v3623 = vadd.f32 0.0, %v3622
        %v3624 = vpop.f32.mrf.mxu0
        %v3625 = vpop.f32.mrf.mxu0
        %v3626 = vadd.f32 0.0, %v3625
        %v3627 = vpop.f32.mrf.mxu0
        %3628 = vmatprep.mubr.bf16.mxu0 0
        %3629 = vmatmul.mubr.bf16.gmra.mxu0 %v3495
        %v3630 = vpop.f32.mrf.mxu0
        %v3631 = vadd.f32 0.0, %v3630
        %v3632 = vpop.f32.mrf.mxu0
        %v3633 = vpop.f32.mrf.mxu0
        %v3634 = vadd.f32 0.0, %v3633
        %v3635 = vpop.f32.mrf.mxu0
        %3636 = vmatprep.mubr.bf16.mxu0 0
        %3637 = vmatmul.mubr.bf16.gmra.mxu0 %v3496
        %v3638 = vpop.f32.mrf.mxu0
        %v3639 = vadd.f32 0.0, %v3638
        %v3640 = vpop.f32.mrf.mxu0
        %v3641 = vpop.f32.mrf.mxu0
        %v3642 = vadd.f32 0.0, %v3641
        %v3643 = vpop.f32.mrf.mxu0
        %3644 = vmatprep.mubr.bf16.mxu0 0
        %3645 = vmatmul.mubr.bf16.gmra.mxu0 %v3497
        %v3646 = vpop.f32.mrf.mxu0
        %v3647 = vadd.f32 0.0, %v3646
        %v3648 = vpop.f32.mrf.mxu0
        %v3649 = vpop.f32.mrf.mxu0
        %v3650 = vadd.f32 0.0, %v3649
        %v3651 = vpop.f32.mrf.mxu0
        %3652 = vmatprep.mubr.bf16.mxu0 0
        %3653 = vmatmul.mubr.bf16.gmra.mxu0 %v3498
        %v3654 = vpop.f32.mrf.mxu0
        %v3655 = vadd.f32 0.0, %v3654
        %v3656 = vpop.f32.mrf.mxu0
        %v3657 = vpop.f32.mrf.mxu0
        %v3658 = vadd.f32 0.0, %v3657
        %v3659 = vpop.f32.mrf.mxu0
        %3660 = vmatprep.mubr.bf16.mxu0 0
        %3661 = vmatmul.mubr.bf16.gmra.mxu0 %v3499
        %v3662 = vpop.f32.mrf.mxu0
        %v3663 = vadd.f32 0.0, %v3662
        %v3664 = vpop.f32.mrf.mxu0
        %v3665 = vpop.f32.mrf.mxu0
        %v3666 = vadd.f32 0.0, %v3665
        %v3667 = vpop.f32.mrf.mxu0
        %3668 = vmatprep.mubr.bf16.mxu0 0
        %3669 = vmatmul.mubr.bf16.gmra.mxu0 %v3500
        %v3670 = vpop.f32.mrf.mxu0
        %v3671 = vadd.f32 0.0, %v3670
        %v3672 = vpop.f32.mrf.mxu0
        %v3673 = vpop.f32.mrf.mxu0
        %v3674 = vadd.f32 0.0, %v3673
        %v3675 = vpop.f32.mrf.mxu0
        %3676 = vmatprep.mubr.bf16.mxu0 0
        %3677 = vmatmul.mubr.bf16.gmra.mxu0 %v3501
        %v3678 = vpop.f32.mrf.mxu0
        %v3679 = vadd.f32 0.0, %v3678
        %v3680 = vpop.f32.mrf.mxu0
        %v3681 = vpop.f32.mrf.mxu0
        %v3682 = vadd.f32 0.0, %v3681
        %v3683 = vpop.f32.mrf.mxu0
        %3684 = vmatprep.mubr.bf16.mxu0 0
        %3685 = vmatmul.mubr.bf16.gmra.mxu0 %v3502
        %v3686 = vpop.f32.mrf.mxu0
        %v3687 = vadd.f32 0.0, %v3686
        %v3688 = vpop.f32.mrf.mxu0
        %v3689 = vpop.f32.mrf.mxu0
        %v3690 = vadd.f32 0.0, %v3689
        %v3691 = vpop.f32.mrf.mxu0
        %3692 = vmatprep.mubr.bf16.mxu0 0
        %3693 = vmatmul.mubr.bf16.gmra.mxu0 %v3503
        %v3694 = vpop.f32.mrf.mxu0
        %v3695 = vadd.f32 0.0, %v3694
        %v3696 = vpop.f32.mrf.mxu0
        %v3697 = vpop.f32.mrf.mxu0
        %v3698 = vadd.f32 0.0, %v3697
        %v3699 = vpop.f32.mrf.mxu0
        %3700 = vmatprep.mubr.bf16.mxu0 0
        %3701 = vmatmul.mubr.bf16.gmra.mxu0 %v3504
        %v3702 = vpop.f32.mrf.mxu0
        %v3703 = vadd.f32 0.0, %v3702
        %v3704 = vpop.f32.mrf.mxu0
        %v3705 = vpop.f32.mrf.mxu0
        %v3706 = vadd.f32 0.0, %v3705
        %v3707 = vpop.f32.mrf.mxu0
        %3708 = vmatprep.mubr.bf16.mxu0 0
        %3709 = vmatmul.mubr.bf16.gmra.mxu0 %v3505
        %v3710 = vpop.f32.mrf.mxu0
        %v3711 = vadd.f32 0.0, %v3710
        %v3712 = vpop.f32.mrf.mxu0
        %v3713 = vpop.f32.mrf.mxu0
        %v3714 = vadd.f32 0.0, %v3713
        %v3715 = vpop.f32.mrf.mxu0
        %3716 = vmatprep.mubr.bf16.mxu0 0
        %3717 = vmatmul.mubr.bf16.gmra.mxu0 %v3506
        %v3718 = vpop.f32.mrf.mxu0
        %v3719 = vadd.f32 0.0, %v3718
        %v3720 = vpop.f32.mrf.mxu0
        %v3721 = vpop.f32.mrf.mxu0
        %v3722 = vadd.f32 0.0, %v3721
        %v3723 = vpop.f32.mrf.mxu0
        %3724 = vmatprep.mubr.bf16.mxu0 0
        %3725 = vmatmul.mubr.bf16.gmra.mxu0 %v3507
        %v3726 = vpop.f32.mrf.mxu0
        %v3727 = vadd.f32 0.0, %v3726
        %v3728 = vpop.f32.mrf.mxu0
        %v3729 = vpop.f32.mrf.mxu0
        %v3730 = vadd.f32 0.0, %v3729
        %v3731 = vpop.f32.mrf.mxu0
        %3732 = vdwg.mxu0
        %v3733 = vadd.f32 %v3346, %v3607
        %v3734 = vadd.f32 %v3347, %v3610
        %v3735 = vadd.f32 %v3348, %v3615
        %v3736 = vadd.f32 %v3349, %v3618
        %v3737 = vadd.f32 %v3350, %v3623
        %v3738 = vadd.f32 %v3351, %v3626
        %v3739 = vadd.f32 %v3352, %v3631
        %v3740 = vadd.f32 %v3353, %v3634
        %v3741 = vadd.f32 %v3354, %v3639
        %v3742 = vadd.f32 %v3355, %v3642
        %v3743 = vadd.f32 %v3356, %v3647
        %v3744 = vadd.f32 %v3357, %v3650
        %v3745 = vadd.f32 %v3358, %v3655
        %v3746 = vadd.f32 %v3359, %v3658
        %v3747 = vadd.f32 %v3360, %v3663
        %v3748 = vadd.f32 %v3361, %v3666
        %v3749 = vadd.f32 %v3362, %v3671
        %v3750 = vadd.f32 %v3363, %v3674
        %v3751 = vadd.f32 %v3364, %v3679
        %v3752 = vadd.f32 %v3365, %v3682
        %v3753 = vadd.f32 %v3366, %v3687
        %v3754 = vadd.f32 %v3367, %v3690
        %v3755 = vadd.f32 %v3368, %v3695
        %v3756 = vadd.f32 %v3369, %v3698
        %v3757 = vadd.f32 %v3370, %v3703
        %v3758 = vadd.f32 %v3371, %v3706
        %v3759 = vadd.f32 %v3372, %v3711
        %v3760 = vadd.f32 %v3373, %v3714
        %v3761 = vadd.f32 %v3374, %v3719
        %v3762 = vadd.f32 %v3375, %v3722
        %v3763 = vadd.f32 %v3376, %v3727
        %v3764 = vadd.f32 %v3377, %v3730
        %v3765 = vld [vmem:[%s3378] sm:$0xf]
        %v3766 = vld [vmem:[%s3378 + $0x4] sm:$0xf]
        %v3767 = vld [vmem:[%s3378 + $0x8] sm:$0x1]
        %v3768 = vld [vmem:[%s3378 + $0xc] sm:$0xf]
        %v3769 = vld [vmem:[%s3378 + $0x10] sm:$0xf]
        %v3770 = vld [vmem:[%s3378 + $0x14] sm:$0x1]
        %v3771 = vld [vmem:[%s3378 + $0x18] sm:$0xf]
        %v3772 = vld [vmem:[%s3378 + $0x1c] sm:$0xf]
        %v3773 = vld [vmem:[%s3378 + $0x20] sm:$0x1]
        %v3774 = vld [vmem:[%s3378 + $0x24] sm:$0xf]
        %v3775 = vld [vmem:[%s3378 + $0x28] sm:$0xf]
        %v3776 = vld [vmem:[%s3378 + $0x2c] sm:$0x1]
        %v3777 = vld [vmem:[%s3378 + $0x30] sm:$0xf]
        %v3778 = vld [vmem:[%s3378 + $0x34] sm:$0xf]
        %v3779 = vld [vmem:[%s3378 + $0x38] sm:$0x1]
        %v3780 = vld [vmem:[%s3378 + $0x3c] sm:$0xf]
        %v3781 = vld [vmem:[%s3378 + $0x40] sm:$0xf]
        %v3782 = vld [vmem:[%s3378 + $0x44] sm:$0x1]
        %v3783 = vld [vmem:[%s3378 + $0x48] sm:$0xf]
        %v3784 = vld [vmem:[%s3378 + $0x4c] sm:$0xf]
        %v3785 = vld [vmem:[%s3378 + $0x50] sm:$0x1]
        %v3786 = vld [vmem:[%s3378 + $0x54] sm:$0xf]
        %v3787 = vld [vmem:[%s3378 + $0x58] sm:$0xf]
        %v3788 = vld [vmem:[%s3378 + $0x5c] sm:$0x1]
        %v3789 = vld [vmem:[%s3378 + $0x60] sm:$0xf]
        %v3790 = vld [vmem:[%s3378 + $0x64] sm:$0xf]
        %v3791 = vld [vmem:[%s3378 + $0x68] sm:$0x1]
        %v3792 = vld [vmem:[%s3378 + $0x6c] sm:$0xf]
        %v3793 = vld [vmem:[%s3378 + $0x70] sm:$0xf]
        %v3794 = vld [vmem:[%s3378 + $0x74] sm:$0x1]
        %v3795 = vld [vmem:[%s3378 + $0x78] sm:$0xf]
        %v3796 = vld [vmem:[%s3378 + $0x7c] sm:$0xf]
        %v3797 = vld [vmem:[%s3378 + $0x80] sm:$0x1]
        %v3798 = vld [vmem:[%s3378 + $0x84] sm:$0xf]
        %v3799 = vld [vmem:[%s3378 + $0x88] sm:$0xf]
        %v3800 = vld [vmem:[%s3378 + $0x8c] sm:$0x1]
        %v3801 = vld [vmem:[%s3378 + $0x90] sm:$0xf]
        %v3802 = vld [vmem:[%s3378 + $0x94] sm:$0xf]
        %v3803 = vld [vmem:[%s3378 + $0x98] sm:$0x1]
        %v3804 = vld [vmem:[%s3378 + $0x9c] sm:$0xf]
        %v3805 = vld [vmem:[%s3378 + $0xa0] sm:$0xf]
        %v3806 = vld [vmem:[%s3378 + $0xa4] sm:$0x1]
        %v3807 = vld [vmem:[%s3378 + $0xa8] sm:$0xf]
        %v3808 = vld [vmem:[%s3378 + $0xac] sm:$0xf]
        %v3809 = vld [vmem:[%s3378 + $0xb0] sm:$0x1]
        %v3810 = vld [vmem:[%s3378 + $0xb4] sm:$0xf]
        %v3811 = vld [vmem:[%s3378 + $0xb8] sm:$0xf]
        %v3812 = vld [vmem:[%s3378 + $0xbc] sm:$0x1]
        %v3814 = vshrl.u32 %v3765, 16
        %v3816 = vrot.slane %v3814, 4
        %v3817 = vshll.u32 %v3765, 16
        %v3819 = vrot.slane %v3817, 5
        %v3820 = vor.u32 %v3816, %v3819
        %v3821 = vrot.slane %v3820, 4
        %v3823 = vshll.u32 %v3766, 16
        %v3825 = vrot.slane %v3823, 5
        %v3826 = vsel %vm274, %v3821, %v3825
        %v3827 = vshrl.u32 %v3766, 16
        %v3829 = vrot.slane %v3827, 4
        %v3830 = vor.u32 %v3829, %v3825
        %v3831 = vrot.slane %v3830, 4
        %v3833 = vshll.u32 %v3767, 16
        %v3835 = vrot.slane %v3833, 5
        %v3836 = vsel %vm274, %v3831, %v3835
        %v3838 = vshrl.u32 %v3768, 16
        %v3840 = vrot.slane %v3838, 4
        %v3841 = vshll.u32 %v3768, 16
        %v3843 = vrot.slane %v3841, 5
        %v3844 = vor.u32 %v3840, %v3843
        %v3845 = vrot.slane %v3844, 4
        %v3847 = vshll.u32 %v3769, 16
        %v3849 = vrot.slane %v3847, 5
        %v3850 = vsel %vm274, %v3845, %v3849
        %v3851 = vshrl.u32 %v3769, 16
        %v3853 = vrot.slane %v3851, 4
        %v3854 = vor.u32 %v3853, %v3849
        %v3855 = vrot.slane %v3854, 4
        %v3857 = vshll.u32 %v3770, 16
        %v3859 = vrot.slane %v3857, 5
        %v3860 = vsel %vm274, %v3855, %v3859
        %v3862 = vshrl.u32 %v3771, 16
        %v3864 = vrot.slane %v3862, 4
        %v3865 = vshll.u32 %v3771, 16
        %v3867 = vrot.slane %v3865, 5
        %v3868 = vor.u32 %v3864, %v3867
        %v3869 = vrot.slane %v3868, 4
        %v3871 = vshll.u32 %v3772, 16
        %v3873 = vrot.slane %v3871, 5
        %v3874 = vsel %vm274, %v3869, %v3873
        %v3875 = vshrl.u32 %v3772, 16
        %v3877 = vrot.slane %v3875, 4
        %v3878 = vor.u32 %v3877, %v3873
        %v3879 = vrot.slane %v3878, 4
        %v3881 = vshll.u32 %v3773, 16
        %v3883 = vrot.slane %v3881, 5
        %v3884 = vsel %vm274, %v3879, %v3883
        %v3886 = vshrl.u32 %v3774, 16
        %v3888 = vrot.slane %v3886, 4
        %v3889 = vshll.u32 %v3774, 16
        %v3891 = vrot.slane %v3889, 5
        %v3892 = vor.u32 %v3888, %v3891
        %v3893 = vrot.slane %v3892, 4
        %v3895 = vshll.u32 %v3775, 16
        %v3897 = vrot.slane %v3895, 5
        %v3898 = vsel %vm274, %v3893, %v3897
        %v3899 = vshrl.u32 %v3775, 16
        %v3901 = vrot.slane %v3899, 4
        %v3902 = vor.u32 %v3901, %v3897
        %v3903 = vrot.slane %v3902, 4
        %v3905 = vshll.u32 %v3776, 16
        %v3907 = vrot.slane %v3905, 5
        %v3908 = vsel %vm274, %v3903, %v3907
        %v3910 = vshrl.u32 %v3777, 16
        %v3912 = vrot.slane %v3910, 4
        %v3913 = vshll.u32 %v3777, 16
        %v3915 = vrot.slane %v3913, 5
        %v3916 = vor.u32 %v3912, %v3915
        %v3917 = vrot.slane %v3916, 4
        %v3919 = vshll.u32 %v3778, 16
        %v3921 = vrot.slane %v3919, 5
        %v3922 = vsel %vm274, %v3917, %v3921
        %v3923 = vshrl.u32 %v3778, 16
        %v3925 = vrot.slane %v3923, 4
        %v3926 = vor.u32 %v3925, %v3921
        %v3927 = vrot.slane %v3926, 4
        %v3929 = vshll.u32 %v3779, 16
        %v3931 = vrot.slane %v3929, 5
        %v3932 = vsel %vm274, %v3927, %v3931
        %v3934 = vshrl.u32 %v3780, 16
        %v3936 = vrot.slane %v3934, 4
        %v3937 = vshll.u32 %v3780, 16
        %v3939 = vrot.slane %v3937, 5
        %v3940 = vor.u32 %v3936, %v3939
        %v3941 = vrot.slane %v3940, 4
        %v3943 = vshll.u32 %v3781, 16
        %v3945 = vrot.slane %v3943, 5
        %v3946 = vsel %vm274, %v3941, %v3945
        %v3947 = vshrl.u32 %v3781, 16
        %v3949 = vrot.slane %v3947, 4
        %v3950 = vor.u32 %v3949, %v3945
        %v3951 = vrot.slane %v3950, 4
        %v3953 = vshll.u32 %v3782, 16
        %v3955 = vrot.slane %v3953, 5
        %v3956 = vsel %vm274, %v3951, %v3955
        %v3958 = vshrl.u32 %v3783, 16
        %v3960 = vrot.slane %v3958, 4
        %v3961 = vshll.u32 %v3783, 16
        %v3963 = vrot.slane %v3961, 5
        %v3964 = vor.u32 %v3960, %v3963
        %v3965 = vrot.slane %v3964, 4
        %v3967 = vshll.u32 %v3784, 16
        %v3969 = vrot.slane %v3967, 5
        %v3970 = vsel %vm274, %v3965, %v3969
        %v3971 = vshrl.u32 %v3784, 16
        %v3973 = vrot.slane %v3971, 4
        %v3974 = vor.u32 %v3973, %v3969
        %v3975 = vrot.slane %v3974, 4
        %v3977 = vshll.u32 %v3785, 16
        %v3979 = vrot.slane %v3977, 5
        %v3980 = vsel %vm274, %v3975, %v3979
        %v3982 = vshrl.u32 %v3786, 16
        %v3984 = vrot.slane %v3982, 4
        %v3985 = vshll.u32 %v3786, 16
        %v3987 = vrot.slane %v3985, 5
        %v3988 = vor.u32 %v3984, %v3987
        %v3989 = vrot.slane %v3988, 4
        %v3991 = vshll.u32 %v3787, 16
        %v3993 = vrot.slane %v3991, 5
        %v3994 = vsel %vm274, %v3989, %v3993
        %v3995 = vshrl.u32 %v3787, 16
        %v3997 = vrot.slane %v3995, 4
        %v3998 = vor.u32 %v3997, %v3993
        %v3999 = vrot.slane %v3998, 4
        %v4001 = vshll.u32 %v3788, 16
        %v4003 = vrot.slane %v4001, 5
        %v4004 = vsel %vm274, %v3999, %v4003
        %v4006 = vshrl.u32 %v3789, 16
        %v4008 = vrot.slane %v4006, 4
        %v4009 = vshll.u32 %v3789, 16
        %v4011 = vrot.slane %v4009, 5
        %v4012 = vor.u32 %v4008, %v4011
        %v4013 = vrot.slane %v4012, 4
        %v4015 = vshll.u32 %v3790, 16
        %v4017 = vrot.slane %v4015, 5
        %v4018 = vsel %vm274, %v4013, %v4017
        %v4019 = vshrl.u32 %v3790, 16
        %v4021 = vrot.slane %v4019, 4
        %v4022 = vor.u32 %v4021, %v4017
        %v4023 = vrot.slane %v4022, 4
        %v4025 = vshll.u32 %v3791, 16
        %v4027 = vrot.slane %v4025, 5
        %v4028 = vsel %vm274, %v4023, %v4027
        %v4030 = vshrl.u32 %v3792, 16
        %v4032 = vrot.slane %v4030, 4
        %v4033 = vshll.u32 %v3792, 16
        %v4035 = vrot.slane %v4033, 5
        %v4036 = vor.u32 %v4032, %v4035
        %v4037 = vrot.slane %v4036, 4
        %v4039 = vshll.u32 %v3793, 16
        %v4041 = vrot.slane %v4039, 5
        %v4042 = vsel %vm274, %v4037, %v4041
        %v4043 = vshrl.u32 %v3793, 16
        %v4045 = vrot.slane %v4043, 4
        %v4046 = vor.u32 %v4045, %v4041
        %v4047 = vrot.slane %v4046, 4
        %v4049 = vshll.u32 %v3794, 16
        %v4051 = vrot.slane %v4049, 5
        %v4052 = vsel %vm274, %v4047, %v4051
        %v4054 = vshrl.u32 %v3795, 16
        %v4056 = vrot.slane %v4054, 4
        %v4057 = vshll.u32 %v3795, 16
        %v4059 = vrot.slane %v4057, 5
        %v4060 = vor.u32 %v4056, %v4059
        %v4061 = vrot.slane %v4060, 4
        %v4063 = vshll.u32 %v3796, 16
        %v4065 = vrot.slane %v4063, 5
        %v4066 = vsel %vm274, %v4061, %v4065
        %v4067 = vshrl.u32 %v3796, 16
        %v4069 = vrot.slane %v4067, 4
        %v4070 = vor.u32 %v4069, %v4065
        %v4071 = vrot.slane %v4070, 4
        %v4073 = vshll.u32 %v3797, 16
        %v4075 = vrot.slane %v4073, 5
        %v4076 = vsel %vm274, %v4071, %v4075
        %v4078 = vshrl.u32 %v3798, 16
        %v4080 = vrot.slane %v4078, 4
        %v4081 = vshll.u32 %v3798, 16
        %v4083 = vrot.slane %v4081, 5
        %v4084 = vor.u32 %v4080, %v4083
        %v4085 = vrot.slane %v4084, 4
        %v4087 = vshll.u32 %v3799, 16
        %v4089 = vrot.slane %v4087, 5
        %v4090 = vsel %vm274, %v4085, %v4089
        %v4091 = vshrl.u32 %v3799, 16
        %v4093 = vrot.slane %v4091, 4
        %v4094 = vor.u32 %v4093, %v4089
        %v4095 = vrot.slane %v4094, 4
        %v4097 = vshll.u32 %v3800, 16
        %v4099 = vrot.slane %v4097, 5
        %v4100 = vsel %vm274, %v4095, %v4099
        %v4102 = vshrl.u32 %v3801, 16
        %v4104 = vrot.slane %v4102, 4
        %v4105 = vshll.u32 %v3801, 16
        %v4107 = vrot.slane %v4105, 5
        %v4108 = vor.u32 %v4104, %v4107
        %v4109 = vrot.slane %v4108, 4
        %v4111 = vshll.u32 %v3802, 16
        %v4113 = vrot.slane %v4111, 5
        %v4114 = vsel %vm274, %v4109, %v4113
        %v4115 = vshrl.u32 %v3802, 16
        %v4117 = vrot.slane %v4115, 4
        %v4118 = vor.u32 %v4117, %v4113
        %v4119 = vrot.slane %v4118, 4
        %v4121 = vshll.u32 %v3803, 16
        %v4123 = vrot.slane %v4121, 5
        %v4124 = vsel %vm274, %v4119, %v4123
        %v4126 = vshrl.u32 %v3804, 16
        %v4128 = vrot.slane %v4126, 4
        %v4129 = vshll.u32 %v3804, 16
        %v4131 = vrot.slane %v4129, 5
        %v4132 = vor.u32 %v4128, %v4131
        %v4133 = vrot.slane %v4132, 4
        %v4135 = vshll.u32 %v3805, 16
        %v4137 = vrot.slane %v4135, 5
        %v4138 = vsel %vm274, %v4133, %v4137
        %v4139 = vshrl.u32 %v3805, 16
        %v4141 = vrot.slane %v4139, 4
        %v4142 = vor.u32 %v4141, %v4137
        %v4143 = vrot.slane %v4142, 4
        %v4145 = vshll.u32 %v3806, 16
        %v4147 = vrot.slane %v4145, 5
        %v4148 = vsel %vm274, %v4143, %v4147
        %v4150 = vshrl.u32 %v3807, 16
        %v4152 = vrot.slane %v4150, 4
        %v4153 = vshll.u32 %v3807, 16
        %v4155 = vrot.slane %v4153, 5
        %v4156 = vor.u32 %v4152, %v4155
        %v4157 = vrot.slane %v4156, 4
        %v4159 = vshll.u32 %v3808, 16
        %v4161 = vrot.slane %v4159, 5
        %v4162 = vsel %vm274, %v4157, %v4161
        %v4163 = vshrl.u32 %v3808, 16
        %v4165 = vrot.slane %v4163, 4
        %v4166 = vor.u32 %v4165, %v4161
        %v4167 = vrot.slane %v4166, 4
        %v4169 = vshll.u32 %v3809, 16
        %v4171 = vrot.slane %v4169, 5
        %v4172 = vsel %vm274, %v4167, %v4171
        %v4174 = vshrl.u32 %v3810, 16
        %v4176 = vrot.slane %v4174, 4
        %v4177 = vshll.u32 %v3810, 16
        %v4179 = vrot.slane %v4177, 5
        %v4180 = vor.u32 %v4176, %v4179
        %v4181 = vrot.slane %v4180, 4
        %v4183 = vshll.u32 %v3811, 16
        %v4185 = vrot.slane %v4183, 5
        %v4186 = vsel %vm274, %v4181, %v4185
        %v4187 = vshrl.u32 %v3811, 16
        %v4189 = vrot.slane %v4187, 4
        %v4190 = vor.u32 %v4189, %v4185
        %v4191 = vrot.slane %v4190, 4
        %v4193 = vshll.u32 %v3812, 16
        %v4195 = vrot.slane %v4193, 5
        %v4196 = vsel %vm274, %v4191, %v4195
        %s4197 = scalar_lea.vmem %s1, 448
        %v4198 = vld [vmem:[%s4197] sm:$0xf]
        %v4199 = vld [vmem:[%s4197 + $0x4] sm:$0xf]
        %v4200 = vld [vmem:[%s4197 + $0x8] sm:$0xf]
        %v4201 = vld [vmem:[%s4197 + $0xc] sm:$0xf]
        %v4202 = vld [vmem:[%s4197 + $0x10] sm:$0xf]
        %v4203 = vld [vmem:[%s4197 + $0x14] sm:$0xf]
        %v4204 = vld [vmem:[%s4197 + $0x18] sm:$0xf]
        %v4205 = vld [vmem:[%s4197 + $0x1c] sm:$0xf]
        %v4206 = vld [vmem:[%s4197 + $0x20] sm:$0xf]
        %v4207 = vld [vmem:[%s4197 + $0x24] sm:$0xf]
        %v4208 = vld [vmem:[%s4197 + $0x28] sm:$0xf]
        %v4209 = vld [vmem:[%s4197 + $0x2c] sm:$0xf]
        %v4210 = vld [vmem:[%s4197 + $0x30] sm:$0xf]
        %v4211 = vld [vmem:[%s4197 + $0x34] sm:$0xf]
        %v4212 = vld [vmem:[%s4197 + $0x38] sm:$0xf]
        %v4213 = vld [vmem:[%s4197 + $0x3c] sm:$0xf]
        %v4214 = vunpack.c.l.b16 %v3826
        %v4215 = vunpack.c.l.b16 %v3836
        %v4216 = vunpack.c.l.b16 %v3850
        %v4217 = vunpack.c.l.b16 %v3860
        %v4218 = vunpack.c.l.b16 %v3874
        %v4219 = vunpack.c.l.b16 %v3884
        %v4220 = vunpack.c.l.b16 %v3898
        %v4221 = vunpack.c.l.b16 %v3908
        %v4222 = vunpack.c.l.b16 %v3922
        %v4223 = vunpack.c.l.b16 %v3932
        %v4224 = vunpack.c.l.b16 %v3946
        %v4225 = vunpack.c.l.b16 %v3956
        %v4226 = vunpack.c.l.b16 %v3970
        %v4227 = vunpack.c.l.b16 %v3980
        %v4228 = vunpack.c.l.b16 %v3994
        %v4229 = vunpack.c.l.b16 %v4004
        %v4230 = vunpack.c.l.b16 %v4018
        %v4231 = vunpack.c.l.b16 %v4028
        %v4232 = vunpack.c.l.b16 %v4042
        %v4233 = vunpack.c.l.b16 %v4052
        %v4234 = vunpack.c.l.b16 %v4066
        %v4235 = vunpack.c.l.b16 %v4076
        %v4236 = vunpack.c.l.b16 %v4090
        %v4237 = vunpack.c.l.b16 %v4100
        %v4238 = vunpack.c.l.b16 %v4114
        %v4239 = vunpack.c.l.b16 %v4124
        %v4240 = vunpack.c.l.b16 %v4138
        %v4241 = vunpack.c.l.b16 %v4148
        %v4242 = vunpack.c.l.b16 %v4162
        %v4243 = vunpack.c.l.b16 %v4172
        %v4244 = vunpack.c.l.b16 %v4186
        %v4245 = vunpack.c.l.b16 %v4196
        %v4246 = vpack.c.b16 %v4215, %v4214
        %v4247 = vpack.c.b16 %v4217, %v4216
        %v4248 = vpack.c.b16 %v4219, %v4218
        %v4249 = vpack.c.b16 %v4221, %v4220
        %v4250 = vpack.c.b16 %v4223, %v4222
        %v4251 = vpack.c.b16 %v4225, %v4224
        %v4252 = vpack.c.b16 %v4227, %v4226
        %v4253 = vpack.c.b16 %v4229, %v4228
        %v4254 = vpack.c.b16 %v4231, %v4230
        %v4255 = vpack.c.b16 %v4233, %v4232
        %v4256 = vpack.c.b16 %v4235, %v4234
        %v4257 = vpack.c.b16 %v4237, %v4236
        %v4258 = vpack.c.b16 %v4239, %v4238
        %v4259 = vpack.c.b16 %v4241, %v4240
        %v4260 = vpack.c.b16 %v4243, %v4242
        %v4261 = vpack.c.b16 %v4245, %v4244
        %v4294 = vunpack.c.l.b16 %v4198
        %v4295 = vunpack.c.l.b16 %v4199
        %v4296 = vunpack.c.l.b16 %v4200
        %v4297 = vunpack.c.l.b16 %v4201
        %v4298 = vunpack.c.l.b16 %v4202
        %v4299 = vunpack.c.l.b16 %v4203
        %v4300 = vunpack.c.l.b16 %v4204
        %v4301 = vunpack.c.l.b16 %v4205
        %v4302 = vunpack.c.l.b16 %v4206
        %v4303 = vunpack.c.l.b16 %v4207
        %v4304 = vunpack.c.l.b16 %v4208
        %v4305 = vunpack.c.l.b16 %v4209
        %v4306 = vunpack.c.l.b16 %v4210
        %v4307 = vunpack.c.l.b16 %v4211
        %v4308 = vunpack.c.l.b16 %v4212
        %v4309 = vunpack.c.l.b16 %v4213
        %v4310 = vpack.c.b16 %v4295, %v4294
        %v4311 = vpack.c.b16 %v4297, %v4296
        %v4312 = vpack.c.b16 %v4299, %v4298
        %v4313 = vpack.c.b16 %v4301, %v4300
        %v4314 = vpack.c.b16 %v4303, %v4302
        %v4315 = vpack.c.b16 %v4305, %v4304
        %v4316 = vpack.c.b16 %v4307, %v4306
        %v4317 = vpack.c.b16 %v4309, %v4308
        %4326 = vmatprep.subr.bf16.mxu0 0
        %4327 = vmatpush1.bf16.msra.mxu0 %v4317
        %4328 = vmatprep.subr.bf16.mxu0 0
        %4329 = vmatpush1.bf16.msra.mxu0 %v4316
        %4330 = vmatprep.subr.bf16.mxu0 0
        %4331 = vmatpush1.bf16.msra.mxu0 %v4315
        %4332 = vmatprep.subr.bf16.mxu0 0
        %4333 = vmatpush1.bf16.msra.mxu0 %v4314
        %4334 = vmatprep.subr.bf16.mxu0 0
        %4335 = vmatpush1.bf16.msra.mxu0 %v4313
        %4336 = vmatprep.subr.bf16.mxu0 0
        %4337 = vmatpush1.bf16.msra.mxu0 %v4312
        %4338 = vmatprep.subr.bf16.mxu0 0
        %4339 = vmatpush1.bf16.msra.mxu0 %v4311
        %4340 = vmatprep.subr.bf16.mxu0 0
        %4341 = vmatpush1.bf16.msra.mxu0 %v4310
        %4342 = vmatprep.subr.bf16.mxu0 0
        %4343 = vmatpush2.bf16.msra.mxu0 0
        %4344 = vmatprep.subr.bf16.mxu0 0
        %4345 = vmatpush2.bf16.msra.mxu0 0
        %4346 = vmatprep.subr.bf16.mxu0 0
        %4347 = vmatpush2.bf16.msra.mxu0 0
        %4348 = vmatprep.subr.bf16.mxu0 0
        %4349 = vmatpush2.bf16.msra.mxu0 0
        %4350 = vmatprep.subr.bf16.mxu0 0
        %4351 = vmatpush2.bf16.msra.mxu0 0
        %4352 = vmatprep.subr.bf16.mxu0 0
        %4353 = vmatpush2.bf16.msra.mxu0 0
        %4354 = vmatprep.subr.bf16.mxu0 0
        %4355 = vmatpush2.bf16.msra.mxu0 0
        %4356 = vmatprep.subr.bf16.mxu0 0
        %4357 = vmatpush2.bf16.msra.mxu0 0
        %4358 = vmatprep.mubr.bf16.mxu0 0
        %4359 = vmatmul.mubr.bf16.gmra.mxu0 %v4246
        %v4360 = vpop.f32.mrf.mxu0
        %v4361 = vadd.f32 0.0, %v4360
        %v4362 = vpop.f32.mrf.mxu0
        %v4363 = vpop.f32.mrf.mxu0
        %v4364 = vadd.f32 0.0, %v4363
        %v4365 = vpop.f32.mrf.mxu0
        %4366 = vmatprep.mubr.bf16.mxu0 0
        %4367 = vmatmul.mubr.bf16.gmra.mxu0 %v4247
        %v4368 = vpop.f32.mrf.mxu0
        %v4369 = vadd.f32 0.0, %v4368
        %v4370 = vpop.f32.mrf.mxu0
        %v4371 = vpop.f32.mrf.mxu0
        %v4372 = vadd.f32 0.0, %v4371
        %v4373 = vpop.f32.mrf.mxu0
        %4374 = vmatprep.mubr.bf16.mxu0 0
        %4375 = vmatmul.mubr.bf16.gmra.mxu0 %v4248
        %v4376 = vpop.f32.mrf.mxu0
        %v4377 = vadd.f32 0.0, %v4376
        %v4378 = vpop.f32.mrf.mxu0
        %v4379 = vpop.f32.mrf.mxu0
        %v4380 = vadd.f32 0.0, %v4379
        %v4381 = vpop.f32.mrf.mxu0
        %4382 = vmatprep.mubr.bf16.mxu0 0
        %4383 = vmatmul.mubr.bf16.gmra.mxu0 %v4249
        %v4384 = vpop.f32.mrf.mxu0
        %v4385 = vadd.f32 0.0, %v4384
        %v4386 = vpop.f32.mrf.mxu0
        %v4387 = vpop.f32.mrf.mxu0
        %v4388 = vadd.f32 0.0, %v4387
        %v4389 = vpop.f32.mrf.mxu0
        %4390 = vmatprep.mubr.bf16.mxu0 0
        %4391 = vmatmul.mubr.bf16.gmra.mxu0 %v4250
        %v4392 = vpop.f32.mrf.mxu0
        %v4393 = vadd.f32 0.0, %v4392
        %v4394 = vpop.f32.mrf.mxu0
        %v4395 = vpop.f32.mrf.mxu0
        %v4396 = vadd.f32 0.0, %v4395
        %v4397 = vpop.f32.mrf.mxu0
        %4398 = vmatprep.mubr.bf16.mxu0 0
        %4399 = vmatmul.mubr.bf16.gmra.mxu0 %v4251
        %v4400 = vpop.f32.mrf.mxu0
        %v4401 = vadd.f32 0.0, %v4400
        %v4402 = vpop.f32.mrf.mxu0
        %v4403 = vpop.f32.mrf.mxu0
        %v4404 = vadd.f32 0.0, %v4403
        %v4405 = vpop.f32.mrf.mxu0
        %4406 = vmatprep.mubr.bf16.mxu0 0
        %4407 = vmatmul.mubr.bf16.gmra.mxu0 %v4252
        %v4408 = vpop.f32.mrf.mxu0
        %v4409 = vadd.f32 0.0, %v4408
        %v4410 = vpop.f32.mrf.mxu0
        %v4411 = vpop.f32.mrf.mxu0
        %v4412 = vadd.f32 0.0, %v4411
        %v4413 = vpop.f32.mrf.mxu0
        %4414 = vmatprep.mubr.bf16.mxu0 0
        %4415 = vmatmul.mubr.bf16.gmra.mxu0 %v4253
        %v4416 = vpop.f32.mrf.mxu0
        %v4417 = vadd.f32 0.0, %v4416
        %v4418 = vpop.f32.mrf.mxu0
        %v4419 = vpop.f32.mrf.mxu0
        %v4420 = vadd.f32 0.0, %v4419
        %v4421 = vpop.f32.mrf.mxu0
        %4422 = vmatprep.mubr.bf16.mxu0 0
        %4423 = vmatmul.mubr.bf16.gmra.mxu0 %v4254
        %v4424 = vpop.f32.mrf.mxu0
        %v4425 = vadd.f32 0.0, %v4424
        %v4426 = vpop.f32.mrf.mxu0
        %v4427 = vpop.f32.mrf.mxu0
        %v4428 = vadd.f32 0.0, %v4427
        %v4429 = vpop.f32.mrf.mxu0
        %4430 = vmatprep.mubr.bf16.mxu0 0
        %4431 = vmatmul.mubr.bf16.gmra.mxu0 %v4255
        %v4432 = vpop.f32.mrf.mxu0
        %v4433 = vadd.f32 0.0, %v4432
        %v4434 = vpop.f32.mrf.mxu0
        %v4435 = vpop.f32.mrf.mxu0
        %v4436 = vadd.f32 0.0, %v4435
        %v4437 = vpop.f32.mrf.mxu0
        %4438 = vmatprep.mubr.bf16.mxu0 0
        %4439 = vmatmul.mubr.bf16.gmra.mxu0 %v4256
        %v4440 = vpop.f32.mrf.mxu0
        %v4441 = vadd.f32 0.0, %v4440
        %v4442 = vpop.f32.mrf.mxu0
        %v4443 = vpop.f32.mrf.mxu0
        %v4444 = vadd.f32 0.0, %v4443
        %v4445 = vpop.f32.mrf.mxu0
        %4446 = vmatprep.mubr.bf16.mxu0 0
        %4447 = vmatmul.mubr.bf16.gmra.mxu0 %v4257
        %v4448 = vpop.f32.mrf.mxu0
        %v4449 = vadd.f32 0.0, %v4448
        %v4450 = vpop.f32.mrf.mxu0
        %v4451 = vpop.f32.mrf.mxu0
        %v4452 = vadd.f32 0.0, %v4451
        %v4453 = vpop.f32.mrf.mxu0
        %4454 = vmatprep.mubr.bf16.mxu0 0
        %4455 = vmatmul.mubr.bf16.gmra.mxu0 %v4258
        %v4456 = vpop.f32.mrf.mxu0
        %v4457 = vadd.f32 0.0, %v4456
        %v4458 = vpop.f32.mrf.mxu0
        %v4459 = vpop.f32.mrf.mxu0
        %v4460 = vadd.f32 0.0, %v4459
        %v4461 = vpop.f32.mrf.mxu0
        %4462 = vmatprep.mubr.bf16.mxu0 0
        %4463 = vmatmul.mubr.bf16.gmra.mxu0 %v4259
        %v4464 = vpop.f32.mrf.mxu0
        %v4465 = vadd.f32 0.0, %v4464
        %v4466 = vpop.f32.mrf.mxu0
        %v4467 = vpop.f32.mrf.mxu0
        %v4468 = vadd.f32 0.0, %v4467
        %v4469 = vpop.f32.mrf.mxu0
        %4470 = vmatprep.mubr.bf16.mxu0 0
        %4471 = vmatmul.mubr.bf16.gmra.mxu0 %v4260
        %v4472 = vpop.f32.mrf.mxu0
        %v4473 = vadd.f32 0.0, %v4472
        %v4474 = vpop.f32.mrf.mxu0
        %v4475 = vpop.f32.mrf.mxu0
        %v4476 = vadd.f32 0.0, %v4475
        %v4477 = vpop.f32.mrf.mxu0
        %4478 = vmatprep.mubr.bf16.mxu0 0
        %4479 = vmatmul.mubr.bf16.gmra.mxu0 %v4261
        %v4480 = vpop.f32.mrf.mxu0
        %v4481 = vadd.f32 0.0, %v4480
        %v4482 = vpop.f32.mrf.mxu0
        %v4483 = vpop.f32.mrf.mxu0
        %v4484 = vadd.f32 0.0, %v4483
        %v4485 = vpop.f32.mrf.mxu0
        %4486 = vdwg.mxu0
        %v4487 = vadd.f32 %v3733, %v4361
        %v4488 = vadd.f32 %v3734, %v4364
        %v4489 = vadd.f32 %v3735, %v4369
        %v4490 = vadd.f32 %v3736, %v4372
        %v4491 = vadd.f32 %v3737, %v4377
        %v4492 = vadd.f32 %v3738, %v4380
        %v4493 = vadd.f32 %v3739, %v4385
        %v4494 = vadd.f32 %v3740, %v4388
        %v4495 = vadd.f32 %v3741, %v4393
        %v4496 = vadd.f32 %v3742, %v4396
        %v4497 = vadd.f32 %v3743, %v4401
        %v4498 = vadd.f32 %v3744, %v4404
        %v4499 = vadd.f32 %v3745, %v4409
        %v4500 = vadd.f32 %v3746, %v4412
        %v4501 = vadd.f32 %v3747, %v4417
        %v4502 = vadd.f32 %v3748, %v4420
        %v4503 = vadd.f32 %v3749, %v4425
        %v4504 = vadd.f32 %v3750, %v4428
        %v4505 = vadd.f32 %v3751, %v4433
        %v4506 = vadd.f32 %v3752, %v4436
        %v4507 = vadd.f32 %v3753, %v4441
        %v4508 = vadd.f32 %v3754, %v4444
        %v4509 = vadd.f32 %v3755, %v4449
        %v4510 = vadd.f32 %v3756, %v4452
        %v4511 = vadd.f32 %v3757, %v4457
        %v4512 = vadd.f32 %v3758, %v4460
        %v4513 = vadd.f32 %v3759, %v4465
        %v4514 = vadd.f32 %v3760, %v4468
        %v4515 = vadd.f32 %v3761, %v4473
        %v4516 = vadd.f32 %v3762, %v4476
        %v4517 = vadd.f32 %v3763, %v4481
        %v4518 = vadd.f32 %v3764, %v4484
        %v4519 = vld [vmem:[%s3378] sm:$0xe]
        %v4520 = vld [vmem:[%s3378 + $0xc] sm:$0xe]
        %v4521 = vld [vmem:[%s3378 + $0x18] sm:$0xe]
        %v4522 = vld [vmem:[%s3378 + $0x24] sm:$0xe]
        %v4523 = vld [vmem:[%s3378 + $0x30] sm:$0xe]
        %v4524 = vld [vmem:[%s3378 + $0x3c] sm:$0xe]
        %v4525 = vld [vmem:[%s3378 + $0x48] sm:$0xe]
        %v4526 = vld [vmem:[%s3378 + $0x54] sm:$0xe]
        %v4527 = vld [vmem:[%s3378 + $0x60] sm:$0xe]
        %v4528 = vld [vmem:[%s3378 + $0x6c] sm:$0xe]
        %v4529 = vld [vmem:[%s3378 + $0x78] sm:$0xe]
        %v4530 = vld [vmem:[%s3378 + $0x84] sm:$0xe]
        %v4531 = vld [vmem:[%s3378 + $0x90] sm:$0xe]
        %v4532 = vld [vmem:[%s3378 + $0x9c] sm:$0xe]
        %v4533 = vld [vmem:[%s3378 + $0xa8] sm:$0xe]
        %v4534 = vld [vmem:[%s3378 + $0xb4] sm:$0xe]
        %v4583 = vrot.slane %v4519, 5
        %v4584 = vrot.slane %v4583, 4
        %v4585 = vrot.slane %v3766, 5
        %v4586 = vsel %vm1304, %v4584, %v4585
        %v4587 = vrot.slane %v4585, 4
        %v4588 = vrot.slane %v3767, 5
        %v4589 = vsel %vm1304, %v4587, %v4588
        %v4590 = vrot.slane %v4520, 5
        %v4591 = vrot.slane %v4590, 4
        %v4592 = vrot.slane %v3769, 5
        %v4593 = vsel %vm1304, %v4591, %v4592
        %v4594 = vrot.slane %v4592, 4
        %v4595 = vrot.slane %v3770, 5
        %v4596 = vsel %vm1304, %v4594, %v4595
        %v4597 = vrot.slane %v4521, 5
        %v4598 = vrot.slane %v4597, 4
        %v4599 = vrot.slane %v3772, 5
        %v4600 = vsel %vm1304, %v4598, %v4599
        %v4601 = vrot.slane %v4599, 4
        %v4602 = vrot.slane %v3773, 5
        %v4603 = vsel %vm1304, %v4601, %v4602
        %v4604 = vrot.slane %v4522, 5
        %v4605 = vrot.slane %v4604, 4
        %v4606 = vrot.slane %v3775, 5
        %v4607 = vsel %vm1304, %v4605, %v4606
        %v4608 = vrot.slane %v4606, 4
        %v4609 = vrot.slane %v3776, 5
        %v4610 = vsel %vm1304, %v4608, %v4609
        %v4611 = vrot.slane %v4523, 5
        %v4612 = vrot.slane %v4611, 4
        %v4613 = vrot.slane %v3778, 5
        %v4614 = vsel %vm1304, %v4612, %v4613
        %v4615 = vrot.slane %v4613, 4
        %v4616 = vrot.slane %v3779, 5
        %v4617 = vsel %vm1304, %v4615, %v4616
        %v4618 = vrot.slane %v4524, 5
        %v4619 = vrot.slane %v4618, 4
        %v4620 = vrot.slane %v3781, 5
        %v4621 = vsel %vm1304, %v4619, %v4620
        %v4622 = vrot.slane %v4620, 4
        %v4623 = vrot.slane %v3782, 5
        %v4624 = vsel %vm1304, %v4622, %v4623
        %v4625 = vrot.slane %v4525, 5
        %v4626 = vrot.slane %v4625, 4
        %v4627 = vrot.slane %v3784, 5
        %v4628 = vsel %vm1304, %v4626, %v4627
        %v4629 = vrot.slane %v4627, 4
        %v4630 = vrot.slane %v3785, 5
        %v4631 = vsel %vm1304, %v4629, %v4630
        %v4632 = vrot.slane %v4526, 5
        %v4633 = vrot.slane %v4632, 4
        %v4634 = vrot.slane %v3787, 5
        %v4635 = vsel %vm1304, %v4633, %v4634
        %v4636 = vrot.slane %v4634, 4
        %v4637 = vrot.slane %v3788, 5
        %v4638 = vsel %vm1304, %v4636, %v4637
        %v4639 = vrot.slane %v4527, 5
        %v4640 = vrot.slane %v4639, 4
        %v4641 = vrot.slane %v3790, 5
        %v4642 = vsel %vm1304, %v4640, %v4641
        %v4643 = vrot.slane %v4641, 4
        %v4644 = vrot.slane %v3791, 5
        %v4645 = vsel %vm1304, %v4643, %v4644
        %v4646 = vrot.slane %v4528, 5
        %v4647 = vrot.slane %v4646, 4
        %v4648 = vrot.slane %v3793, 5
        %v4649 = vsel %vm1304, %v4647, %v4648
        %v4650 = vrot.slane %v4648, 4
        %v4651 = vrot.slane %v3794, 5
        %v4652 = vsel %vm1304, %v4650, %v4651
        %v4653 = vrot.slane %v4529, 5
        %v4654 = vrot.slane %v4653, 4
        %v4655 = vrot.slane %v3796, 5
        %v4656 = vsel %vm1304, %v4654, %v4655
        %v4657 = vrot.slane %v4655, 4
        %v4658 = vrot.slane %v3797, 5
        %v4659 = vsel %vm1304, %v4657, %v4658
        %v4660 = vrot.slane %v4530, 5
        %v4661 = vrot.slane %v4660, 4
        %v4662 = vrot.slane %v3799, 5
        %v4663 = vsel %vm1304, %v4661, %v4662
        %v4664 = vrot.slane %v4662, 4
        %v4665 = vrot.slane %v3800, 5
        %v4666 = vsel %vm1304, %v4664, %v4665
        %v4667 = vrot.slane %v4531, 5
        %v4668 = vrot.slane %v4667, 4
        %v4669 = vrot.slane %v3802, 5
        %v4670 = vsel %vm1304, %v4668, %v4669
        %v4671 = vrot.slane %v4669, 4
        %v4672 = vrot.slane %v3803, 5
        %v4673 = vsel %vm1304, %v4671, %v4672
        %v4674 = vrot.slane %v4532, 5
        %v4675 = vrot.slane %v4674, 4
        %v4676 = vrot.slane %v3805, 5
        %v4677 = vsel %vm1304, %v4675, %v4676
        %v4678 = vrot.slane %v4676, 4
        %v4679 = vrot.slane %v3806, 5
        %v4680 = vsel %vm1304, %v4678, %v4679
        %v4681 = vrot.slane %v4533, 5
        %v4682 = vrot.slane %v4681, 4
        %v4683 = vrot.slane %v3808, 5
        %v4684 = vsel %vm1304, %v4682, %v4683
        %v4685 = vrot.slane %v4683, 4
        %v4686 = vrot.slane %v3809, 5
        %v4687 = vsel %vm1304, %v4685, %v4686
        %v4688 = vrot.slane %v4534, 5
        %v4689 = vrot.slane %v4688, 4
        %v4690 = vrot.slane %v3811, 5
        %v4691 = vsel %vm1304, %v4689, %v4690
        %v4692 = vrot.slane %v4690, 4
        %v4693 = vrot.slane %v3812, 5
        %v4694 = vsel %vm1304, %v4692, %v4693
        %s4695 = scalar_lea.vmem %s1, 512
        %v4696 = vld [vmem:[%s4695] sm:$0xf]
        %v4697 = vld [vmem:[%s4695 + $0x4] sm:$0xf]
        %v4698 = vld [vmem:[%s4695 + $0x8] sm:$0xf]
        %v4699 = vld [vmem:[%s4695 + $0xc] sm:$0xf]
        %v4700 = vld [vmem:[%s4695 + $0x10] sm:$0xf]
        %v4701 = vld [vmem:[%s4695 + $0x14] sm:$0xf]
        %v4702 = vld [vmem:[%s4695 + $0x18] sm:$0xf]
        %v4703 = vld [vmem:[%s4695 + $0x1c] sm:$0xf]
        %v4704 = vld [vmem:[%s4695 + $0x20] sm:$0xf]
        %v4705 = vld [vmem:[%s4695 + $0x24] sm:$0xf]
        %v4706 = vld [vmem:[%s4695 + $0x28] sm:$0xf]
        %v4707 = vld [vmem:[%s4695 + $0x2c] sm:$0xf]
        %v4708 = vld [vmem:[%s4695 + $0x30] sm:$0xf]
        %v4709 = vld [vmem:[%s4695 + $0x34] sm:$0xf]
        %v4710 = vld [vmem:[%s4695 + $0x38] sm:$0xf]
        %v4711 = vld [vmem:[%s4695 + $0x3c] sm:$0xf]
        %v4712 = vunpack.c.l.b16 %v4586
        %v4713 = vunpack.c.l.b16 %v4589
        %v4714 = vunpack.c.l.b16 %v4593
        %v4715 = vunpack.c.l.b16 %v4596
        %v4716 = vunpack.c.l.b16 %v4600
        %v4717 = vunpack.c.l.b16 %v4603
        %v4718 = vunpack.c.l.b16 %v4607
        %v4719 = vunpack.c.l.b16 %v4610
        %v4720 = vunpack.c.l.b16 %v4614
        %v4721 = vunpack.c.l.b16 %v4617
        %v4722 = vunpack.c.l.b16 %v4621
        %v4723 = vunpack.c.l.b16 %v4624
        %v4724 = vunpack.c.l.b16 %v4628
        %v4725 = vunpack.c.l.b16 %v4631
        %v4726 = vunpack.c.l.b16 %v4635
        %v4727 = vunpack.c.l.b16 %v4638
        %v4728 = vunpack.c.l.b16 %v4642
        %v4729 = vunpack.c.l.b16 %v4645
        %v4730 = vunpack.c.l.b16 %v4649
        %v4731 = vunpack.c.l.b16 %v4652
        %v4732 = vunpack.c.l.b16 %v4656
        %v4733 = vunpack.c.l.b16 %v4659
        %v4734 = vunpack.c.l.b16 %v4663
        %v4735 = vunpack.c.l.b16 %v4666
        %v4736 = vunpack.c.l.b16 %v4670
        %v4737 = vunpack.c.l.b16 %v4673
        %v4738 = vunpack.c.l.b16 %v4677
        %v4739 = vunpack.c.l.b16 %v4680
        %v4740 = vunpack.c.l.b16 %v4684
        %v4741 = vunpack.c.l.b16 %v4687
        %v4742 = vunpack.c.l.b16 %v4691
        %v4743 = vunpack.c.l.b16 %v4694
        %v4744 = vpack.c.b16 %v4713, %v4712
        %v4745 = vpack.c.b16 %v4715, %v4714
        %v4746 = vpack.c.b16 %v4717, %v4716
        %v4747 = vpack.c.b16 %v4719, %v4718
        %v4748 = vpack.c.b16 %v4721, %v4720
        %v4749 = vpack.c.b16 %v4723, %v4722
        %v4750 = vpack.c.b16 %v4725, %v4724
        %v4751 = vpack.c.b16 %v4727, %v4726
        %v4752 = vpack.c.b16 %v4729, %v4728
        %v4753 = vpack.c.b16 %v4731, %v4730
        %v4754 = vpack.c.b16 %v4733, %v4732
        %v4755 = vpack.c.b16 %v4735, %v4734
        %v4756 = vpack.c.b16 %v4737, %v4736
        %v4757 = vpack.c.b16 %v4739, %v4738
        %v4758 = vpack.c.b16 %v4741, %v4740
        %v4759 = vpack.c.b16 %v4743, %v4742
        %v4792 = vunpack.c.l.b16 %v4696
        %v4793 = vunpack.c.l.b16 %v4697
        %v4794 = vunpack.c.l.b16 %v4698
        %v4795 = vunpack.c.l.b16 %v4699
        %v4796 = vunpack.c.l.b16 %v4700
        %v4797 = vunpack.c.l.b16 %v4701
        %v4798 = vunpack.c.l.b16 %v4702
        %v4799 = vunpack.c.l.b16 %v4703
        %v4800 = vunpack.c.l.b16 %v4704
        %v4801 = vunpack.c.l.b16 %v4705
        %v4802 = vunpack.c.l.b16 %v4706
        %v4803 = vunpack.c.l.b16 %v4707
        %v4804 = vunpack.c.l.b16 %v4708
        %v4805 = vunpack.c.l.b16 %v4709
        %v4806 = vunpack.c.l.b16 %v4710
        %v4807 = vunpack.c.l.b16 %v4711
        %v4808 = vpack.c.b16 %v4793, %v4792
        %v4809 = vpack.c.b16 %v4795, %v4794
        %v4810 = vpack.c.b16 %v4797, %v4796
        %v4811 = vpack.c.b16 %v4799, %v4798
        %v4812 = vpack.c.b16 %v4801, %v4800
        %v4813 = vpack.c.b16 %v4803, %v4802
        %v4814 = vpack.c.b16 %v4805, %v4804
        %v4815 = vpack.c.b16 %v4807, %v4806
        %4824 = vmatprep.subr.bf16.mxu0 0
        %4825 = vmatpush1.bf16.msra.mxu0 %v4815
        %4826 = vmatprep.subr.bf16.mxu0 0
        %4827 = vmatpush1.bf16.msra.mxu0 %v4814
        %4828 = vmatprep.subr.bf16.mxu0 0
        %4829 = vmatpush1.bf16.msra.mxu0 %v4813
        %4830 = vmatprep.subr.bf16.mxu0 0
        %4831 = vmatpush1.bf16.msra.mxu0 %v4812
        %4832 = vmatprep.subr.bf16.mxu0 0
        %4833 = vmatpush1.bf16.msra.mxu0 %v4811
        %4834 = vmatprep.subr.bf16.mxu0 0
        %4835 = vmatpush1.bf16.msra.mxu0 %v4810
        %4836 = vmatprep.subr.bf16.mxu0 0
        %4837 = vmatpush1.bf16.msra.mxu0 %v4809
        %4838 = vmatprep.subr.bf16.mxu0 0
        %4839 = vmatpush1.bf16.msra.mxu0 %v4808
        %4840 = vmatprep.subr.bf16.mxu0 0
        %4841 = vmatpush2.bf16.msra.mxu0 0
        %4842 = vmatprep.subr.bf16.mxu0 0
        %4843 = vmatpush2.bf16.msra.mxu0 0
        %4844 = vmatprep.subr.bf16.mxu0 0
        %4845 = vmatpush2.bf16.msra.mxu0 0
        %4846 = vmatprep.subr.bf16.mxu0 0
        %4847 = vmatpush2.bf16.msra.mxu0 0
        %4848 = vmatprep.subr.bf16.mxu0 0
        %4849 = vmatpush2.bf16.msra.mxu0 0
        %4850 = vmatprep.subr.bf16.mxu0 0
        %4851 = vmatpush2.bf16.msra.mxu0 0
        %4852 = vmatprep.subr.bf16.mxu0 0
        %4853 = vmatpush2.bf16.msra.mxu0 0
        %4854 = vmatprep.subr.bf16.mxu0 0
        %4855 = vmatpush2.bf16.msra.mxu0 0
        %4856 = vmatprep.mubr.bf16.mxu0 0
        %4857 = vmatmul.mubr.bf16.gmra.mxu0 %v4744
        %v4858 = vpop.f32.mrf.mxu0
        %v4859 = vadd.f32 0.0, %v4858
        %v4860 = vpop.f32.mrf.mxu0
        %v4861 = vpop.f32.mrf.mxu0
        %v4862 = vadd.f32 0.0, %v4861
        %v4863 = vpop.f32.mrf.mxu0
        %4864 = vmatprep.mubr.bf16.mxu0 0
        %4865 = vmatmul.mubr.bf16.gmra.mxu0 %v4745
        %v4866 = vpop.f32.mrf.mxu0
        %v4867 = vadd.f32 0.0, %v4866
        %v4868 = vpop.f32.mrf.mxu0
        %v4869 = vpop.f32.mrf.mxu0
        %v4870 = vadd.f32 0.0, %v4869
        %v4871 = vpop.f32.mrf.mxu0
        %4872 = vmatprep.mubr.bf16.mxu0 0
        %4873 = vmatmul.mubr.bf16.gmra.mxu0 %v4746
        %v4874 = vpop.f32.mrf.mxu0
        %v4875 = vadd.f32 0.0, %v4874
        %v4876 = vpop.f32.mrf.mxu0
        %v4877 = vpop.f32.mrf.mxu0
        %v4878 = vadd.f32 0.0, %v4877
        %v4879 = vpop.f32.mrf.mxu0
        %4880 = vmatprep.mubr.bf16.mxu0 0
        %4881 = vmatmul.mubr.bf16.gmra.mxu0 %v4747
        %v4882 = vpop.f32.mrf.mxu0
        %v4883 = vadd.f32 0.0, %v4882
        %v4884 = vpop.f32.mrf.mxu0
        %v4885 = vpop.f32.mrf.mxu0
        %v4886 = vadd.f32 0.0, %v4885
        %v4887 = vpop.f32.mrf.mxu0
        %4888 = vmatprep.mubr.bf16.mxu0 0
        %4889 = vmatmul.mubr.bf16.gmra.mxu0 %v4748
        %v4890 = vpop.f32.mrf.mxu0
        %v4891 = vadd.f32 0.0, %v4890
        %v4892 = vpop.f32.mrf.mxu0
        %v4893 = vpop.f32.mrf.mxu0
        %v4894 = vadd.f32 0.0, %v4893
        %v4895 = vpop.f32.mrf.mxu0
        %4896 = vmatprep.mubr.bf16.mxu0 0
        %4897 = vmatmul.mubr.bf16.gmra.mxu0 %v4749
        %v4898 = vpop.f32.mrf.mxu0
        %v4899 = vadd.f32 0.0, %v4898
        %v4900 = vpop.f32.mrf.mxu0
        %v4901 = vpop.f32.mrf.mxu0
        %v4902 = vadd.f32 0.0, %v4901
        %v4903 = vpop.f32.mrf.mxu0
        %4904 = vmatprep.mubr.bf16.mxu0 0
        %4905 = vmatmul.mubr.bf16.gmra.mxu0 %v4750
        %v4906 = vpop.f32.mrf.mxu0
        %v4907 = vadd.f32 0.0, %v4906
        %v4908 = vpop.f32.mrf.mxu0
        %v4909 = vpop.f32.mrf.mxu0
        %v4910 = vadd.f32 0.0, %v4909
        %v4911 = vpop.f32.mrf.mxu0
        %4912 = vmatprep.mubr.bf16.mxu0 0
        %4913 = vmatmul.mubr.bf16.gmra.mxu0 %v4751
        %v4914 = vpop.f32.mrf.mxu0
        %v4915 = vadd.f32 0.0, %v4914
        %v4916 = vpop.f32.mrf.mxu0
        %v4917 = vpop.f32.mrf.mxu0
        %v4918 = vadd.f32 0.0, %v4917
        %v4919 = vpop.f32.mrf.mxu0
        %4920 = vmatprep.mubr.bf16.mxu0 0
        %4921 = vmatmul.mubr.bf16.gmra.mxu0 %v4752
        %v4922 = vpop.f32.mrf.mxu0
        %v4923 = vadd.f32 0.0, %v4922
        %v4924 = vpop.f32.mrf.mxu0
        %v4925 = vpop.f32.mrf.mxu0
        %v4926 = vadd.f32 0.0, %v4925
        %v4927 = vpop.f32.mrf.mxu0
        %4928 = vmatprep.mubr.bf16.mxu0 0
        %4929 = vmatmul.mubr.bf16.gmra.mxu0 %v4753
        %v4930 = vpop.f32.mrf.mxu0
        %v4931 = vadd.f32 0.0, %v4930
        %v4932 = vpop.f32.mrf.mxu0
        %v4933 = vpop.f32.mrf.mxu0
        %v4934 = vadd.f32 0.0, %v4933
        %v4935 = vpop.f32.mrf.mxu0
        %4936 = vmatprep.mubr.bf16.mxu0 0
        %4937 = vmatmul.mubr.bf16.gmra.mxu0 %v4754
        %v4938 = vpop.f32.mrf.mxu0
        %v4939 = vadd.f32 0.0, %v4938
        %v4940 = vpop.f32.mrf.mxu0
        %v4941 = vpop.f32.mrf.mxu0
        %v4942 = vadd.f32 0.0, %v4941
        %v4943 = vpop.f32.mrf.mxu0
        %4944 = vmatprep.mubr.bf16.mxu0 0
        %4945 = vmatmul.mubr.bf16.gmra.mxu0 %v4755
        %v4946 = vpop.f32.mrf.mxu0
        %v4947 = vadd.f32 0.0, %v4946
        %v4948 = vpop.f32.mrf.mxu0
        %v4949 = vpop.f32.mrf.mxu0
        %v4950 = vadd.f32 0.0, %v4949
        %v4951 = vpop.f32.mrf.mxu0
        %4952 = vmatprep.mubr.bf16.mxu0 0
        %4953 = vmatmul.mubr.bf16.gmra.mxu0 %v4756
        %v4954 = vpop.f32.mrf.mxu0
        %v4955 = vadd.f32 0.0, %v4954
        %v4956 = vpop.f32.mrf.mxu0
        %v4957 = vpop.f32.mrf.mxu0
        %v4958 = vadd.f32 0.0, %v4957
        %v4959 = vpop.f32.mrf.mxu0
        %4960 = vmatprep.mubr.bf16.mxu0 0
        %4961 = vmatmul.mubr.bf16.gmra.mxu0 %v4757
        %v4962 = vpop.f32.mrf.mxu0
        %v4963 = vadd.f32 0.0, %v4962
        %v4964 = vpop.f32.mrf.mxu0
        %v4965 = vpop.f32.mrf.mxu0
        %v4966 = vadd.f32 0.0, %v4965
        %v4967 = vpop.f32.mrf.mxu0
        %4968 = vmatprep.mubr.bf16.mxu0 0
        %4969 = vmatmul.mubr.bf16.gmra.mxu0 %v4758
        %v4970 = vpop.f32.mrf.mxu0
        %v4971 = vadd.f32 0.0, %v4970
        %v4972 = vpop.f32.mrf.mxu0
        %v4973 = vpop.f32.mrf.mxu0
        %v4974 = vadd.f32 0.0, %v4973
        %v4975 = vpop.f32.mrf.mxu0
        %4976 = vmatprep.mubr.bf16.mxu0 0
        %4977 = vmatmul.mubr.bf16.gmra.mxu0 %v4759
        %v4978 = vpop.f32.mrf.mxu0
        %v4979 = vadd.f32 0.0, %v4978
        %v4980 = vpop.f32.mrf.mxu0
        %v4981 = vpop.f32.mrf.mxu0
        %v4982 = vadd.f32 0.0, %v4981
        %v4983 = vpop.f32.mrf.mxu0
        %4984 = vdwg.mxu0
        %v4985 = vadd.f32 %v4487, %v4859
        %v4986 = vadd.f32 %v4488, %v4862
        %v4987 = vadd.f32 %v4489, %v4867
        %v4988 = vadd.f32 %v4490, %v4870
        %v4989 = vadd.f32 %v4491, %v4875
        %v4990 = vadd.f32 %v4492, %v4878
        %v4991 = vadd.f32 %v4493, %v4883
        %v4992 = vadd.f32 %v4494, %v4886
        %v4993 = vadd.f32 %v4495, %v4891
        %v4994 = vadd.f32 %v4496, %v4894
        %v4995 = vadd.f32 %v4497, %v4899
        %v4996 = vadd.f32 %v4498, %v4902
        %v4997 = vadd.f32 %v4499, %v4907
        %v4998 = vadd.f32 %v4500, %v4910
        %v4999 = vadd.f32 %v4501, %v4915
        %v5000 = vadd.f32 %v4502, %v4918
        %v5001 = vadd.f32 %v4503, %v4923
        %v5002 = vadd.f32 %v4504, %v4926
        %v5003 = vadd.f32 %v4505, %v4931
        %v5004 = vadd.f32 %v4506, %v4934
        %v5005 = vadd.f32 %v4507, %v4939
        %v5006 = vadd.f32 %v4508, %v4942
        %v5007 = vadd.f32 %v4509, %v4947
        %v5008 = vadd.f32 %v4510, %v4950
        %v5009 = vadd.f32 %v4511, %v4955
        %v5010 = vadd.f32 %v4512, %v4958
        %v5011 = vadd.f32 %v4513, %v4963
        %v5012 = vadd.f32 %v4514, %v4966
        %v5013 = vadd.f32 %v4515, %v4971
        %v5014 = vadd.f32 %v4516, %v4974
        %v5015 = vadd.f32 %v4517, %v4979
        %v5016 = vadd.f32 %v4518, %v4982
        %v5017 = vld [vmem:[%s2] sm:$0x1]
        %v5019 = vlaneseq
        %v5020 = vshrl.u32 %v5019, 7
        %v5021 = vsub.s32 0, %v5020
        %v5022 = vrot.slane %v5017, %v5021
        %v5024 = vadd.f32 %v4985, %v5022
        %v5025 = vadd.f32 %v4986, %v5022
        %v5026 = vadd.f32 %v4987, %v5022
        %v5027 = vadd.f32 %v4988, %v5022
        %v5028 = vadd.f32 %v4989, %v5022
        %v5029 = vadd.f32 %v4990, %v5022
        %v5030 = vadd.f32 %v4991, %v5022
        %v5031 = vadd.f32 %v4992, %v5022
        %v5032 = vadd.f32 %v4993, %v5022
        %v5033 = vadd.f32 %v4994, %v5022
        %v5034 = vadd.f32 %v4995, %v5022
        %v5035 = vadd.f32 %v4996, %v5022
        %v5036 = vadd.f32 %v4997, %v5022
        %v5037 = vadd.f32 %v4998, %v5022
        %v5038 = vadd.f32 %v4999, %v5022
        %v5039 = vadd.f32 %v5000, %v5022
        %v5040 = vadd.f32 %v5001, %v5022
        %v5041 = vadd.f32 %v5002, %v5022
        %v5042 = vadd.f32 %v5003, %v5022
        %v5043 = vadd.f32 %v5004, %v5022
        %v5044 = vadd.f32 %v5005, %v5022
        %v5045 = vadd.f32 %v5006, %v5022
        %v5046 = vadd.f32 %v5007, %v5022
        %v5047 = vadd.f32 %v5008, %v5022
        %v5048 = vadd.f32 %v5009, %v5022
        %v5049 = vadd.f32 %v5010, %v5022
        %v5050 = vadd.f32 %v5011, %v5022
        %v5051 = vadd.f32 %v5012, %v5022
        %v5052 = vadd.f32 %v5013, %v5022
        %v5053 = vadd.f32 %v5014, %v5022
        %v5054 = vadd.f32 %v5015, %v5022
        %v5055 = vadd.f32 %v5016, %v5022
        %v5056 = vmax.f32 %v5024, 0.0
        %v5057 = vmax.f32 %v5025, 0.0
        %v5058 = vmax.f32 %v5026, 0.0
        %v5059 = vmax.f32 %v5027, 0.0
        %v5060 = vmax.f32 %v5028, 0.0
        %v5061 = vmax.f32 %v5029, 0.0
        %v5062 = vmax.f32 %v5030, 0.0
        %v5063 = vmax.f32 %v5031, 0.0
        %v5064 = vmax.f32 %v5032, 0.0
        %v5065 = vmax.f32 %v5033, 0.0
        %v5066 = vmax.f32 %v5034, 0.0
        %v5067 = vmax.f32 %v5035, 0.0
        %v5068 = vmax.f32 %v5036, 0.0
        %v5069 = vmax.f32 %v5037, 0.0
        %v5070 = vmax.f32 %v5038, 0.0
        %v5071 = vmax.f32 %v5039, 0.0
        %v5072 = vmax.f32 %v5040, 0.0
        %v5073 = vmax.f32 %v5041, 0.0
        %v5074 = vmax.f32 %v5042, 0.0
        %v5075 = vmax.f32 %v5043, 0.0
        %v5076 = vmax.f32 %v5044, 0.0
        %v5077 = vmax.f32 %v5045, 0.0
        %v5078 = vmax.f32 %v5046, 0.0
        %v5079 = vmax.f32 %v5047, 0.0
        %v5080 = vmax.f32 %v5048, 0.0
        %v5081 = vmax.f32 %v5049, 0.0
        %v5082 = vmax.f32 %v5050, 0.0
        %v5083 = vmax.f32 %v5051, 0.0
        %v5084 = vmax.f32 %v5052, 0.0
        %v5085 = vmax.f32 %v5053, 0.0
        %v5086 = vmax.f32 %v5054, 0.0
        %v5087 = vmax.f32 %v5055, 0.0
        %v5088 = vadd.f32 %v5056, %v5057
        %v5089 = vadd.f32 %v5088, %v5058
        %v5090 = vadd.f32 %v5089, %v5059
        %v5091 = vadd.f32 %v5090, %v5060
        %v5092 = vadd.f32 %v5091, %v5061
        %v5093 = vadd.f32 %v5092, %v5062
        %v5094 = vadd.f32 %v5093, %v5063
        %v5095 = vadd.f32 %v5094, %v5064
        %v5096 = vadd.f32 %v5095, %v5065
        %v5097 = vadd.f32 %v5096, %v5066
        %v5098 = vadd.f32 %v5097, %v5067
        %v5099 = vadd.f32 %v5098, %v5068
        %v5100 = vadd.f32 %v5099, %v5069
        %v5101 = vadd.f32 %v5100, %v5070
        %v5102 = vadd.f32 %v5101, %v5071
        %v5103 = vadd.f32 %v5102, %v5072
        %v5104 = vadd.f32 %v5103, %v5073
        %v5105 = vadd.f32 %v5104, %v5074
        %v5106 = vadd.f32 %v5105, %v5075
        %v5107 = vadd.f32 %v5106, %v5076
        %v5108 = vadd.f32 %v5107, %v5077
        %v5109 = vadd.f32 %v5108, %v5078
        %v5110 = vadd.f32 %v5109, %v5079
        %v5111 = vadd.f32 %v5110, %v5080
        %v5112 = vadd.f32 %v5111, %v5081
        %v5113 = vadd.f32 %v5112, %v5082
        %v5114 = vadd.f32 %v5113, %v5083
        %v5115 = vadd.f32 %v5114, %v5084
        %v5116 = vadd.f32 %v5115, %v5085
        %v5117 = vadd.f32 %v5116, %v5086
        %v5118 = vadd.f32 %v5117, %v5087
        %v5119 = vrot.slane %v5118, 4
        %v5120 = vadd.f32 %v5118, %v5119
        %v5121 = vrot.slane %v5120, 2
        %v5122 = vadd.f32 %v5120, %v5121
        %v5123 = vrot.slane %v5122, 1
        %v5124 = vadd.f32 %v5122, %v5123
        %v5125 = vmul.f32 %v5124, 0.00390625
        %v5126 = vsub.f32 %v5056, %v5125
        %v5127 = vsub.f32 %v5057, %v5125
        %v5128 = vsub.f32 %v5058, %v5125
        %v5129 = vsub.f32 %v5059, %v5125
        %v5130 = vsub.f32 %v5060, %v5125
        %v5131 = vsub.f32 %v5061, %v5125
        %v5132 = vsub.f32 %v5062, %v5125
        %v5133 = vsub.f32 %v5063, %v5125
        %v5134 = vsub.f32 %v5064, %v5125
        %v5135 = vsub.f32 %v5065, %v5125
        %v5136 = vsub.f32 %v5066, %v5125
        %v5137 = vsub.f32 %v5067, %v5125
        %v5138 = vsub.f32 %v5068, %v5125
        %v5139 = vsub.f32 %v5069, %v5125
        %v5140 = vsub.f32 %v5070, %v5125
        %v5141 = vsub.f32 %v5071, %v5125
        %v5142 = vsub.f32 %v5072, %v5125
        %v5143 = vsub.f32 %v5073, %v5125
        %v5144 = vsub.f32 %v5074, %v5125
        %v5145 = vsub.f32 %v5075, %v5125
        %v5146 = vsub.f32 %v5076, %v5125
        %v5147 = vsub.f32 %v5077, %v5125
        %v5148 = vsub.f32 %v5078, %v5125
        %v5149 = vsub.f32 %v5079, %v5125
        %v5150 = vsub.f32 %v5080, %v5125
        %v5151 = vsub.f32 %v5081, %v5125
        %v5152 = vsub.f32 %v5082, %v5125
        %v5153 = vsub.f32 %v5083, %v5125
        %v5154 = vsub.f32 %v5084, %v5125
        %v5155 = vsub.f32 %v5085, %v5125
        %v5156 = vsub.f32 %v5086, %v5125
        %v5157 = vsub.f32 %v5087, %v5125
        %v5158 = vmul.f32 %v5126, %v5126
        %v5159 = vmul.f32 %v5127, %v5127
        %v5160 = vmul.f32 %v5128, %v5128
        %v5161 = vmul.f32 %v5129, %v5129
        %v5162 = vmul.f32 %v5130, %v5130
        %v5163 = vmul.f32 %v5131, %v5131
        %v5164 = vmul.f32 %v5132, %v5132
        %v5165 = vmul.f32 %v5133, %v5133
        %v5166 = vmul.f32 %v5134, %v5134
        %v5167 = vmul.f32 %v5135, %v5135
        %v5168 = vmul.f32 %v5136, %v5136
        %v5169 = vmul.f32 %v5137, %v5137
        %v5170 = vmul.f32 %v5138, %v5138
        %v5171 = vmul.f32 %v5139, %v5139
        %v5172 = vmul.f32 %v5140, %v5140
        %v5173 = vmul.f32 %v5141, %v5141
        %v5174 = vmul.f32 %v5142, %v5142
        %v5175 = vmul.f32 %v5143, %v5143
        %v5176 = vmul.f32 %v5144, %v5144
        %v5177 = vmul.f32 %v5145, %v5145
        %v5178 = vmul.f32 %v5146, %v5146
        %v5179 = vmul.f32 %v5147, %v5147
        %v5180 = vmul.f32 %v5148, %v5148
        %v5181 = vmul.f32 %v5149, %v5149
        %v5182 = vmul.f32 %v5150, %v5150
        %v5183 = vmul.f32 %v5151, %v5151
        %v5184 = vmul.f32 %v5152, %v5152
        %v5185 = vmul.f32 %v5153, %v5153
        %v5186 = vmul.f32 %v5154, %v5154
        %v5187 = vmul.f32 %v5155, %v5155
        %v5188 = vmul.f32 %v5156, %v5156
        %v5189 = vmul.f32 %v5157, %v5157
        %v5190 = vadd.f32 %v5158, %v5159
        %v5191 = vadd.f32 %v5190, %v5160
        %v5192 = vadd.f32 %v5191, %v5161
        %v5193 = vadd.f32 %v5192, %v5162
        %v5194 = vadd.f32 %v5193, %v5163
        %v5195 = vadd.f32 %v5194, %v5164
        %v5196 = vadd.f32 %v5195, %v5165
        %v5197 = vadd.f32 %v5196, %v5166
        %v5198 = vadd.f32 %v5197, %v5167
        %v5199 = vadd.f32 %v5198, %v5168
        %v5200 = vadd.f32 %v5199, %v5169
        %v5201 = vadd.f32 %v5200, %v5170
        %v5202 = vadd.f32 %v5201, %v5171
        %v5203 = vadd.f32 %v5202, %v5172
        %v5204 = vadd.f32 %v5203, %v5173
        %v5205 = vadd.f32 %v5204, %v5174
        %v5206 = vadd.f32 %v5205, %v5175
        %v5207 = vadd.f32 %v5206, %v5176
        %v5208 = vadd.f32 %v5207, %v5177
        %v5209 = vadd.f32 %v5208, %v5178
        %v5210 = vadd.f32 %v5209, %v5179
        %v5211 = vadd.f32 %v5210, %v5180
        %v5212 = vadd.f32 %v5211, %v5181
        %v5213 = vadd.f32 %v5212, %v5182
        %v5214 = vadd.f32 %v5213, %v5183
        %v5215 = vadd.f32 %v5214, %v5184
        %v5216 = vadd.f32 %v5215, %v5185
        %v5217 = vadd.f32 %v5216, %v5186
        %v5218 = vadd.f32 %v5217, %v5187
        %v5219 = vadd.f32 %v5218, %v5188
        %v5220 = vadd.f32 %v5219, %v5189
        %v5221 = vrot.slane %v5220, 4
        %v5222 = vadd.f32 %v5220, %v5221
        %v5223 = vrot.slane %v5222, 2
        %v5224 = vadd.f32 %v5222, %v5223
        %v5225 = vrot.slane %v5224, 1
        %v5226 = vadd.f32 %v5224, %v5225
        %5227 = vst [vmem:[%s194] sm:$0xff] %v5056
        %5228 = vst [vmem:[%s194 + $0x8] sm:$0xff] %v5057
        %5229 = vst [vmem:[%s194 + $0x10] sm:$0xff] %v5058
        %5230 = vst [vmem:[%s194 + $0x18] sm:$0xff] %v5059
        %5231 = vst [vmem:[%s194 + $0x20] sm:$0xff] %v5060
        %5232 = vst [vmem:[%s194 + $0x28] sm:$0xff] %v5061
        %5233 = vst [vmem:[%s194 + $0x30] sm:$0xff] %v5062
        %5234 = vst [vmem:[%s194 + $0x38] sm:$0xff] %v5063
        %5235 = vst [vmem:[%s194 + $0x40] sm:$0xff] %v5064
        %5236 = vst [vmem:[%s194 + $0x48] sm:$0xff] %v5065
        %5237 = vst [vmem:[%s194 + $0x50] sm:$0xff] %v5066
        %5238 = vst [vmem:[%s194 + $0x58] sm:$0xff] %v5067
        %5239 = vst [vmem:[%s194 + $0x60] sm:$0xff] %v5068
        %5240 = vst [vmem:[%s194 + $0x68] sm:$0xff] %v5069
        %5241 = vst [vmem:[%s194 + $0x70] sm:$0xff] %v5070
        %5242 = vst [vmem:[%s194 + $0x78] sm:$0xff] %v5071
        %5243 = vst [vmem:[%s194 + $0x80] sm:$0xff] %v5072
        %5244 = vst [vmem:[%s194 + $0x88] sm:$0xff] %v5073
        %5245 = vst [vmem:[%s194 + $0x90] sm:$0xff] %v5074
        %5246 = vst [vmem:[%s194 + $0x98] sm:$0xff] %v5075
        %5247 = vst [vmem:[%s194 + $0xa0] sm:$0xff] %v5076
        %5248 = vst [vmem:[%s194 + $0xa8] sm:$0xff] %v5077
        %5249 = vst [vmem:[%s194 + $0xb0] sm:$0xff] %v5078
        %5250 = vst [vmem:[%s194 + $0xb8] sm:$0xff] %v5079
        %5251 = vst [vmem:[%s194 + $0xc0] sm:$0xff] %v5080
        %5252 = vst [vmem:[%s194 + $0xc8] sm:$0xff] %v5081
        %5253 = vst [vmem:[%s194 + $0xd0] sm:$0xff] %v5082
        %5254 = vst [vmem:[%s194 + $0xd8] sm:$0xff] %v5083
        %5255 = vst [vmem:[%s194 + $0xe0] sm:$0xff] %v5084
        %5256 = vst [vmem:[%s194 + $0xe8] sm:$0xff] %v5085
        %5257 = vst [vmem:[%s194 + $0xf0] sm:$0xff] %v5086
        %5258 = vst [vmem:[%s194 + $0xf8] sm:$0xff] %v5087
        %5259 = vst [vmem:[%s201] sm:$0x1] %v5125
        %5260 = vst [vmem:[%s201 + $0x1] sm:$0x1] %v5226
        %s5261 = sand.u32 %s98, 1
        %s5262 = scalar_lea.sflag [#allocation3], %s5261
        %s5263 = sand.u32 %s98, 1
        %s5264 = smul.addr %s5263, 256
        %s5265 = scalar_lea.vmem [#allocation2], %s5264
        %s5266 = sand.u32 %s124, 1
        %s5267 = scalar_lea.sflag [#allocation5], %s5266
        %s5268 = sand.u32 %s124, 1
        %s5269 = smul.addr %s5268, 2
        %s5270 = scalar_lea.vmem [#allocation4], %s5269
        // Predicated region
        $region33: #{tpu_custom_call.1} parent=31 // pred_check
          %p5271 = pneg %p108
        $region34: #{tpu_custom_call.1} parent=31 // pred_check_branch
          %5273 = sbr.rel (%p5271) target = $region36
        $region35: #{tpu_custom_call.1} parent=31 // pred_region
          %s5275 = ssub.s32 4096, 4096
          %5276 = vsyncadd %s5262, %s5275
          %s5277 = smul.addr %s22, 32
          %s5278 = smul.addr %s5277, 128
          %s5279 = scalar_lea.hbm %s3, %s5278
          %s5280 = sshll.u32 %s5265, 4
          %s5281 = int_to_ptr.vmem [resolvable:$true] %s5280
          %5286 = dma.vmem_to_hbm [thread:$0]  %s5281, 4096, %s5279, %s5262, 128, 128, 8
        $region36: #{tpu_custom_call.1} parent=31 // pred_fallthru
          _
        // Predicated region
        $region37: #{tpu_custom_call.1} parent=31 // pred_check
          %p5287 = pneg %p134
        $region38: #{tpu_custom_call.1} parent=31 // pred_check_branch
          %5289 = sbr.rel (%p5287) target = $region40
        $region39: #{tpu_custom_call.1} parent=31 // pred_region
          %s5291 = ssub.s32 32, 32
          %5292 = vsyncadd %s5267, %s5291
          %s5293 = smul.addr %s22, 32
          %s5294 = scalar_lea.hbm %s4, %s5293
          %s5296 = sshll.u32 %s5270, 4
          %s5297 = int_to_ptr.vmem [resolvable:$true] %s5296
          %5299 = dma.vmem_to_hbm [thread:$0]  %s5297, 32, %s5294, %s5267
        $region40: #{tpu_custom_call.1} parent=31 // pred_fallthru
          _
      $region32: #{tpu_custom_call.1} parent=5 // pred_fallthru
        _
      %p5300 = scmp.le.s32.totalorder 2, %s17
      // Predicated region
      $region41: #{tpu_custom_call.1} parent=5 // pred_check
        %p5301 = pneg %p5300
      $region42: #{tpu_custom_call.1} parent=5 // pred_check_branch
        %5303 = sbr.rel (%p5301) target = $region44
      $region43: #{tpu_custom_call.1} parent=5 // pred_region
        %s5304 = ssub.s32 %s17, 2
        // Predicated region
        $region45: #{tpu_custom_call.1} parent=43 // pred_check
          %p5305 = pneg %p114
        $region46: #{tpu_custom_call.1} parent=43 // pred_check_branch
          %5307 = sbr.rel (%p5305) target = $region48
        $region47: #{tpu_custom_call.1} parent=43 // pred_region
          %s5308 = sand.u32 %s99, 1
          %s5309 = scalar_lea.sflag [#allocation3], %s5308
          %s5310 = sand.u32 %s99, 1
          %s5311 = smul.addr %s5310, 256
          %s5312 = scalar_lea.vmem [#allocation2], %s5311
          %5313 = dma.done %s5309, 4096
        $region48: #{tpu_custom_call.1} parent=43 // pred_fallthru
          _
        // Predicated region
        $region49: #{tpu_custom_call.1} parent=43 // pred_check
          %p5314 = pneg %p140
        $region50: #{tpu_custom_call.1} parent=43 // pred_check_branch
          %5316 = sbr.rel (%p5314) target = $region52
        $region51: #{tpu_custom_call.1} parent=43 // pred_region
          %s5317 = sand.u32 %s125, 1
          %s5318 = scalar_lea.sflag [#allocation5], %s5317
          %s5319 = sand.u32 %s125, 1
          %s5320 = smul.addr %s5319, 2
          %s5321 = scalar_lea.vmem [#allocation4], %s5320
          %5322 = dma.done %s5318, 32
        $region52: #{tpu_custom_call.1} parent=43 // pred_fallthru
          _
      $region44: #{tpu_custom_call.1} parent=5 // pred_fallthru
        _
    $region6: #{tpu_custom_call.1} parent=1 // loop_footer
      %s21 = sadd.s32 1, %s17
    $region7: #{tpu_custom_call.1} parent=1 // loop_footer_branch
      %16 = sbr.rel target = $region3
    $region8: #{tpu_custom_call.1} parent=1 // loop_exit
      _
    %5323 = vsyncpa [#allocation3], 1
    %s5324 = scalar_lea.sflag [#allocation3], 1
    %5325 = vsyncpa %s5324, 1
    %5326 = vsyncpa [#allocation5], 1
    %s5327 = scalar_lea.sflag [#allocation5], 1
    %5328 = vsyncpa %s5327, 1

</llo_original>
